<compile_context>
chip_gen: v7x
topology: tpu7x:2x2x1
jax: 0.10.0
libtpu: 0.0.40
codegen_flags: <defaults>
</compile_context>

<pallas_src>
import functools
import math

import jax
import jax.numpy as jnp
from jax import lax
from jax.experimental import pallas as pl
from jax.experimental.pallas import tpu as pltpu

BN_EPS = 1e-5
BN_SCALE = 1.0 / math.sqrt(1.0 + BN_EPS)   # eval-mode BatchNorm1d rescale
NEG_INF = -1e30


# ----------------------------------------------------------------------------
# Pallas kernels
# ----------------------------------------------------------------------------
def _linear_kernel(x_ref, w_ref, b_ref, o_ref):
    # x: (M, K), w: (K, N), b: (1, N) -> o: (M, N)
    o_ref[...] = (jnp.dot(x_ref[...], w_ref[...],
                          preferred_element_type=jnp.float32) + b_ref[...])


def linear_pallas(x, w, b):
    """y = x @ w + b.  Full-block (no grid); only used OUTSIDE the decode loop."""
    M, K = x.shape
    N = w.shape[1]
    Kp = max(8, ((K + 7) // 8) * 8)          # pad tiny contracting dims (e.g. F=2)
    if Kp != K:
        x = jnp.pad(x, ((0, 0), (0, Kp - K)))
        w = jnp.pad(w, ((0, Kp - K), (0, 0)))
    return pl.pallas_call(
        _linear_kernel,
        out_shape=jax.ShapeDtypeStruct((M, N), jnp.float32),
    )(x, w, b)


def _encoder_layer_kernel(x_ref, wqkv_ref, bqkv_ref, wo_ref, bo_ref,
                          w1_ref, b1_ref, w2_ref, b2_ref, o_ref, attn_ref,
                          *, batch, seq, nhead, dh, scale, bn_scale):
    """One full TransformerEncoderLayer (no mask, eval BN) on a (B*S, D) slab.

    QKV projection and the output projection are single head-concatenated
    matmuls over all B*S rows; only the per-(batch, head) score / PV matmuls
    remain tiny.
    """
    f32 = jnp.float32
    D = nhead * dh
    x = x_ref[...]                                                    # (B*S, D)
    qkv = jnp.dot(x, wqkv_ref[...], preferred_element_type=f32) + bqkv_ref[...]
    wo = wo_ref[...]                                                  # (D, D)

    for b in range(batch):                                            # static unroll
        r0 = b * seq
        q = qkv[r0:r0 + seq, 0:D] * scale                             # (S, D)
        k = qkv[r0:r0 + seq, D:2 * D]
        v = qkv[r0:r0 + seq, 2 * D:3 * D]
        y_b = jnp.zeros((seq, D), f32)
        for h in range(nhead):                                        # static unroll
            c0 = h * dh
            s = lax.dot_general(q[:, c0:c0 + dh], k[:, c0:c0 + dh],
                                (((1,), (1,)), ((), ())),
                                preferred_element_type=f32)           # (S, S)
            m = jnp.max(s, axis=-1, keepdims=True)
            e = jnp.exp(s - m)
            p = e * pl.reciprocal(jnp.sum(e, axis=-1, keepdims=True), approx=True)
            oh = jnp.dot(p, v[:, c0:c0 + dh], preferred_element_type=f32)   # (S, dh)
            # out-projection accumulated per head == concat(oh) @ Wo (no concat op)
            y_b = y_b + jnp.dot(oh, wo[c0:c0 + dh, :], preferred_element_type=f32)
        attn_ref[r0:r0 + seq, :] = y_b

    x = (x + attn_ref[...] + bo_ref[...]) * bn_scale                  # norm1
    hdn = jnp.maximum(
        jnp.dot(x, w1_ref[...], preferred_element_type=f32) + b1_ref[...], 0.0)
    y = jnp.dot(hdn, w2_ref[...], preferred_element_type=f32) + b2_ref[...]
    o_ref[...] = (x + y) * bn_scale                                   # norm2


def encoder_layer_pallas(x2d, p, batch, seq, nhead):
    M, D = x2d.shape
    dh = D // nhead
    kernel = functools.partial(_encoder_layer_kernel, batch=batch, seq=seq,
                               nhead=nhead, dh=dh, scale=1.0 / math.sqrt(dh),
                               bn_scale=BN_SCALE)
    return pl.pallas_call(
        kernel,
        out_shape=jax.ShapeDtypeStruct((M, D), jnp.float32),
        scratch_shapes=[pltpu.VMEM((M, D), jnp.float32)],
    )(x2d, p["wqkv"], p["bqkv"], p["wo"], p["bo"],
      p["w1"], p["b1"], p["w2"], p["b2"])


def _decode_step_kernel(
        h_last_ref, visited_ref, state_const_ref, w_lin_last_ref,
        wv_s_ref, bv_s_ref, wo_s_ref, bo_s_ref,
        wq_c_ref, bq_c_ref, wo_c_ref, bo_c_ref,
        kmem_ref, vmem_ref,
        w1_ref, b1_ref, w2_ref, b2_ref,
        wq_p_ref, bq_p_ref, kptr_ref,
        w_out_ref,
        *, n_layers, nhead, dh, scale, bn_scale):
    """The whole decode step fused into one kernel.

    state linear -> [decoder layer]*L (self-attn, masked cross-attn over the
    pre-projected encoder memory, FFN) -> pointer head probabilities.
    """
    f32 = jnp.float32
    B, D = h_last_ref.shape

    visited_bias = visited_ref[...] * NEG_INF                          # (B, S)

    # h_state = [h_graph|h_first] @ W_gf + b   (precomputed, constant)  + h_last @ W_last
    x = state_const_ref[...] + jnp.dot(h_last_ref[...], w_lin_last_ref[...],
                                       preferred_element_type=f32)     # (B, D)

    def masked_attention(q, keys, vals, wo):
        """q (B, D) pre-scaled; keys/vals (B, S, D); wo (D, D) -> (B, D).
        Equivalent to concat_h(softmax(q_h K_h^T + bias) V_h) @ wo,
        with per-head scores done on the VPU (no tiny MXU pushes)."""
        out = jnp.zeros((B, D), f32)
        for h in range(nhead):                                         # static unroll
            c0 = h * dh
            s = jnp.sum(q[:, None, c0:c0 + dh] * keys[:, :, c0:c0 + dh],
                        axis=-1) + visited_bias                        # (B, S)
            m = jnp.max(s, axis=-1, keepdims=True)
            e = jnp.exp(s - m)
            p = e * pl.reciprocal(jnp.sum(e, axis=-1, keepdims=True), approx=True)
            ctx = jnp.sum(p[:, :, None] * vals[:, :, c0:c0 + dh], axis=1)   # (B, dh)
            out = out + jnp.dot(ctx, wo[c0:c0 + dh, :], preferred_element_type=f32)
        return out

    for l in range(n_layers):                                          # static unroll
        # --- decoder self-attention: Lq == Lk == 1 so softmax over one key is
        #     exactly 1 -> the sublayer reduces to out_proj(v_proj(x)) (exact).
        v = jnp.dot(x, wv_s_ref[l], preferred_element_type=f32) + bv_s_ref[l]
        sa = jnp.dot(v, wo_s_ref[l], preferred_element_type=f32) + bo_s_ref[l]
        x = (x + sa) * bn_scale                                        # norm1
        # --- masked cross-attention over the hoisted encoder K/V ---
        q = (jnp.dot(x, wq_c_ref[l], preferred_element_type=f32) + bq_c_ref[l]) * scale
        ca = masked_attention(q, kmem_ref[l], vmem_ref[l], wo_c_ref[l]) + bo_c_ref[l]
        x = (x + ca) * bn_scale                                        # norm2
        # --- feed-forward ---
        hdn = jnp.maximum(
            jnp.dot(x, w1_ref[l], preferred_element_type=f32) + b1_ref[l], 0.0)
        y = jnp.dot(hdn, w2_ref[l], preferred_element_type=f32) + b2_ref[l]
        x = (x + y) * bn_scale                                         # norm3

    # --- pointer head: head-averaged attention probabilities (exact softmax) ---
    qp = (jnp.dot(x, wq_p_ref[...], preferred_element_type=f32) + bq_p_ref[...]) * scale
    kmat = kptr_ref[...]                                               # (B, S, D)
    acc = jnp.zeros_like(visited_bias)
    for h in range(nhead):
        c0 = h * dh
        s = jnp.sum(qp[:, None, c0:c0 + dh] * kmat[:, :, c0:c0 + dh],
                    axis=-1) + visited_bias
        m = jnp.max(s, axis=-1, keepdims=True)
        e = jnp.exp(s - m)
        acc = acc + e / jnp.sum(e, axis=-1, keepdims=True)             # exact divide
    w_out_ref[...] = acc * (1.0 / nhead)


def decode_step_pallas(h_last, visited, state_const, w_lin_last, dec, kmem, vmem,
                       ptr, kptr, nhead):
    """h_last (B,D), visited (B,S) f32 (1.0 = visited) -> pointer probs (B,S)."""
    B, S = visited.shape
    D = h_last.shape[-1]
    L = kmem.shape[0]
    dh = D // nhead
    kernel = functools.partial(_decode_step_kernel, n_layers=L, nhead=nhead, dh=dh,
                               scale=1.0 / math.sqrt(dh), bn_scale=BN_SCALE)
    return pl.pallas_call(
        kernel,
        out_shape=jax.ShapeDtypeStruct((B, S), jnp.float32),
    )(h_last, visited, state_const, w_lin_last,
      dec["wv_s"], dec["bv_s"], dec["wo_s"], dec["bo_s"],
      dec["wq_c"], dec["bq_c"], dec["wo_c"], dec["bo_c"],
      kmem, vmem,
      dec["w1"], dec["b1"], dec["w2"], dec["b2"],
      ptr["wq"], ptr["bq"], kptr)


# ----------------------------------------------------------------------------
# Parameter init (deterministic xavier-uniform matrices, zero biases),
# stored pre-transposed / pre-sliced in compute layout.
# ----------------------------------------------------------------------------
def _xavier(key, shape):
    fan_out, fan_in = shape
    a = math.sqrt(6.0 / (fan_in + fan_out))
    return jax.random.uniform(key, shape, jnp.float32, -a, a)


def _init_mha_raw(key, d):
    k1, k2 = jax.random.split(key)
    in_proj = _xavier(k1, (3 * d, d))          # torch in_proj_weight layout (3D, D)
    out_proj = _xavier(k2, (d, d))             # torch out_proj.weight (D, D)
    # compute layout: x @ W ; wqkv columns are [Q | K | V]
    return in_proj.T, out_proj.T


def _init_encoder_layer(key, d, dff):
    k = jax.random.split(key, 3)
    wqkv, wo = _init_mha_raw(k[0], d)
    return {
        "wqkv": wqkv, "bqkv": jnp.zeros((1, 3 * d), jnp.float32),
        "wo": wo, "bo": jnp.zeros((1, d), jnp.float32),
        "w1": _xavier(k[1], (dff, d)).T, "b1": jnp.zeros((1, dff), jnp.float32),
        "w2": _xavier(k[2], (d, dff)).T, "b2": jnp.zeros((1, d), jnp.float32),
    }


def _init_decoder_layer(key, d, dff):
    k = jax.random.split(key, 4)
    wqkv_s, wo_s = _init_mha_raw(k[0], d)
    wqkv_c, wo_c = _init_mha_raw(k[1], d)
    zd = jnp.zeros((1, d), jnp.float32)
    return {
        # self-attn (Lq=Lk=1): only the V / out-proj path affects the output (exact).
        "wv_s": wqkv_s[:, 2 * d:], "bv_s": zd, "wo_s": wo_s, "bo_s": zd,
        # cross-attn: Q applied per decode step; K/V applied once to the memory.
        "wq_c": wqkv_c[:, :d], "bq_c": zd,
        "wk_c": wqkv_c[:, d:2 * d], "bk_c": zd,
        "wv_c": wqkv_c[:, 2 * d:], "bv_c": zd,
        "wo_c": wo_c, "bo_c": zd,
        "w1": _xavier(k[2], (dff, d)).T, "b1": jnp.zeros((1, dff), jnp.float32),
        "w2": _xavier(k[3], (d, dff)).T, "b2": zd,
    }


def init_model_params(key, d_model, nhead, n_enc, n_dec, dff, num_node_features):
    keys = jax.random.split(key, 3 + n_enc + n_dec)
    lin_w = _xavier(keys[1], (d_model, 3 * d_model)).T           # (3D, D) compute layout
    wqkv_ptr, _ = _init_mha_raw(keys[2], d_model)                # pointer MHA (V/out unused)
    dec_layers = [_init_decoder_layer(keys[3 + n_enc + i], d_model, dff)
                  for i in range(n_dec)]
    decoder = {name: jnp.stack([lyr[name] for lyr in dec_layers])
               for name in dec_layers[0]}
    return {
        "embedding_w": _xavier(keys[0], (d_model, num_node_features)).T,   # (F, D)
        "embedding_b": jnp.zeros((1, d_model), jnp.float32),
        "linear_gf_w": lin_w[:2 * d_model],                      # (2D, D) [h_graph|h_first]
        "linear_last_w": lin_w[2 * d_model:],                    # (D, D)  h_last part
        "linear_b": jnp.zeros((1, d_model), jnp.float32),
        "mha": {"wq": wqkv_ptr[:, :d_model],
                "bq": jnp.zeros((1, d_model), jnp.float32),
                "wk": wqkv_ptr[:, d_model:2 * d_model],
                "bk": jnp.zeros((1, d_model), jnp.float32)},
        "encoder_layers": [_init_encoder_layer(keys[3 + i], d_model, dff)
                           for i in range(n_enc)],
        "decoder": decoder,
    }


# ----------------------------------------------------------------------------
# AttentionModel.forward (fully jitted; decode loop is a lax.scan,
# one fused Pallas kernel per decode iteration)
# ----------------------------------------------------------------------------
@functools.partial(jax.jit, static_argnames=("nhead", "greedy"))
def attention_model_forward(params, x, start_vertices, nhead, greedy=True):
    B, S, F = x.shape
    assert start_vertices.shape[0] == B
    D = params["embedding_b"].shape[-1]
    n_dec = params["decoder"]["wo_c"].shape[0]
    idx = jnp.arange(B)

    # ---- encoder: embedding + one fused kernel per layer ----
    h2d = linear_pallas(x.reshape(B * S, F), params["embedding_w"],
                        params["embedding_b"])                   # (B*S, D)
    for lp in params["encoder_layers"]:
        h2d = encoder_layer_pallas(h2d, lp, B, S, nhead)
    h_vertices = h2d.reshape(B, S, D)

    h_graph = jnp.mean(h_vertices, axis=1)                       # (B, D)
    h_first = h_vertices[idx, start_vertices]                    # (B, D)
    visited0 = jnp.zeros((B, S), jnp.float32).at[idx, start_vertices].set(1.0)

    # ---- decode-invariant precomputes, hoisted out of the scan ----
    dec = params["decoder"]
    kmem = jnp.stack([linear_pallas(h2d, dec["wk_c"][l], dec["bk_c"][l]).reshape(B, S, D)
                      for l in range(n_dec)])                    # (L, B, S, D)
    vmem = jnp.stack([linear_pallas(h2d, dec["wv_c"][l], dec["bv_c"][l]).reshape(B, S, D)
                      for l in range(n_dec)])                    # (L, B, S, D)
    kptr = linear_pallas(h2d, params["mha"]["wk"],
                         params["mha"]["bk"]).reshape(B, S, D)   # (B, S, D)
    state_const = linear_pallas(jnp.concatenate([h_graph, h_first], axis=1),
                                params["linear_gf_w"], params["linear_b"])   # (B, D)

    def decode_step(carry, _):
        h_last, visited = carry
        # TODO(synk): the PyTorch in-loop host assert ("all vertices are masked")
        # cannot run under jit/scan; valid inputs always satisfy it.
        w = decode_step_pallas(h_last, visited, state_const,
                               params["linear_last_w"], dec, kmem, vmem,
                               params["mha"], kptr, nhead)        # (B, S)
        # TODO(synk): non-greedy Categorical sampling needs PRNG-key plumbing;
        # greedy argmax is used for both branches.
        actions = jnp.argmax(w, axis=1).astype(jnp.int32)
        logp = jnp.log(w[idx, actions])
        h_last_new = h_vertices[idx, actions]
        visited_new = visited.at[idx, actions].set(1.0)
        return (h_last_new, visited_new), (actions, logp)

    (_, _), (acts, logps) = lax.scan(decode_step, (h_first, visited0),
                                     None, length=S - 1)
    actions_out = jnp.concatenate(
        [start_vertices.astype(jnp.int32)[:, None], acts.T], axis=1)   # (B, S)
    log_prob = jnp.sum(logps, axis=0)                                  # (B,)
    return actions_out, log_prob


# ----------------------------------------------------------------------------
if __name__ == "__main__":
    D_MODEL, NHEAD = 32, 4
    N_ENC, N_DEC = 2, 1
    DIM_FF, N_FEAT = 64, 2
    B, S = 2, 8

    key = jax.random.PRNGKey(0)
    kp, kx, ks = jax.random.split(key, 3)
    params = init_model_params(kp, D_MODEL, NHEAD, N_ENC, N_DEC, DIM_FF, N_FEAT)
    x = jax.random.normal(kx, (B, S, N_FEAT), jnp.float32)
    start_vertices = jax.random.randint(ks, (B,), 0, S, dtype=jnp.int32)

    actions, log_prob = attention_model_forward(params, x, start_vertices,
                                                nhead=NHEAD, greedy=True)
    jax.block_until_ready((actions, log_prob))

    assert actions.shape == (B, S) and log_prob.shape == (B,)
    # Sanity: every instance visits each vertex exactly once (valid tour).
    perm_ok = jnp.all(jnp.sort(actions, axis=1)
                      == jnp.arange(S, dtype=actions.dtype)[None, :])
    assert bool(perm_ok)
    assert bool(jnp.all(jnp.isfinite(log_prob)))
    print("KERNEL_OK")
</pallas_src>

<mosaic_0001>
module attributes {stable_mosaic.version = 11 : i64} {
  func.func @_encoder_layer_kernel(%arg0: memref<16x32xf32, #tpu.memory_space<vmem>>, %arg1: memref<32x96xf32, #tpu.memory_space<vmem>>, %arg2: memref<1x96xf32, #tpu.memory_space<vmem>>, %arg3: memref<32x32xf32, #tpu.memory_space<vmem>>, %arg4: memref<1x32xf32, #tpu.memory_space<vmem>>, %arg5: memref<32x64xf32, #tpu.memory_space<vmem>>, %arg6: memref<1x64xf32, #tpu.memory_space<vmem>>, %arg7: memref<64x32xf32, #tpu.memory_space<vmem>>, %arg8: memref<1x32xf32, #tpu.memory_space<vmem>>, %arg9: memref<16x32xf32, #tpu.memory_space<vmem>>, %arg10: memref<16x32xf32, #tpu.memory_space<vmem>>) attributes {dimension_semantics = [], scalar_prefetch = 0 : i64, scratch_operands = 1 : i64, tpu.core_type = #tpu.core_type<tc>} {
    %c0 = arith.constant 0 : index
    %c0_0 = arith.constant 0 : index
    %0 = vector.load %arg0[%c0, %c0_0] : memref<16x32xf32, #tpu.memory_space<vmem>>, vector<16x32xf32>
    %c0_1 = arith.constant 0 : index
    %c0_2 = arith.constant 0 : index
    %1 = vector.load %arg1[%c0_1, %c0_2] : memref<32x96xf32, #tpu.memory_space<vmem>>, vector<32x96xf32>
    %cst = arith.constant dense<0.000000e+00> : vector<16x96xf32>
    %2 = tpu.matmul %0, %1, %cst {dimension_numbers = #tpu.dot_dimension_numbers<[1], [0], [0], [1], [0, 0, 1, 1], [], []>} : vector<16x32xf32>, vector<32x96xf32>, vector<16x96xf32> -> vector<16x96xf32>
    %c0_3 = arith.constant 0 : index
    %c0_4 = arith.constant 0 : index
    %3 = vector.load %arg2[%c0_3, %c0_4] : memref<1x96xf32, #tpu.memory_space<vmem>>, vector<1x96xf32>
    %4 = vector.broadcast %3 : vector<1x96xf32> to vector<16x96xf32>
    %5 = arith.addf %2, %4 : vector<16x96xf32>
    %c0_5 = arith.constant 0 : index
    %c0_6 = arith.constant 0 : index
    %6 = vector.load %arg3[%c0_5, %c0_6] : memref<32x32xf32, #tpu.memory_space<vmem>>, vector<32x32xf32>
    %7 = vector.extract_strided_slice %5 {offsets = [0, 0], sizes = [8, 32], strides = [1, 1]} : vector<16x96xf32> to vector<8x32xf32>
    %cst_7 = arith.constant 0.353553385 : f32
    %8 = vector.broadcast %cst_7 : f32 to vector<8x32xf32>
    %9 = arith.mulf %7, %8 : vector<8x32xf32>
    %10 = vector.extract_strided_slice %5 {offsets = [0, 32], sizes = [8, 32], strides = [1, 1]} : vector<16x96xf32> to vector<8x32xf32>
    %11 = vector.extract_strided_slice %5 {offsets = [0, 64], sizes = [8, 32], strides = [1, 1]} : vector<16x96xf32> to vector<8x32xf32>
    %cst_8 = arith.constant 0.000000e+00 : f32
    %12 = vector.broadcast %cst_8 : f32 to vector<8x32xf32>
    %13 = vector.extract_strided_slice %9 {offsets = [0, 0], sizes = [8, 8], strides = [1, 1]} : vector<8x32xf32> to vector<8x8xf32>
    %14 = vector.extract_strided_slice %10 {offsets = [0, 0], sizes = [8, 8], strides = [1, 1]} : vector<8x32xf32> to vector<8x8xf32>
    %cst_9 = arith.constant dense<0.000000e+00> : vector<8x8xf32>
    %15 = tpu.matmul %13, %14, %cst_9 {dimension_numbers = #tpu.dot_dimension_numbers<[1], [1], [0], [0], [0, 0, 1, 0], [], []>} : vector<8x8xf32>, vector<8x8xf32>, vector<8x8xf32> -> vector<8x8xf32>
    %cst_10 = arith.constant dense<0xFF800000> : vector<8xf32>
    %16 = vector.multi_reduction <maximumf>, %15, %cst_10 [1] : vector<8x8xf32> to vector<8xf32>
    %17 = vector.shape_cast %16 : vector<8xf32> to vector<8x1xf32>
    %18 = vector.broadcast %17 : vector<8x1xf32> to vector<8x8xf32>
    %19 = arith.subf %15, %18 : vector<8x8xf32>
    %20 = math.exp %19 : vector<8x8xf32>
    %cst_11 = arith.constant dense<0.000000e+00> : vector<8xf32>
    %21 = vector.multi_reduction <add>, %20, %cst_11 [1] : vector<8x8xf32> to vector<8xf32>
    %22 = vector.shape_cast %21 : vector<8xf32> to vector<8x1xf32>
    %23 = tpu.reciprocal %22 {approx = true} : vector<8x1xf32> -> vector<8x1xf32>
    %24 = vector.broadcast %23 : vector<8x1xf32> to vector<8x8xf32>
    %25 = arith.mulf %20, %24 : vector<8x8xf32>
    %26 = vector.extract_strided_slice %11 {offsets = [0, 0], sizes = [8, 8], strides = [1, 1]} : vector<8x32xf32> to vector<8x8xf32>
    %cst_12 = arith.constant dense<0.000000e+00> : vector<8x8xf32>
    %27 = tpu.matmul %25, %26, %cst_12 {dimension_numbers = #tpu.dot_dimension_numbers<[1], [0], [0], [1], [0, 0, 1, 1], [], []>} : vector<8x8xf32>, vector<8x8xf32>, vector<8x8xf32> -> vector<8x8xf32>
    %28 = vector.extract_strided_slice %6 {offsets = [0, 0], sizes = [8, 32], strides = [1, 1]} : vector<32x32xf32> to vector<8x32xf32>
    %cst_13 = arith.constant dense<0.000000e+00> : vector<8x32xf32>
    %29 = tpu.matmul %27, %28, %cst_13 {dimension_numbers = #tpu.dot_dimension_numbers<[1], [0], [0], [1], [0, 0, 1, 1], [], []>} : vector<8x8xf32>, vector<8x32xf32>, vector<8x32xf32> -> vector<8x32xf32>
    %30 = arith.addf %12, %29 : vector<8x32xf32>
    %31 = vector.extract_strided_slice %9 {offsets = [0, 8], sizes = [8, 8], strides = [1, 1]} : vector<8x32xf32> to vector<8x8xf32>
    %32 = vector.extract_strided_slice %10 {offsets = [0, 8], sizes = [8, 8], strides = [1, 1]} : vector<8x32xf32> to vector<8x8xf32>
    %cst_14 = arith.constant dense<0.000000e+00> : vector<8x8xf32>
    %33 = tpu.matmul %31, %32, %cst_14 {dimension_numbers = #tpu.dot_dimension_numbers<[1], [1], [0], [0], [0, 0, 1, 0], [], []>} : vector<8x8xf32>, vector<8x8xf32>, vector<8x8xf32> -> vector<8x8xf32>
    %cst_15 = arith.constant dense<0xFF800000> : vector<8xf32>
    %34 = vector.multi_reduction <maximumf>, %33, %cst_15 [1] : vector<8x8xf32> to vector<8xf32>
    %35 = vector.shape_cast %34 : vector<8xf32> to vector<8x1xf32>
    %36 = vector.broadcast %35 : vector<8x1xf32> to vector<8x8xf32>
    %37 = arith.subf %33, %36 : vector<8x8xf32>
    %38 = math.exp %37 : vector<8x8xf32>
    %cst_16 = arith.constant dense<0.000000e+00> : vector<8xf32>
    %39 = vector.multi_reduction <add>, %38, %cst_16 [1] : vector<8x8xf32> to vector<8xf32>
    %40 = vector.shape_cast %39 : vector<8xf32> to vector<8x1xf32>
    %41 = tpu.reciprocal %40 {approx = true} : vector<8x1xf32> -> vector<8x1xf32>
    %42 = vector.broadcast %41 : vector<8x1xf32> to vector<8x8xf32>
    %43 = arith.mulf %38, %42 : vector<8x8xf32>
    %44 = vector.extract_strided_slice %11 {offsets = [0, 8], sizes = [8, 8], strides = [1, 1]} : vector<8x32xf32> to vector<8x8xf32>
    %cst_17 = arith.constant dense<0.000000e+00> : vector<8x8xf32>
    %45 = tpu.matmul %43, %44, %cst_17 {dimension_numbers = #tpu.dot_dimension_numbers<[1], [0], [0], [1], [0, 0, 1, 1], [], []>} : vector<8x8xf32>, vector<8x8xf32>, vector<8x8xf32> -> vector<8x8xf32>
    %46 = vector.extract_strided_slice %6 {offsets = [8, 0], sizes = [8, 32], strides = [1, 1]} : vector<32x32xf32> to vector<8x32xf32>
    %cst_18 = arith.constant dense<0.000000e+00> : vector<8x32xf32>
    %47 = tpu.matmul %45, %46, %cst_18 {dimension_numbers = #tpu.dot_dimension_numbers<[1], [0], [0], [1], [0, 0, 1, 1], [], []>} : vector<8x8xf32>, vector<8x32xf32>, vector<8x32xf32> -> vector<8x32xf32>
    %48 = arith.addf %30, %47 : vector<8x32xf32>
    %49 = vector.extract_strided_slice %9 {offsets = [0, 16], sizes = [8, 8], strides = [1, 1]} : vector<8x32xf32> to vector<8x8xf32>
    %50 = vector.extract_strided_slice %10 {offsets = [0, 16], sizes = [8, 8], strides = [1, 1]} : vector<8x32xf32> to vector<8x8xf32>
    %cst_19 = arith.constant dense<0.000000e+00> : vector<8x8xf32>
    %51 = tpu.matmul %49, %50, %cst_19 {dimension_numbers = #tpu.dot_dimension_numbers<[1], [1], [0], [0], [0, 0, 1, 0], [], []>} : vector<8x8xf32>, vector<8x8xf32>, vector<8x8xf32> -> vector<8x8xf32>
    %cst_20 = arith.constant dense<0xFF800000> : vector<8xf32>
    %52 = vector.multi_reduction <maximumf>, %51, %cst_20 [1] : vector<8x8xf32> to vector<8xf32>
    %53 = vector.shape_cast %52 : vector<8xf32> to vector<8x1xf32>
    %54 = vector.broadcast %53 : vector<8x1xf32> to vector<8x8xf32>
    %55 = arith.subf %51, %54 : vector<8x8xf32>
    %56 = math.exp %55 : vector<8x8xf32>
    %cst_21 = arith.constant dense<0.000000e+00> : vector<8xf32>
    %57 = vector.multi_reduction <add>, %56, %cst_21 [1] : vector<8x8xf32> to vector<8xf32>
    %58 = vector.shape_cast %57 : vector<8xf32> to vector<8x1xf32>
    %59 = tpu.reciprocal %58 {approx = true} : vector<8x1xf32> -> vector<8x1xf32>
    %60 = vector.broadcast %59 : vector<8x1xf32> to vector<8x8xf32>
    %61 = arith.mulf %56, %60 : vector<8x8xf32>
    %62 = vector.extract_strided_slice %11 {offsets = [0, 16], sizes = [8, 8], strides = [1, 1]} : vector<8x32xf32> to vector<8x8xf32>
    %cst_22 = arith.constant dense<0.000000e+00> : vector<8x8xf32>
    %63 = tpu.matmul %61, %62, %cst_22 {dimension_numbers = #tpu.dot_dimension_numbers<[1], [0], [0], [1], [0, 0, 1, 1], [], []>} : vector<8x8xf32>, vector<8x8xf32>, vector<8x8xf32> -> vector<8x8xf32>
    %64 = vector.extract_strided_slice %6 {offsets = [16, 0], sizes = [8, 32], strides = [1, 1]} : vector<32x32xf32> to vector<8x32xf32>
    %cst_23 = arith.constant dense<0.000000e+00> : vector<8x32xf32>
    %65 = tpu.matmul %63, %64, %cst_23 {dimension_numbers = #tpu.dot_dimension_numbers<[1], [0], [0], [1], [0, 0, 1, 1], [], []>} : vector<8x8xf32>, vector<8x32xf32>, vector<8x32xf32> -> vector<8x32xf32>
    %66 = arith.addf %48, %65 : vector<8x32xf32>
    %67 = vector.extract_strided_slice %9 {offsets = [0, 24], sizes = [8, 8], strides = [1, 1]} : vector<8x32xf32> to vector<8x8xf32>
    %68 = vector.extract_strided_slice %10 {offsets = [0, 24], sizes = [8, 8], strides = [1, 1]} : vector<8x32xf32> to vector<8x8xf32>
    %cst_24 = arith.constant dense<0.000000e+00> : vector<8x8xf32>
    %69 = tpu.matmul %67, %68, %cst_24 {dimension_numbers = #tpu.dot_dimension_numbers<[1], [1], [0], [0], [0, 0, 1, 0], [], []>} : vector<8x8xf32>, vector<8x8xf32>, vector<8x8xf32> -> vector<8x8xf32>
    %cst_25 = arith.constant dense<0xFF800000> : vector<8xf32>
    %70 = vector.multi_reduction <maximumf>, %69, %cst_25 [1] : vector<8x8xf32> to vector<8xf32>
    %71 = vector.shape_cast %70 : vector<8xf32> to vector<8x1xf32>
    %72 = vector.broadcast %71 : vector<8x1xf32> to vector<8x8xf32>
    %73 = arith.subf %69, %72 : vector<8x8xf32>
    %74 = math.exp %73 : vector<8x8xf32>
    %cst_26 = arith.constant dense<0.000000e+00> : vector<8xf32>
    %75 = vector.multi_reduction <add>, %74, %cst_26 [1] : vector<8x8xf32> to vector<8xf32>
    %76 = vector.shape_cast %75 : vector<8xf32> to vector<8x1xf32>
    %77 = tpu.reciprocal %76 {approx = true} : vector<8x1xf32> -> vector<8x1xf32>
    %78 = vector.broadcast %77 : vector<8x1xf32> to vector<8x8xf32>
    %79 = arith.mulf %74, %78 : vector<8x8xf32>
    %80 = vector.extract_strided_slice %11 {offsets = [0, 24], sizes = [8, 8], strides = [1, 1]} : vector<8x32xf32> to vector<8x8xf32>
    %cst_27 = arith.constant dense<0.000000e+00> : vector<8x8xf32>
    %81 = tpu.matmul %79, %80, %cst_27 {dimension_numbers = #tpu.dot_dimension_numbers<[1], [0], [0], [1], [0, 0, 1, 1], [], []>} : vector<8x8xf32>, vector<8x8xf32>, vector<8x8xf32> -> vector<8x8xf32>
    %82 = vector.extract_strided_slice %6 {offsets = [24, 0], sizes = [8, 32], strides = [1, 1]} : vector<32x32xf32> to vector<8x32xf32>
    %cst_28 = arith.constant dense<0.000000e+00> : vector<8x32xf32>
    %83 = tpu.matmul %81, %82, %cst_28 {dimension_numbers = #tpu.dot_dimension_numbers<[1], [0], [0], [1], [0, 0, 1, 1], [], []>} : vector<8x8xf32>, vector<8x32xf32>, vector<8x32xf32> -> vector<8x32xf32>
    %84 = arith.addf %66, %83 : vector<8x32xf32>
    %c0_29 = arith.constant 0 : index
    %c0_30 = arith.constant 0 : index
    %85 = vector.load %arg10[%c0_29, %c0_30] : memref<16x32xf32, #tpu.memory_space<vmem>>, vector<8x32xf32>
    tpu.vector_store %arg10[%c0_29, %c0_30], %84 {strides = array<i32>} : memref<16x32xf32, #tpu.memory_space<vmem>>, vector<8x32xf32>,
    %86 = vector.extract_strided_slice %5 {offsets = [8, 0], sizes = [8, 32], strides = [1, 1]} : vector<16x96xf32> to vector<8x32xf32>
    %cst_31 = arith.constant 0.353553385 : f32
    %87 = vector.broadcast %cst_31 : f32 to vector<8x32xf32>
    %88 = arith.mulf %86, %87 : vector<8x32xf32>
    %89 = vector.extract_strided_slice %5 {offsets = [8, 32], sizes = [8, 32], strides = [1, 1]} : vector<16x96xf32> to vector<8x32xf32>
    %90 = vector.extract_strided_slice %5 {offsets = [8, 64], sizes = [8, 32], strides = [1, 1]} : vector<16x96xf32> to vector<8x32xf32>
    %cst_32 = arith.constant 0.000000e+00 : f32
    %91 = vector.broadcast %cst_32 : f32 to vector<8x32xf32>
    %92 = vector.extract_strided_slice %88 {offsets = [0, 0], sizes = [8, 8], strides = [1, 1]} : vector<8x32xf32> to vector<8x8xf32>
    %93 = vector.extract_strided_slice %89 {offsets = [0, 0], sizes = [8, 8], strides = [1, 1]} : vector<8x32xf32> to vector<8x8xf32>
    %cst_33 = arith.constant dense<0.000000e+00> : vector<8x8xf32>
    %94 = tpu.matmul %92, %93, %cst_33 {dimension_numbers = #tpu.dot_dimension_numbers<[1], [1], [0], [0], [0, 0, 1, 0], [], []>} : vector<8x8xf32>, vector<8x8xf32>, vector<8x8xf32> -> vector<8x8xf32>
    %cst_34 = arith.constant dense<0xFF800000> : vector<8xf32>
    %95 = vector.multi_reduction <maximumf>, %94, %cst_34 [1] : vector<8x8xf32> to vector<8xf32>
    %96 = vector.shape_cast %95 : vector<8xf32> to vector<8x1xf32>
    %97 = vector.broadcast %96 : vector<8x1xf32> to vector<8x8xf32>
    %98 = arith.subf %94, %97 : vector<8x8xf32>
    %99 = math.exp %98 : vector<8x8xf32>
    %cst_35 = arith.constant dense<0.000000e+00> : vector<8xf32>
    %100 = vector.multi_reduction <add>, %99, %cst_35 [1] : vector<8x8xf32> to vector<8xf32>
    %101 = vector.shape_cast %100 : vector<8xf32> to vector<8x1xf32>
    %102 = tpu.reciprocal %101 {approx = true} : vector<8x1xf32> -> vector<8x1xf32>
    %103 = vector.broadcast %102 : vector<8x1xf32> to vector<8x8xf32>
    %104 = arith.mulf %99, %103 : vector<8x8xf32>
    %105 = vector.extract_strided_slice %90 {offsets = [0, 0], sizes = [8, 8], strides = [1, 1]} : vector<8x32xf32> to vector<8x8xf32>
    %cst_36 = arith.constant dense<0.000000e+00> : vector<8x8xf32>
    %106 = tpu.matmul %104, %105, %cst_36 {dimension_numbers = #tpu.dot_dimension_numbers<[1], [0], [0], [1], [0, 0, 1, 1], [], []>} : vector<8x8xf32>, vector<8x8xf32>, vector<8x8xf32> -> vector<8x8xf32>
    %107 = vector.extract_strided_slice %6 {offsets = [0, 0], sizes = [8, 32], strides = [1, 1]} : vector<32x32xf32> to vector<8x32xf32>
    %cst_37 = arith.constant dense<0.000000e+00> : vector<8x32xf32>
    %108 = tpu.matmul %106, %107, %cst_37 {dimension_numbers = #tpu.dot_dimension_numbers<[1], [0], [0], [1], [0, 0, 1, 1], [], []>} : vector<8x8xf32>, vector<8x32xf32>, vector<8x32xf32> -> vector<8x32xf32>
    %109 = arith.addf %91, %108 : vector<8x32xf32>
    %110 = vector.extract_strided_slice %88 {offsets = [0, 8], sizes = [8, 8], strides = [1, 1]} : vector<8x32xf32> to vector<8x8xf32>
    %111 = vector.extract_strided_slice %89 {offsets = [0, 8], sizes = [8, 8], strides = [1, 1]} : vector<8x32xf32> to vector<8x8xf32>
    %cst_38 = arith.constant dense<0.000000e+00> : vector<8x8xf32>
    %112 = tpu.matmul %110, %111, %cst_38 {dimension_numbers = #tpu.dot_dimension_numbers<[1], [1], [0], [0], [0, 0, 1, 0], [], []>} : vector<8x8xf32>, vector<8x8xf32>, vector<8x8xf32> -> vector<8x8xf32>
    %cst_39 = arith.constant dense<0xFF800000> : vector<8xf32>
    %113 = vector.multi_reduction <maximumf>, %112, %cst_39 [1] : vector<8x8xf32> to vector<8xf32>
    %114 = vector.shape_cast %113 : vector<8xf32> to vector<8x1xf32>
    %115 = vector.broadcast %114 : vector<8x1xf32> to vector<8x8xf32>
    %116 = arith.subf %112, %115 : vector<8x8xf32>
    %117 = math.exp %116 : vector<8x8xf32>
    %cst_40 = arith.constant dense<0.000000e+00> : vector<8xf32>
    %118 = vector.multi_reduction <add>, %117, %cst_40 [1] : vector<8x8xf32> to vector<8xf32>
    %119 = vector.shape_cast %118 : vector<8xf32> to vector<8x1xf32>
    %120 = tpu.reciprocal %119 {approx = true} : vector<8x1xf32> -> vector<8x1xf32>
    %121 = vector.broadcast %120 : vector<8x1xf32> to vector<8x8xf32>
    %122 = arith.mulf %117, %121 : vector<8x8xf32>
    %123 = vector.extract_strided_slice %90 {offsets = [0, 8], sizes = [8, 8], strides = [1, 1]} : vector<8x32xf32> to vector<8x8xf32>
    %cst_41 = arith.constant dense<0.000000e+00> : vector<8x8xf32>
    %124 = tpu.matmul %122, %123, %cst_41 {dimension_numbers = #tpu.dot_dimension_numbers<[1], [0], [0], [1], [0, 0, 1, 1], [], []>} : vector<8x8xf32>, vector<8x8xf32>, vector<8x8xf32> -> vector<8x8xf32>
    %125 = vector.extract_strided_slice %6 {offsets = [8, 0], sizes = [8, 32], strides = [1, 1]} : vector<32x32xf32> to vector<8x32xf32>
    %cst_42 = arith.constant dense<0.000000e+00> : vector<8x32xf32>
    %126 = tpu.matmul %124, %125, %cst_42 {dimension_numbers = #tpu.dot_dimension_numbers<[1], [0], [0], [1], [0, 0, 1, 1], [], []>} : vector<8x8xf32>, vector<8x32xf32>, vector<8x32xf32> -> vector<8x32xf32>
    %127 = arith.addf %109, %126 : vector<8x32xf32>
    %128 = vector.extract_strided_slice %88 {offsets = [0, 16], sizes = [8, 8], strides = [1, 1]} : vector<8x32xf32> to vector<8x8xf32>
    %129 = vector.extract_strided_slice %89 {offsets = [0, 16], sizes = [8, 8], strides = [1, 1]} : vector<8x32xf32> to vector<8x8xf32>
    %cst_43 = arith.constant dense<0.000000e+00> : vector<8x8xf32>
    %130 = tpu.matmul %128, %129, %cst_43 {dimension_numbers = #tpu.dot_dimension_numbers<[1], [1], [0], [0], [0, 0, 1, 0], [], []>} : vector<8x8xf32>, vector<8x8xf32>, vector<8x8xf32> -> vector<8x8xf32>
    %cst_44 = arith.constant dense<0xFF800000> : vector<8xf32>
    %131 = vector.multi_reduction <maximumf>, %130, %cst_44 [1] : vector<8x8xf32> to vector<8xf32>
    %132 = vector.shape_cast %131 : vector<8xf32> to vector<8x1xf32>
    %133 = vector.broadcast %132 : vector<8x1xf32> to vector<8x8xf32>
    %134 = arith.subf %130, %133 : vector<8x8xf32>
    %135 = math.exp %134 : vector<8x8xf32>
    %cst_45 = arith.constant dense<0.000000e+00> : vector<8xf32>
    %136 = vector.multi_reduction <add>, %135, %cst_45 [1] : vector<8x8xf32> to vector<8xf32>
    %137 = vector.shape_cast %136 : vector<8xf32> to vector<8x1xf32>
    %138 = tpu.reciprocal %137 {approx = true} : vector<8x1xf32> -> vector<8x1xf32>
    %139 = vector.broadcast %138 : vector<8x1xf32> to vector<8x8xf32>
    %140 = arith.mulf %135, %139 : vector<8x8xf32>
    %141 = vector.extract_strided_slice %90 {offsets = [0, 16], sizes = [8, 8], strides = [1, 1]} : vector<8x32xf32> to vector<8x8xf32>
    %cst_46 = arith.constant dense<0.000000e+00> : vector<8x8xf32>
    %142 = tpu.matmul %140, %141, %cst_46 {dimension_numbers = #tpu.dot_dimension_numbers<[1], [0], [0], [1], [0, 0, 1, 1], [], []>} : vector<8x8xf32>, vector<8x8xf32>, vector<8x8xf32> -> vector<8x8xf32>
    %143 = vector.extract_strided_slice %6 {offsets = [16, 0], sizes = [8, 32], strides = [1, 1]} : vector<32x32xf32> to vector<8x32xf32>
    %cst_47 = arith.constant dense<0.000000e+00> : vector<8x32xf32>
    %144 = tpu.matmul %142, %143, %cst_47 {dimension_numbers = #tpu.dot_dimension_numbers<[1], [0], [0], [1], [0, 0, 1, 1], [], []>} : vector<8x8xf32>, vector<8x32xf32>, vector<8x32xf32> -> vector<8x32xf32>
    %145 = arith.addf %127, %144 : vector<8x32xf32>
    %146 = vector.extract_strided_slice %88 {offsets = [0, 24], sizes = [8, 8], strides = [1, 1]} : vector<8x32xf32> to vector<8x8xf32>
    %147 = vector.extract_strided_slice %89 {offsets = [0, 24], sizes = [8, 8], strides = [1, 1]} : vector<8x32xf32> to vector<8x8xf32>
    %cst_48 = arith.constant dense<0.000000e+00> : vector<8x8xf32>
    %148 = tpu.matmul %146, %147, %cst_48 {dimension_numbers = #tpu.dot_dimension_numbers<[1], [1], [0], [0], [0, 0, 1, 0], [], []>} : vector<8x8xf32>, vector<8x8xf32>, vector<8x8xf32> -> vector<8x8xf32>
    %cst_49 = arith.constant dense<0xFF800000> : vector<8xf32>
    %149 = vector.multi_reduction <maximumf>, %148, %cst_49 [1] : vector<8x8xf32> to vector<8xf32>
    %150 = vector.shape_cast %149 : vector<8xf32> to vector<8x1xf32>
    %151 = vector.broadcast %150 : vector<8x1xf32> to vector<8x8xf32>
    %152 = arith.subf %148, %151 : vector<8x8xf32>
    %153 = math.exp %152 : vector<8x8xf32>
    %cst_50 = arith.constant dense<0.000000e+00> : vector<8xf32>
    %154 = vector.multi_reduction <add>, %153, %cst_50 [1] : vector<8x8xf32> to vector<8xf32>
    %155 = vector.shape_cast %154 : vector<8xf32> to vector<8x1xf32>
    %156 = tpu.reciprocal %155 {approx = true} : vector<8x1xf32> -> vector<8x1xf32>
    %157 = vector.broadcast %156 : vector<8x1xf32> to vector<8x8xf32>
    %158 = arith.mulf %153, %157 : vector<8x8xf32>
    %159 = vector.extract_strided_slice %90 {offsets = [0, 24], sizes = [8, 8], strides = [1, 1]} : vector<8x32xf32> to vector<8x8xf32>
    %cst_51 = arith.constant dense<0.000000e+00> : vector<8x8xf32>
    %160 = tpu.matmul %158, %159, %cst_51 {dimension_numbers = #tpu.dot_dimension_numbers<[1], [0], [0], [1], [0, 0, 1, 1], [], []>} : vector<8x8xf32>, vector<8x8xf32>, vector<8x8xf32> -> vector<8x8xf32>
    %161 = vector.extract_strided_slice %6 {offsets = [24, 0], sizes = [8, 32], strides = [1, 1]} : vector<32x32xf32> to vector<8x32xf32>
    %cst_52 = arith.constant dense<0.000000e+00> : vector<8x32xf32>
    %162 = tpu.matmul %160, %161, %cst_52 {dimension_numbers = #tpu.dot_dimension_numbers<[1], [0], [0], [1], [0, 0, 1, 1], [], []>} : vector<8x8xf32>, vector<8x32xf32>, vector<8x32xf32> -> vector<8x32xf32>
    %163 = arith.addf %145, %162 : vector<8x32xf32>
    %c8 = arith.constant 8 : index
    %c0_53 = arith.constant 0 : index
    %164 = vector.load %arg10[%c8, %c0_53] : memref<16x32xf32, #tpu.memory_space<vmem>>, vector<8x32xf32>
    tpu.vector_store %arg10[%c8, %c0_53], %163 {strides = array<i32>} : memref<16x32xf32, #tpu.memory_space<vmem>>, vector<8x32xf32>,
    %c0_54 = arith.constant 0 : index
    %c0_55 = arith.constant 0 : index
    %165 = vector.load %arg10[%c0_54, %c0_55] : memref<16x32xf32, #tpu.memory_space<vmem>>, vector<16x32xf32>
    %166 = arith.addf %0, %165 : vector<16x32xf32>
    %c0_56 = arith.constant 0 : index
    %c0_57 = arith.constant 0 : index
    %167 = vector.load %arg4[%c0_56, %c0_57] : memref<1x32xf32, #tpu.memory_space<vmem>>, vector<1x32xf32>
    %168 = vector.broadcast %167 : vector<1x32xf32> to vector<16x32xf32>
    %169 = arith.addf %166, %168 : vector<16x32xf32>
    %cst_58 = arith.constant 0.999994993 : f32
    %170 = vector.broadcast %cst_58 : f32 to vector<16x32xf32>
    %171 = arith.mulf %169, %170 : vector<16x32xf32>
    %c0_59 = arith.constant 0 : index
    %c0_60 = arith.constant 0 : index
    %172 = vector.load %arg5[%c0_59, %c0_60] : memref<32x64xf32, #tpu.memory_space<vmem>>, vector<32x64xf32>
    %cst_61 = arith.constant dense<0.000000e+00> : vector<16x64xf32>
    %173 = tpu.matmul %171, %172, %cst_61 {dimension_numbers = #tpu.dot_dimension_numbers<[1], [0], [0], [1], [0, 0, 1, 1], [], []>} : vector<16x32xf32>, vector<32x64xf32>, vector<16x64xf32> -> vector<16x64xf32>
    %c0_62 = arith.constant 0 : index
    %c0_63 = arith.constant 0 : index
    %174 = vector.load %arg6[%c0_62, %c0_63] : memref<1x64xf32, #tpu.memory_space<vmem>>, vector<1x64xf32>
    %175 = vector.broadcast %174 : vector<1x64xf32> to vector<16x64xf32>
    %176 = arith.addf %173, %175 : vector<16x64xf32>
    %cst_64 = arith.constant 0.000000e+00 : f32
    %177 = vector.broadcast %cst_64 : f32 to vector<16x64xf32>
    %178 = arith.maximumf %176, %177 : vector<16x64xf32>
    %c0_65 = arith.constant 0 : index
    %c0_66 = arith.constant 0 : index
    %179 = vector.load %arg7[%c0_65, %c0_66] : memref<64x32xf32, #tpu.memory_space<vmem>>, vector<64x32xf32>
    %cst_67 = arith.constant dense<0.000000e+00> : vector<16x32xf32>
    %180 = tpu.matmul %178, %179, %cst_67 {dimension_numbers = #tpu.dot_dimension_numbers<[1], [0], [0], [1], [0, 0, 1, 1], [], []>} : vector<16x64xf32>, vector<64x32xf32>, vector<16x32xf32> -> vector<16x32xf32>
    %c0_68 = arith.constant 0 : index
    %c0_69 = arith.constant 0 : index
    %181 = vector.load %arg8[%c0_68, %c0_69] : memref<1x32xf32, #tpu.memory_space<vmem>>, vector<1x32xf32>
    %182 = vector.broadcast %181 : vector<1x32xf32> to vector<16x32xf32>
    %183 = arith.addf %180, %182 : vector<16x32xf32>
    %184 = arith.addf %171, %183 : vector<16x32xf32>
    %cst_70 = arith.constant 0.999994993 : f32
    %185 = vector.broadcast %cst_70 : f32 to vector<16x32xf32>
    %186 = arith.mulf %184, %185 : vector<16x32xf32>
    %c0_71 = arith.constant 0 : index
    %c0_72 = arith.constant 0 : index
    %187 = vector.load %arg9[%c0_71, %c0_72] : memref<16x32xf32, #tpu.memory_space<vmem>>, vector<16x32xf32>
    tpu.vector_store %arg9[%c0_71, %c0_72], %186 {strides = array<i32>} : memref<16x32xf32, #tpu.memory_space<vmem>>, vector<16x32xf32>,
    return
  }
}

module attributes {stable_mosaic.version = 11 : i64} {
  func.func @_linear_kernel(%arg0: memref<16x32xf32, #tpu.memory_space<vmem>>, %arg1: memref<32x32xf32, #tpu.memory_space<vmem>>, %arg2: memref<1x32xf32, #tpu.memory_space<vmem>>, %arg3: memref<16x32xf32, #tpu.memory_space<vmem>>) attributes {dimension_semantics = [], scalar_prefetch = 0 : i64, scratch_operands = 0 : i64, tpu.core_type = #tpu.core_type<tc>} {
    %c0 = arith.constant 0 : index
    %c0_0 = arith.constant 0 : index
    %0 = vector.load %arg0[%c0, %c0_0] : memref<16x32xf32, #tpu.memory_space<vmem>>, vector<16x32xf32>
    %c0_1 = arith.constant 0 : index
    %c0_2 = arith.constant 0 : index
    %1 = vector.load %arg1[%c0_1, %c0_2] : memref<32x32xf32, #tpu.memory_space<vmem>>, vector<32x32xf32>
    %cst = arith.constant dense<0.000000e+00> : vector<16x32xf32>
    %2 = tpu.matmul %0, %1, %cst {dimension_numbers = #tpu.dot_dimension_numbers<[1], [0], [0], [1], [0, 0, 1, 1], [], []>} : vector<16x32xf32>, vector<32x32xf32>, vector<16x32xf32> -> vector<16x32xf32>
    %c0_3 = arith.constant 0 : index
    %c0_4 = arith.constant 0 : index
    %3 = vector.load %arg2[%c0_3, %c0_4] : memref<1x32xf32, #tpu.memory_space<vmem>>, vector<1x32xf32>
    %4 = vector.broadcast %3 : vector<1x32xf32> to vector<16x32xf32>
    %5 = arith.addf %2, %4 : vector<16x32xf32>
    %c0_5 = arith.constant 0 : index
    %c0_6 = arith.constant 0 : index
    %6 = vector.load %arg3[%c0_5, %c0_6] : memref<16x32xf32, #tpu.memory_space<vmem>>, vector<16x32xf32>
    tpu.vector_store %arg3[%c0_5, %c0_6], %5 {strides = array<i32>} : memref<16x32xf32, #tpu.memory_space<vmem>>, vector<16x32xf32>,
    return
  }
}

module attributes {stable_mosaic.version = 11 : i64} {
  func.func @_linear_kernel(%arg0: memref<16x8xf32, #tpu.memory_space<vmem>>, %arg1: memref<8x32xf32, #tpu.memory_space<vmem>>, %arg2: memref<1x32xf32, #tpu.memory_space<vmem>>, %arg3: memref<16x32xf32, #tpu.memory_space<vmem>>) attributes {dimension_semantics = [], scalar_prefetch = 0 : i64, scratch_operands = 0 : i64, tpu.core_type = #tpu.core_type<tc>} {
    %c0 = arith.constant 0 : index
    %c0_0 = arith.constant 0 : index
    %0 = vector.load %arg0[%c0, %c0_0] : memref<16x8xf32, #tpu.memory_space<vmem>>, vector<16x8xf32>
    %c0_1 = arith.constant 0 : index
    %c0_2 = arith.constant 0 : index
    %1 = vector.load %arg1[%c0_1, %c0_2] : memref<8x32xf32, #tpu.memory_space<vmem>>, vector<8x32xf32>
    %cst = arith.constant dense<0.000000e+00> : vector<16x32xf32>
    %2 = tpu.matmul %0, %1, %cst {dimension_numbers = #tpu.dot_dimension_numbers<[1], [0], [0], [1], [0, 0, 1, 1], [], []>} : vector<16x8xf32>, vector<8x32xf32>, vector<16x32xf32> -> vector<16x32xf32>
    %c0_3 = arith.constant 0 : index
    %c0_4 = arith.constant 0 : index
    %3 = vector.load %arg2[%c0_3, %c0_4] : memref<1x32xf32, #tpu.memory_space<vmem>>, vector<1x32xf32>
    %4 = vector.broadcast %3 : vector<1x32xf32> to vector<16x32xf32>
    %5 = arith.addf %2, %4 : vector<16x32xf32>
    %c0_5 = arith.constant 0 : index
    %c0_6 = arith.constant 0 : index
    %6 = vector.load %arg3[%c0_5, %c0_6] : memref<16x32xf32, #tpu.memory_space<vmem>>, vector<16x32xf32>
    tpu.vector_store %arg3[%c0_5, %c0_6], %5 {strides = array<i32>} : memref<16x32xf32, #tpu.memory_space<vmem>>, vector<16x32xf32>,
    return
  }
}

module attributes {stable_mosaic.version = 11 : i64} {
  func.func @_linear_kernel(%arg0: memref<2x64xf32, #tpu.memory_space<vmem>>, %arg1: memref<64x32xf32, #tpu.memory_space<vmem>>, %arg2: memref<1x32xf32, #tpu.memory_space<vmem>>, %arg3: memref<2x32xf32, #tpu.memory_space<vmem>>) attributes {dimension_semantics = [], scalar_prefetch = 0 : i64, scratch_operands = 0 : i64, tpu.core_type = #tpu.core_type<tc>} {
    %c0 = arith.constant 0 : index
    %c0_0 = arith.constant 0 : index
    %0 = vector.load %arg0[%c0, %c0_0] : memref<2x64xf32, #tpu.memory_space<vmem>>, vector<2x64xf32>
    %c0_1 = arith.constant 0 : index
    %c0_2 = arith.constant 0 : index
    %1 = vector.load %arg1[%c0_1, %c0_2] : memref<64x32xf32, #tpu.memory_space<vmem>>, vector<64x32xf32>
    %cst = arith.constant dense<0.000000e+00> : vector<2x32xf32>
    %2 = tpu.matmul %0, %1, %cst {dimension_numbers = #tpu.dot_dimension_numbers<[1], [0], [0], [1], [0, 0, 1, 1], [], []>} : vector<2x64xf32>, vector<64x32xf32>, vector<2x32xf32> -> vector<2x32xf32>
    %c0_3 = arith.constant 0 : index
    %c0_4 = arith.constant 0 : index
    %3 = vector.load %arg2[%c0_3, %c0_4] : memref<1x32xf32, #tpu.memory_space<vmem>>, vector<1x32xf32>
    %4 = vector.broadcast %3 : vector<1x32xf32> to vector<2x32xf32>
    %5 = arith.addf %2, %4 : vector<2x32xf32>
    %c0_5 = arith.constant 0 : index
    %c0_6 = arith.constant 0 : index
    %6 = vector.load %arg3[%c0_5, %c0_6] : memref<2x32xf32, #tpu.memory_space<vmem>>, vector<2x32xf32>
    tpu.vector_store %arg3[%c0_5, %c0_6], %5 {strides = array<i32>} : memref<2x32xf32, #tpu.memory_space<vmem>>, vector<2x32xf32>,
    return
  }
}

module attributes {stable_mosaic.version = 11 : i64} {
  func.func @_decode_step_kernel(%arg0: memref<2x32xf32, #tpu.memory_space<vmem>>, %arg1: memref<2x8xf32, #tpu.memory_space<vmem>>, %arg2: memref<2x32xf32, #tpu.memory_space<vmem>>, %arg3: memref<32x32xf32, #tpu.memory_space<vmem>>, %arg4: memref<1x32x32xf32, #tpu.memory_space<vmem>>, %arg5: memref<1x1x32xf32, #tpu.memory_space<vmem>>, %arg6: memref<1x32x32xf32, #tpu.memory_space<vmem>>, %arg7: memref<1x1x32xf32, #tpu.memory_space<vmem>>, %arg8: memref<1x32x32xf32, #tpu.memory_space<vmem>>, %arg9: memref<1x1x32xf32, #tpu.memory_space<vmem>>, %arg10: memref<1x32x32xf32, #tpu.memory_space<vmem>>, %arg11: memref<1x1x32xf32, #tpu.memory_space<vmem>>, %arg12: memref<1x2x8x32xf32, #tpu.memory_space<vmem>>, %arg13: memref<1x2x8x32xf32, #tpu.memory_space<vmem>>, %arg14: memref<1x32x64xf32, #tpu.memory_space<vmem>>, %arg15: memref<1x1x64xf32, #tpu.memory_space<vmem>>, %arg16: memref<1x64x32xf32, #tpu.memory_space<vmem>>, %arg17: memref<1x1x32xf32, #tpu.memory_space<vmem>>, %arg18: memref<32x32xf32, #tpu.memory_space<vmem>>, %arg19: memref<1x32xf32, #tpu.memory_space<vmem>>, %arg20: memref<2x8x32xf32, #tpu.memory_space<vmem>>, %arg21: memref<2x8xf32, #tpu.memory_space<vmem>>) attributes {dimension_semantics = [], scalar_prefetch = 0 : i64, scratch_operands = 0 : i64, tpu.core_type = #tpu.core_type<tc>} {
    %c0 = arith.constant 0 : index
    %c0_0 = arith.constant 0 : index
    %0 = vector.load %arg1[%c0, %c0_0] : memref<2x8xf32, #tpu.memory_space<vmem>>, vector<2x8xf32>
    %cst = arith.constant -1.000000e+30 : f32
    %1 = vector.broadcast %cst : f32 to vector<2x8xf32>
    %2 = arith.mulf %0, %1 : vector<2x8xf32>
    %c0_1 = arith.constant 0 : index
    %c0_2 = arith.constant 0 : index
    %3 = vector.load %arg2[%c0_1, %c0_2] : memref<2x32xf32, #tpu.memory_space<vmem>>, vector<2x32xf32>
    %c0_3 = arith.constant 0 : index
    %c0_4 = arith.constant 0 : index
    %4 = vector.load %arg0[%c0_3, %c0_4] : memref<2x32xf32, #tpu.memory_space<vmem>>, vector<2x32xf32>
    %c0_5 = arith.constant 0 : index
    %c0_6 = arith.constant 0 : index
    %5 = vector.load %arg3[%c0_5, %c0_6] : memref<32x32xf32, #tpu.memory_space<vmem>>, vector<32x32xf32>
    %cst_7 = arith.constant dense<0.000000e+00> : vector<2x32xf32>
    %6 = tpu.matmul %4, %5, %cst_7 {dimension_numbers = #tpu.dot_dimension_numbers<[1], [0], [0], [1], [0, 0, 1, 1], [], []>} : vector<2x32xf32>, vector<32x32xf32>, vector<2x32xf32> -> vector<2x32xf32>
    %7 = arith.addf %3, %6 : vector<2x32xf32>
    %c0_8 = arith.constant 0 : index
    %c0_9 = arith.constant 0 : index
    %c0_10 = arith.constant 0 : index
    %8 = vector.load %arg4[%c0_8, %c0_9, %c0_10] : memref<1x32x32xf32, #tpu.memory_space<vmem>>, vector<1x32x32xf32>
    %9 = vector.shape_cast %8 : vector<1x32x32xf32> to vector<32x32xf32>
    %cst_11 = arith.constant dense<0.000000e+00> : vector<2x32xf32>
    %10 = tpu.matmul %7, %9, %cst_11 {dimension_numbers = #tpu.dot_dimension_numbers<[1], [0], [0], [1], [0, 0, 1, 1], [], []>} : vector<2x32xf32>, vector<32x32xf32>, vector<2x32xf32> -> vector<2x32xf32>
    %c0_12 = arith.constant 0 : index
    %c0_13 = arith.constant 0 : index
    %c0_14 = arith.constant 0 : index
    %11 = vector.load %arg5[%c0_12, %c0_13, %c0_14] : memref<1x1x32xf32, #tpu.memory_space<vmem>>, vector<1x1x32xf32>
    %12 = vector.shape_cast %11 : vector<1x1x32xf32> to vector<1x32xf32>
    %13 = vector.broadcast %12 : vector<1x32xf32> to vector<2x32xf32>
    %14 = arith.addf %10, %13 : vector<2x32xf32>
    %c0_15 = arith.constant 0 : index
    %c0_16 = arith.constant 0 : index
    %c0_17 = arith.constant 0 : index
    %15 = vector.load %arg6[%c0_15, %c0_16, %c0_17] : memref<1x32x32xf32, #tpu.memory_space<vmem>>, vector<1x32x32xf32>
    %16 = vector.shape_cast %15 : vector<1x32x32xf32> to vector<32x32xf32>
    %cst_18 = arith.constant dense<0.000000e+00> : vector<2x32xf32>
    %17 = tpu.matmul %14, %16, %cst_18 {dimension_numbers = #tpu.dot_dimension_numbers<[1], [0], [0], [1], [0, 0, 1, 1], [], []>} : vector<2x32xf32>, vector<32x32xf32>, vector<2x32xf32> -> vector<2x32xf32>
    %c0_19 = arith.constant 0 : index
    %c0_20 = arith.constant 0 : index
    %c0_21 = arith.constant 0 : index
    %18 = vector.load %arg7[%c0_19, %c0_20, %c0_21] : memref<1x1x32xf32, #tpu.memory_space<vmem>>, vector<1x1x32xf32>
    %19 = vector.shape_cast %18 : vector<1x1x32xf32> to vector<1x32xf32>
    %20 = vector.broadcast %19 : vector<1x32xf32> to vector<2x32xf32>
    %21 = arith.addf %17, %20 : vector<2x32xf32>
    %22 = arith.addf %7, %21 : vector<2x32xf32>
    %cst_22 = arith.constant 0.999994993 : f32
    %23 = vector.broadcast %cst_22 : f32 to vector<2x32xf32>
    %24 = arith.mulf %22, %23 : vector<2x32xf32>
    %c0_23 = arith.constant 0 : index
    %c0_24 = arith.constant 0 : index
    %c0_25 = arith.constant 0 : index
    %25 = vector.load %arg8[%c0_23, %c0_24, %c0_25] : memref<1x32x32xf32, #tpu.memory_space<vmem>>, vector<1x32x32xf32>
    %26 = vector.shape_cast %25 : vector<1x32x32xf32> to vector<32x32xf32>
    %cst_26 = arith.constant dense<0.000000e+00> : vector<2x32xf32>
    %27 = tpu.matmul %24, %26, %cst_26 {dimension_numbers = #tpu.dot_dimension_numbers<[1], [0], [0], [1], [0, 0, 1, 1], [], []>} : vector<2x32xf32>, vector<32x32xf32>, vector<2x32xf32> -> vector<2x32xf32>
    %c0_27 = arith.constant 0 : index
    %c0_28 = arith.constant 0 : index
    %c0_29 = arith.constant 0 : index
    %28 = vector.load %arg9[%c0_27, %c0_28, %c0_29] : memref<1x1x32xf32, #tpu.memory_space<vmem>>, vector<1x1x32xf32>
    %29 = vector.shape_cast %28 : vector<1x1x32xf32> to vector<1x32xf32>
    %30 = vector.broadcast %29 : vector<1x32xf32> to vector<2x32xf32>
    %31 = arith.addf %27, %30 : vector<2x32xf32>
    %cst_30 = arith.constant 0.353553385 : f32
    %32 = vector.broadcast %cst_30 : f32 to vector<2x32xf32>
    %33 = arith.mulf %31, %32 : vector<2x32xf32>
    %c0_31 = arith.constant 0 : index
    %c0_32 = arith.constant 0 : index
    %c0_33 = arith.constant 0 : index
    %c0_34 = arith.constant 0 : index
    %34 = vector.load %arg12[%c0_31, %c0_32, %c0_33, %c0_34] : memref<1x2x8x32xf32, #tpu.memory_space<vmem>>, vector<1x2x8x32xf32>
    %35 = vector.shape_cast %34 : vector<1x2x8x32xf32> to vector<2x8x32xf32>
    %c0_35 = arith.constant 0 : index
    %c0_36 = arith.constant 0 : index
    %c0_37 = arith.constant 0 : index
    %c0_38 = arith.constant 0 : index
    %36 = vector.load %arg13[%c0_35, %c0_36, %c0_37, %c0_38] : memref<1x2x8x32xf32, #tpu.memory_space<vmem>>, vector<1x2x8x32xf32>
    %37 = vector.shape_cast %36 : vector<1x2x8x32xf32> to vector<2x8x32xf32>
    %c0_39 = arith.constant 0 : index
    %c0_40 = arith.constant 0 : index
    %c0_41 = arith.constant 0 : index
    %38 = vector.load %arg10[%c0_39, %c0_40, %c0_41] : memref<1x32x32xf32, #tpu.memory_space<vmem>>, vector<1x32x32xf32>
    %39 = vector.shape_cast %38 : vector<1x32x32xf32> to vector<32x32xf32>
    %cst_42 = arith.constant 0.000000e+00 : f32
    %40 = vector.broadcast %cst_42 : f32 to vector<2x32xf32>
    %41 = vector.extract_strided_slice %33 {offsets = [0, 0], sizes = [2, 8], strides = [1, 1]} : vector<2x32xf32> to vector<2x8xf32>
    %42 = vector.shape_cast %41 : vector<2x8xf32> to vector<2x1x8xf32>
    %43 = vector.extract_strided_slice %35 {offsets = [0, 0, 0], sizes = [2, 8, 8], strides = [1, 1, 1]} : vector<2x8x32xf32> to vector<2x8x8xf32>
    %44 = vector.broadcast %42 : vector<2x1x8xf32> to vector<2x8x8xf32>
    %45 = arith.mulf %44, %43 : vector<2x8x8xf32>
    %cst_43 = arith.constant dense<0.000000e+00> : vector<2x8xf32>
    %46 = vector.multi_reduction <add>, %45, %cst_43 [2] : vector<2x8x8xf32> to vector<2x8xf32>
    %47 = arith.addf %46, %2 : vector<2x8xf32>
    %cst_44 = arith.constant dense<0xFF800000> : vector<2xf32>
    %48 = vector.multi_reduction <maximumf>, %47, %cst_44 [1] : vector<2x8xf32> to vector<2xf32>
    %49 = vector.shape_cast %48 : vector<2xf32> to vector<2x1xf32>
    %50 = vector.broadcast %49 : vector<2x1xf32> to vector<2x8xf32>
    %51 = arith.subf %47, %50 : vector<2x8xf32>
    %52 = math.exp %51 : vector<2x8xf32>
    %cst_45 = arith.constant dense<0.000000e+00> : vector<2xf32>
    %53 = vector.multi_reduction <add>, %52, %cst_45 [1] : vector<2x8xf32> to vector<2xf32>
    %54 = vector.shape_cast %53 : vector<2xf32> to vector<2x1xf32>
    %55 = tpu.reciprocal %54 {approx = true} : vector<2x1xf32> -> vector<2x1xf32>
    %56 = vector.broadcast %55 : vector<2x1xf32> to vector<2x8xf32>
    %57 = arith.mulf %52, %56 : vector<2x8xf32>
    %58 = vector.shape_cast %57 : vector<2x8xf32> to vector<2x8x1xf32>
    %59 = vector.extract_strided_slice %37 {offsets = [0, 0, 0], sizes = [2, 8, 8], strides = [1, 1, 1]} : vector<2x8x32xf32> to vector<2x8x8xf32>
    %60 = vector.broadcast %58 : vector<2x8x1xf32> to vector<2x8x8xf32>
    %61 = arith.mulf %60, %59 : vector<2x8x8xf32>
    %cst_46 = arith.constant dense<0.000000e+00> : vector<2x8xf32>
    %62 = vector.multi_reduction <add>, %61, %cst_46 [1] : vector<2x8x8xf32> to vector<2x8xf32>
    %63 = vector.extract_strided_slice %39 {offsets = [0, 0], sizes = [8, 32], strides = [1, 1]} : vector<32x32xf32> to vector<8x32xf32>
    %cst_47 = arith.constant dense<0.000000e+00> : vector<2x32xf32>
    %64 = tpu.matmul %62, %63, %cst_47 {dimension_numbers = #tpu.dot_dimension_numbers<[1], [0], [0], [1], [0, 0, 1, 1], [], []>} : vector<2x8xf32>, vector<8x32xf32>, vector<2x32xf32> -> vector<2x32xf32>
    %65 = arith.addf %40, %64 : vector<2x32xf32>
    %66 = vector.extract_strided_slice %33 {offsets = [0, 8], sizes = [2, 8], strides = [1, 1]} : vector<2x32xf32> to vector<2x8xf32>
    %67 = vector.shape_cast %66 : vector<2x8xf32> to vector<2x1x8xf32>
    %68 = vector.extract_strided_slice %35 {offsets = [0, 0, 8], sizes = [2, 8, 8], strides = [1, 1, 1]} : vector<2x8x32xf32> to vector<2x8x8xf32>
    %69 = vector.broadcast %67 : vector<2x1x8xf32> to vector<2x8x8xf32>
    %70 = arith.mulf %69, %68 : vector<2x8x8xf32>
    %cst_48 = arith.constant dense<0.000000e+00> : vector<2x8xf32>
    %71 = vector.multi_reduction <add>, %70, %cst_48 [2] : vector<2x8x8xf32> to vector<2x8xf32>
    %72 = arith.addf %71, %2 : vector<2x8xf32>
    %cst_49 = arith.constant dense<0xFF800000> : vector<2xf32>
    %73 = vector.multi_reduction <maximumf>, %72, %cst_49 [1] : vector<2x8xf32> to vector<2xf32>
    %74 = vector.shape_cast %73 : vector<2xf32> to vector<2x1xf32>
    %75 = vector.broadcast %74 : vector<2x1xf32> to vector<2x8xf32>
    %76 = arith.subf %72, %75 : vector<2x8xf32>
    %77 = math.exp %76 : vector<2x8xf32>
    %cst_50 = arith.constant dense<0.000000e+00> : vector<2xf32>
    %78 = vector.multi_reduction <add>, %77, %cst_50 [1] : vector<2x8xf32> to vector<2xf32>
    %79 = vector.shape_cast %78 : vector<2xf32> to vector<2x1xf32>
    %80 = tpu.reciprocal %79 {approx = true} : vector<2x1xf32> -> vector<2x1xf32>
    %81 = vector.broadcast %80 : vector<2x1xf32> to vector<2x8xf32>
    %82 = arith.mulf %77, %81 : vector<2x8xf32>
    %83 = vector.shape_cast %82 : vector<2x8xf32> to vector<2x8x1xf32>
    %84 = vector.extract_strided_slice %37 {offsets = [0, 0, 8], sizes = [2, 8, 8], strides = [1, 1, 1]} : vector<2x8x32xf32> to vector<2x8x8xf32>
    %85 = vector.broadcast %83 : vector<2x8x1xf32> to vector<2x8x8xf32>
    %86 = arith.mulf %85, %84 : vector<2x8x8xf32>
    %cst_51 = arith.constant dense<0.000000e+00> : vector<2x8xf32>
    %87 = vector.multi_reduction <add>, %86, %cst_51 [1] : vector<2x8x8xf32> to vector<2x8xf32>
    %88 = vector.extract_strided_slice %39 {offsets = [8, 0], sizes = [8, 32], strides = [1, 1]} : vector<32x32xf32> to vector<8x32xf32>
    %cst_52 = arith.constant dense<0.000000e+00> : vector<2x32xf32>
    %89 = tpu.matmul %87, %88, %cst_52 {dimension_numbers = #tpu.dot_dimension_numbers<[1], [0], [0], [1], [0, 0, 1, 1], [], []>} : vector<2x8xf32>, vector<8x32xf32>, vector<2x32xf32> -> vector<2x32xf32>
    %90 = arith.addf %65, %89 : vector<2x32xf32>
    %91 = vector.extract_strided_slice %33 {offsets = [0, 16], sizes = [2, 8], strides = [1, 1]} : vector<2x32xf32> to vector<2x8xf32>
    %92 = vector.shape_cast %91 : vector<2x8xf32> to vector<2x1x8xf32>
    %93 = vector.extract_strided_slice %35 {offsets = [0, 0, 16], sizes = [2, 8, 8], strides = [1, 1, 1]} : vector<2x8x32xf32> to vector<2x8x8xf32>
    %94 = vector.broadcast %92 : vector<2x1x8xf32> to vector<2x8x8xf32>
    %95 = arith.mulf %94, %93 : vector<2x8x8xf32>
    %cst_53 = arith.constant dense<0.000000e+00> : vector<2x8xf32>
    %96 = vector.multi_reduction <add>, %95, %cst_53 [2] : vector<2x8x8xf32> to vector<2x8xf32>
    %97 = arith.addf %96, %2 : vector<2x8xf32>
    %cst_54 = arith.constant dense<0xFF800000> : vector<2xf32>
    %98 = vector.multi_reduction <maximumf>, %97, %cst_54 [1] : vector<2x8xf32> to vector<2xf32>
    %99 = vector.shape_cast %98 : vector<2xf32> to vector<2x1xf32>
    %100 = vector.broadcast %99 : vector<2x1xf32> to vector<2x8xf32>
    %101 = arith.subf %97, %100 : vector<2x8xf32>
    %102 = math.exp %101 : vector<2x8xf32>
    %cst_55 = arith.constant dense<0.000000e+00> : vector<2xf32>
    %103 = vector.multi_reduction <add>, %102, %cst_55 [1] : vector<2x8xf32> to vector<2xf32>
    %104 = vector.shape_cast %103 : vector<2xf32> to vector<2x1xf32>
    %105 = tpu.reciprocal %104 {approx = true} : vector<2x1xf32> -> vector<2x1xf32>
    %106 = vector.broadcast %105 : vector<2x1xf32> to vector<2x8xf32>
    %107 = arith.mulf %102, %106 : vector<2x8xf32>
    %108 = vector.shape_cast %107 : vector<2x8xf32> to vector<2x8x1xf32>
    %109 = vector.extract_strided_slice %37 {offsets = [0, 0, 16], sizes = [2, 8, 8], strides = [1, 1, 1]} : vector<2x8x32xf32> to vector<2x8x8xf32>
    %110 = vector.broadcast %108 : vector<2x8x1xf32> to vector<2x8x8xf32>
    %111 = arith.mulf %110, %109 : vector<2x8x8xf32>
    %cst_56 = arith.constant dense<0.000000e+00> : vector<2x8xf32>
    %112 = vector.multi_reduction <add>, %111, %cst_56 [1] : vector<2x8x8xf32> to vector<2x8xf32>
    %113 = vector.extract_strided_slice %39 {offsets = [16, 0], sizes = [8, 32], strides = [1, 1]} : vector<32x32xf32> to vector<8x32xf32>
    %cst_57 = arith.constant dense<0.000000e+00> : vector<2x32xf32>
    %114 = tpu.matmul %112, %113, %cst_57 {dimension_numbers = #tpu.dot_dimension_numbers<[1], [0], [0], [1], [0, 0, 1, 1], [], []>} : vector<2x8xf32>, vector<8x32xf32>, vector<2x32xf32> -> vector<2x32xf32>
    %115 = arith.addf %90, %114 : vector<2x32xf32>
    %116 = vector.extract_strided_slice %33 {offsets = [0, 24], sizes = [2, 8], strides = [1, 1]} : vector<2x32xf32> to vector<2x8xf32>
    %117 = vector.shape_cast %116 : vector<2x8xf32> to vector<2x1x8xf32>
    %118 = vector.extract_strided_slice %35 {offsets = [0, 0, 24], sizes = [2, 8, 8], strides = [1, 1, 1]} : vector<2x8x32xf32> to vector<2x8x8xf32>
    %119 = vector.broadcast %117 : vector<2x1x8xf32> to vector<2x8x8xf32>
    %120 = arith.mulf %119, %118 : vector<2x8x8xf32>
    %cst_58 = arith.constant dense<0.000000e+00> : vector<2x8xf32>
    %121 = vector.multi_reduction <add>, %120, %cst_58 [2] : vector<2x8x8xf32> to vector<2x8xf32>
    %122 = arith.addf %121, %2 : vector<2x8xf32>
    %cst_59 = arith.constant dense<0xFF800000> : vector<2xf32>
    %123 = vector.multi_reduction <maximumf>, %122, %cst_59 [1] : vector<2x8xf32> to vector<2xf32>
    %124 = vector.shape_cast %123 : vector<2xf32> to vector<2x1xf32>
    %125 = vector.broadcast %124 : vector<2x1xf32> to vector<2x8xf32>
    %126 = arith.subf %122, %125 : vector<2x8xf32>
    %127 = math.exp %126 : vector<2x8xf32>
    %cst_60 = arith.constant dense<0.000000e+00> : vector<2xf32>
    %128 = vector.multi_reduction <add>, %127, %cst_60 [1] : vector<2x8xf32> to vector<2xf32>
    %129 = vector.shape_cast %128 : vector<2xf32> to vector<2x1xf32>
    %130 = tpu.reciprocal %129 {approx = true} : vector<2x1xf32> -> vector<2x1xf32>
    %131 = vector.broadcast %130 : vector<2x1xf32> to vector<2x8xf32>
    %132 = arith.mulf %127, %131 : vector<2x8xf32>
    %133 = vector.shape_cast %132 : vector<2x8xf32> to vector<2x8x1xf32>
    %134 = vector.extract_strided_slice %37 {offsets = [0, 0, 24], sizes = [2, 8, 8], strides = [1, 1, 1]} : vector<2x8x32xf32> to vector<2x8x8xf32>
    %135 = vector.broadcast %133 : vector<2x8x1xf32> to vector<2x8x8xf32>
    %136 = arith.mulf %135, %134 : vector<2x8x8xf32>
    %cst_61 = arith.constant dense<0.000000e+00> : vector<2x8xf32>
    %137 = vector.multi_reduction <add>, %136, %cst_61 [1] : vector<2x8x8xf32> to vector<2x8xf32>
    %138 = vector.extract_strided_slice %39 {offsets = [24, 0], sizes = [8, 32], strides = [1, 1]} : vector<32x32xf32> to vector<8x32xf32>
    %cst_62 = arith.constant dense<0.000000e+00> : vector<2x32xf32>
    %139 = tpu.matmul %137, %138, %cst_62 {dimension_numbers = #tpu.dot_dimension_numbers<[1], [0], [0], [1], [0, 0, 1, 1], [], []>} : vector<2x8xf32>, vector<8x32xf32>, vector<2x32xf32> -> vector<2x32xf32>
    %140 = arith.addf %115, %139 : vector<2x32xf32>
    %c0_63 = arith.constant 0 : index
    %c0_64 = arith.constant 0 : index
    %c0_65 = arith.constant 0 : index
    %141 = vector.load %arg11[%c0_63, %c0_64, %c0_65] : memref<1x1x32xf32, #tpu.memory_space<vmem>>, vector<1x1x32xf32>
    %142 = vector.shape_cast %141 : vector<1x1x32xf32> to vector<1x32xf32>
    %143 = vector.broadcast %142 : vector<1x32xf32> to vector<2x32xf32>
    %144 = arith.addf %140, %143 : vector<2x32xf32>
    %145 = arith.addf %24, %144 : vector<2x32xf32>
    %cst_66 = arith.constant 0.999994993 : f32
    %146 = vector.broadcast %cst_66 : f32 to vector<2x32xf32>
    %147 = arith.mulf %145, %146 : vector<2x32xf32>
    %c0_67 = arith.constant 0 : index
    %c0_68 = arith.constant 0 : index
    %c0_69 = arith.constant 0 : index
    %148 = vector.load %arg14[%c0_67, %c0_68, %c0_69] : memref<1x32x64xf32, #tpu.memory_space<vmem>>, vector<1x32x64xf32>
    %149 = vector.shape_cast %148 : vector<1x32x64xf32> to vector<32x64xf32>
    %cst_70 = arith.constant dense<0.000000e+00> : vector<2x64xf32>
    %150 = tpu.matmul %147, %149, %cst_70 {dimension_numbers = #tpu.dot_dimension_numbers<[1], [0], [0], [1], [0, 0, 1, 1], [], []>} : vector<2x32xf32>, vector<32x64xf32>, vector<2x64xf32> -> vector<2x64xf32>
    %c0_71 = arith.constant 0 : index
    %c0_72 = arith.constant 0 : index
    %c0_73 = arith.constant 0 : index
    %151 = vector.load %arg15[%c0_71, %c0_72, %c0_73] : memref<1x1x64xf32, #tpu.memory_space<vmem>>, vector<1x1x64xf32>
    %152 = vector.shape_cast %151 : vector<1x1x64xf32> to vector<1x64xf32>
    %153 = vector.broadcast %152 : vector<1x64xf32> to vector<2x64xf32>
    %154 = arith.addf %150, %153 : vector<2x64xf32>
    %cst_74 = arith.constant 0.000000e+00 : f32
    %155 = vector.broadcast %cst_74 : f32 to vector<2x64xf32>
    %156 = arith.maximumf %154, %155 : vector<2x64xf32>
    %c0_75 = arith.constant 0 : index
    %c0_76 = arith.constant 0 : index
    %c0_77 = arith.constant 0 : index
    %157 = vector.load %arg16[%c0_75, %c0_76, %c0_77] : memref<1x64x32xf32, #tpu.memory_space<vmem>>, vector<1x64x32xf32>
    %158 = vector.shape_cast %157 : vector<1x64x32xf32> to vector<64x32xf32>
    %cst_78 = arith.constant dense<0.000000e+00> : vector<2x32xf32>
    %159 = tpu.matmul %156, %158, %cst_78 {dimension_numbers = #tpu.dot_dimension_numbers<[1], [0], [0], [1], [0, 0, 1, 1], [], []>} : vector<2x64xf32>, vector<64x32xf32>, vector<2x32xf32> -> vector<2x32xf32>
    %c0_79 = arith.constant 0 : index
    %c0_80 = arith.constant 0 : index
    %c0_81 = arith.constant 0 : index
    %160 = vector.load %arg17[%c0_79, %c0_80, %c0_81] : memref<1x1x32xf32, #tpu.memory_space<vmem>>, vector<1x1x32xf32>
    %161 = vector.shape_cast %160 : vector<1x1x32xf32> to vector<1x32xf32>
    %162 = vector.broadcast %161 : vector<1x32xf32> to vector<2x32xf32>
    %163 = arith.addf %159, %162 : vector<2x32xf32>
    %164 = arith.addf %147, %163 : vector<2x32xf32>
    %cst_82 = arith.constant 0.999994993 : f32
    %165 = vector.broadcast %cst_82 : f32 to vector<2x32xf32>
    %166 = arith.mulf %164, %165 : vector<2x32xf32>
    %c0_83 = arith.constant 0 : index
    %c0_84 = arith.constant 0 : index
    %167 = vector.load %arg18[%c0_83, %c0_84] : memref<32x32xf32, #tpu.memory_space<vmem>>, vector<32x32xf32>
    %cst_85 = arith.constant dense<0.000000e+00> : vector<2x32xf32>
    %168 = tpu.matmul %166, %167, %cst_85 {dimension_numbers = #tpu.dot_dimension_numbers<[1], [0], [0], [1], [0, 0, 1, 1], [], []>} : vector<2x32xf32>, vector<32x32xf32>, vector<2x32xf32> -> vector<2x32xf32>
    %c0_86 = arith.constant 0 : index
    %c0_87 = arith.constant 0 : index
    %169 = vector.load %arg19[%c0_86, %c0_87] : memref<1x32xf32, #tpu.memory_space<vmem>>, vector<1x32xf32>
    %170 = vector.broadcast %169 : vector<1x32xf32> to vector<2x32xf32>
    %171 = arith.addf %168, %170 : vector<2x32xf32>
    %cst_88 = arith.constant 0.353553385 : f32
    %172 = vector.broadcast %cst_88 : f32 to vector<2x32xf32>
    %173 = arith.mulf %171, %172 : vector<2x32xf32>
    %c0_89 = arith.constant 0 : index
    %c0_90 = arith.constant 0 : index
    %c0_91 = arith.constant 0 : index
    %174 = vector.load %arg20[%c0_89, %c0_90, %c0_91] : memref<2x8x32xf32, #tpu.memory_space<vmem>>, vector<2x8x32xf32>
    %cst_92 = arith.constant 0.000000e+00 : f32
    %175 = vector.broadcast %cst_92 : f32 to vector<2x8xf32>
    %176 = vector.extract_strided_slice %173 {offsets = [0, 0], sizes = [2, 8], strides = [1, 1]} : vector<2x32xf32> to vector<2x8xf32>
    %177 = vector.shape_cast %176 : vector<2x8xf32> to vector<2x1x8xf32>
    %178 = vector.extract_strided_slice %174 {offsets = [0, 0, 0], sizes = [2, 8, 8], strides = [1, 1, 1]} : vector<2x8x32xf32> to vector<2x8x8xf32>
    %179 = vector.broadcast %177 : vector<2x1x8xf32> to vector<2x8x8xf32>
    %180 = arith.mulf %179, %178 : vector<2x8x8xf32>
    %cst_93 = arith.constant dense<0.000000e+00> : vector<2x8xf32>
    %181 = vector.multi_reduction <add>, %180, %cst_93 [2] : vector<2x8x8xf32> to vector<2x8xf32>
    %182 = arith.addf %181, %2 : vector<2x8xf32>
    %cst_94 = arith.constant dense<0xFF800000> : vector<2xf32>
    %183 = vector.multi_reduction <maximumf>, %182, %cst_94 [1] : vector<2x8xf32> to vector<2xf32>
    %184 = vector.shape_cast %183 : vector<2xf32> to vector<2x1xf32>
    %185 = vector.broadcast %184 : vector<2x1xf32> to vector<2x8xf32>
    %186 = arith.subf %182, %185 : vector<2x8xf32>
    %187 = math.exp %186 : vector<2x8xf32>
    %cst_95 = arith.constant dense<0.000000e+00> : vector<2xf32>
    %188 = vector.multi_reduction <add>, %187, %cst_95 [1] : vector<2x8xf32> to vector<2xf32>
    %189 = vector.shape_cast %188 : vector<2xf32> to vector<2x1xf32>
    %190 = vector.broadcast %189 : vector<2x1xf32> to vector<2x8xf32>
    %191 = arith.divf %187, %190 : vector<2x8xf32>
    %192 = arith.addf %175, %191 : vector<2x8xf32>
    %193 = vector.extract_strided_slice %173 {offsets = [0, 8], sizes = [2, 8], strides = [1, 1]} : vector<2x32xf32> to vector<2x8xf32>
    %194 = vector.shape_cast %193 : vector<2x8xf32> to vector<2x1x8xf32>
    %195 = vector.extract_strided_slice %174 {offsets = [0, 0, 8], sizes = [2, 8, 8], strides = [1, 1, 1]} : vector<2x8x32xf32> to vector<2x8x8xf32>
    %196 = vector.broadcast %194 : vector<2x1x8xf32> to vector<2x8x8xf32>
    %197 = arith.mulf %196, %195 : vector<2x8x8xf32>
    %cst_96 = arith.constant dense<0.000000e+00> : vector<2x8xf32>
    %198 = vector.multi_reduction <add>, %197, %cst_96 [2] : vector<2x8x8xf32> to vector<2x8xf32>
    %199 = arith.addf %198, %2 : vector<2x8xf32>
    %cst_97 = arith.constant dense<0xFF800000> : vector<2xf32>
    %200 = vector.multi_reduction <maximumf>, %199, %cst_97 [1] : vector<2x8xf32> to vector<2xf32>
    %201 = vector.shape_cast %200 : vector<2xf32> to vector<2x1xf32>
    %202 = vector.broadcast %201 : vector<2x1xf32> to vector<2x8xf32>
    %203 = arith.subf %199, %202 : vector<2x8xf32>
    %204 = math.exp %203 : vector<2x8xf32>
    %cst_98 = arith.constant dense<0.000000e+00> : vector<2xf32>
    %205 = vector.multi_reduction <add>, %204, %cst_98 [1] : vector<2x8xf32> to vector<2xf32>
    %206 = vector.shape_cast %205 : vector<2xf32> to vector<2x1xf32>
    %207 = vector.broadcast %206 : vector<2x1xf32> to vector<2x8xf32>
    %208 = arith.divf %204, %207 : vector<2x8xf32>
    %209 = arith.addf %192, %208 : vector<2x8xf32>
    %210 = vector.extract_strided_slice %173 {offsets = [0, 16], sizes = [2, 8], strides = [1, 1]} : vector<2x32xf32> to vector<2x8xf32>
    %211 = vector.shape_cast %210 : vector<2x8xf32> to vector<2x1x8xf32>
    %212 = vector.extract_strided_slice %174 {offsets = [0, 0, 16], sizes = [2, 8, 8], strides = [1, 1, 1]} : vector<2x8x32xf32> to vector<2x8x8xf32>
    %213 = vector.broadcast %211 : vector<2x1x8xf32> to vector<2x8x8xf32>
    %214 = arith.mulf %213, %212 : vector<2x8x8xf32>
    %cst_99 = arith.constant dense<0.000000e+00> : vector<2x8xf32>
    %215 = vector.multi_reduction <add>, %214, %cst_99 [2] : vector<2x8x8xf32> to vector<2x8xf32>
    %216 = arith.addf %215, %2 : vector<2x8xf32>
    %cst_100 = arith.constant dense<0xFF800000> : vector<2xf32>
    %217 = vector.multi_reduction <maximumf>, %216, %cst_100 [1] : vector<2x8xf32> to vector<2xf32>
    %218 = vector.shape_cast %217 : vector<2xf32> to vector<2x1xf32>
    %219 = vector.broadcast %218 : vector<2x1xf32> to vector<2x8xf32>
    %220 = arith.subf %216, %219 : vector<2x8xf32>
    %221 = math.exp %220 : vector<2x8xf32>
    %cst_101 = arith.constant dense<0.000000e+00> : vector<2xf32>
    %222 = vector.multi_reduction <add>, %221, %cst_101 [1] : vector<2x8xf32> to vector<2xf32>
    %223 = vector.shape_cast %222 : vector<2xf32> to vector<2x1xf32>
    %224 = vector.broadcast %223 : vector<2x1xf32> to vector<2x8xf32>
    %225 = arith.divf %221, %224 : vector<2x8xf32>
    %226 = arith.addf %209, %225 : vector<2x8xf32>
    %227 = vector.extract_strided_slice %173 {offsets = [0, 24], sizes = [2, 8], strides = [1, 1]} : vector<2x32xf32> to vector<2x8xf32>
    %228 = vector.shape_cast %227 : vector<2x8xf32> to vector<2x1x8xf32>
    %229 = vector.extract_strided_slice %174 {offsets = [0, 0, 24], sizes = [2, 8, 8], strides = [1, 1, 1]} : vector<2x8x32xf32> to vector<2x8x8xf32>
    %230 = vector.broadcast %228 : vector<2x1x8xf32> to vector<2x8x8xf32>
    %231 = arith.mulf %230, %229 : vector<2x8x8xf32>
    %cst_102 = arith.constant dense<0.000000e+00> : vector<2x8xf32>
    %232 = vector.multi_reduction <add>, %231, %cst_102 [2] : vector<2x8x8xf32> to vector<2x8xf32>
    %233 = arith.addf %232, %2 : vector<2x8xf32>
    %cst_103 = arith.constant dense<0xFF800000> : vector<2xf32>
    %234 = vector.multi_reduction <maximumf>, %233, %cst_103 [1] : vector<2x8xf32> to vector<2xf32>
    %235 = vector.shape_cast %234 : vector<2xf32> to vector<2x1xf32>
    %236 = vector.broadcast %235 : vector<2x1xf32> to vector<2x8xf32>
    %237 = arith.subf %233, %236 : vector<2x8xf32>
    %238 = math.exp %237 : vector<2x8xf32>
    %cst_104 = arith.constant dense<0.000000e+00> : vector<2xf32>
    %239 = vector.multi_reduction <add>, %238, %cst_104 [1] : vector<2x8xf32> to vector<2xf32>
    %240 = vector.shape_cast %239 : vector<2xf32> to vector<2x1xf32>
    %241 = vector.broadcast %240 : vector<2x1xf32> to vector<2x8xf32>
    %242 = arith.divf %238, %241 : vector<2x8xf32>
    %243 = arith.addf %226, %242 : vector<2x8xf32>
    %cst_105 = arith.constant 2.500000e-01 : f32
    %244 = vector.broadcast %cst_105 : f32 to vector<2x8xf32>
    %245 = arith.mulf %243, %244 : vector<2x8xf32>
    %c0_106 = arith.constant 0 : index
    %c0_107 = arith.constant 0 : index
    %246 = vector.load %arg21[%c0_106, %c0_107] : memref<2x8xf32, #tpu.memory_space<vmem>>, vector<2x8xf32>
    tpu.vector_store %arg21[%c0_106, %c0_107], %245 {strides = array<i32>} : memref<2x8xf32, #tpu.memory_space<vmem>>, vector<2x8xf32>,
    return
  }
}

</mosaic_0001>

<llo_original>
// kernel: attention_model_forward.11
$region0: #{attention_model_forward.11}
  #allocation0 [shape = 'u32[]', space=smem, size = 0x4, offset = 0x4, fixed_abs, tag = 'smem constant byte address 0x4 - core index']
  #allocation1 [shape = 'u32[144,128]{1,0:T(1,128)}', space=vmem, size = 0x12000, scoped, tag = 'internal scratch']
  %s0 = inlined_call_operand.vmem [shape: f32[16,32], index: 0, kind: input, shape index: {}]
  %s1 = inlined_call_operand.vmem [shape: f32[32,32], index: 1, kind: input, shape index: {}]
  %s2 = inlined_call_operand.vmem [shape: f32[1,32], index: 2, kind: input, shape index: {}]
  %s3 = inlined_call_operand.vmem [shape: f32[16,32], index: 3, kind: output, shape index: {}]
  %s4 = sld [smem:[#allocation0]]
  $region22: #{attention_model_forward.11} parent=0
    _
  %s6 = ssub.s32 1, %s4
  %s7 = scalar_select 0, %s6, %s4
  // Predicated region
  $region2: #{attention_model_forward.11} parent=0 // pred_check
    _
  $region3: #{attention_model_forward.11} parent=0 // pred_check_branch
    %9 = sbr.rel (0) target = $region5
  $region4: #{attention_model_forward.11} parent=0 // pred_region
    _
  $region5: #{attention_model_forward.11} parent=0 // pred_fallthru
    _
  // Predicated region
  $region6: #{attention_model_forward.11} parent=0 // pred_check
    _
  $region7: #{attention_model_forward.11} parent=0 // pred_check_branch
    %11 = sbr.rel (0) target = $region9
  $region8: #{attention_model_forward.11} parent=0 // pred_region
    _
  $region9: #{attention_model_forward.11} parent=0 // pred_fallthru
    _
  // Predicated region
  $region10: #{attention_model_forward.11} parent=0 // pred_check
    _
  $region11: #{attention_model_forward.11} parent=0 // pred_check_branch
    %13 = sbr.rel (0) target = $region13
  $region12: #{attention_model_forward.11} parent=0 // pred_region
    _
  $region13: #{attention_model_forward.11} parent=0 // pred_fallthru
    _
  %v14 = vld [vmem:[%s0] sm:$0xff]
  %v15 = vld [vmem:[%s0 + $0x8] sm:$0xff]
  %v16 = vld [vmem:[%s1] sm:$0xff]
  %v17 = vld [vmem:[%s1 + $0x8] sm:$0xff]
  %v18 = vld [vmem:[%s1 + $0x10] sm:$0xff]
  %v19 = vld [vmem:[%s1 + $0x18] sm:$0xff]
  %v20 = vld [vmem:[%s2] sm:$0x1]
  %v22 = vlaneseq
  %v23 = vshrl.u32 %v22, 7
  %v24 = vsub.s32 0, %v23
  %v25 = vrot.slane %v20, %v24
  %vm27 = vcmask 261120
  %v29 = vsel %vm27, %v14, 0
  %v32 = vsel %vm27, %v15, 0
  %34 = vmatprep.subr.mxu0 0.0
  %35 = vmatpush1.msra.mxu0 %v16
  %36 = vmatprep.subr.mxu0 0.0
  %37 = vmatpush1.msra.mxu0 %v17
  %38 = vmatprep.subr.mxu0 0.0
  %39 = vmatpush1.msra.mxu0 %v18
  %40 = vmatprep.subr.mxu0 0.0
  %41 = vmatpush1.msra.mxu0 %v19
  %42 = vmatprep.subr.mxu0 0.0
  %43 = vmatpush1.msra.mxu0 0.0
  %44 = vmatprep.subr.mxu0 0.0
  %45 = vmatpush1.msra.mxu0 0.0
  %46 = vmatprep.subr.mxu0 0.0
  %47 = vmatpush1.msra.mxu0 0.0
  %48 = vmatprep.subr.mxu0 0.0
  %49 = vmatpush1.msra.mxu0 0.0
  %50 = vmatprep.subr.mxu0 0.0
  %51 = vmatpush1.msra.mxu0 0.0
  %52 = vmatprep.subr.mxu0 0.0
  %53 = vmatpush1.msra.mxu0 0.0
  %54 = vmatprep.subr.mxu0 0.0
  %55 = vmatpush1.msra.mxu0 0.0
  %56 = vmatprep.subr.mxu0 0.0
  %57 = vmatpush1.msra.mxu0 0.0
  %58 = vmatprep.subr.mxu0 0.0
  %59 = vmatpush1.msra.mxu0 0.0
  %60 = vmatprep.subr.mxu0 0.0
  %61 = vmatpush1.msra.mxu0 0.0
  %62 = vmatprep.subr.mxu0 0.0
  %63 = vmatpush1.msra.mxu0 0.0
  %64 = vmatprep.subr.mxu0 0.0
  %65 = vmatpush1.msra.mxu0 0.0
  %66 = vmatprep.subr.mxu0 0.0
  %67 = vmatpush1.msra.mxu0 0.0
  %68 = vmatprep.subr.mxu0 0.0
  %69 = vmatpush1.msra.mxu0 0.0
  %70 = vmatprep.subr.mxu0 0.0
  %71 = vmatpush1.msra.mxu0 0.0
  %72 = vmatprep.subr.mxu0 0.0
  %73 = vmatpush1.msra.mxu0 0.0
  %74 = vmatprep.subr.mxu0 0.0
  %75 = vmatpush1.msra.mxu0 0.0
  %76 = vmatprep.subr.mxu0 0.0
  %77 = vmatpush1.msra.mxu0 0.0
  %78 = vmatprep.subr.mxu0 0.0
  %79 = vmatpush1.msra.mxu0 0.0
  %80 = vmatprep.subr.mxu0 0.0
  %81 = vmatpush1.msra.mxu0 0.0
  %82 = vmatprep.subr.mxu0 0.0
  %83 = vmatpush1.msra.mxu0 0.0
  %84 = vmatprep.subr.mxu0 0.0
  %85 = vmatpush1.msra.mxu0 0.0
  %86 = vmatprep.subr.mxu0 0.0
  %87 = vmatpush1.msra.mxu0 0.0
  %88 = vmatprep.subr.mxu0 0.0
  %89 = vmatpush1.msra.mxu0 0.0
  %90 = vmatprep.subr.mxu0 0.0
  %91 = vmatpush1.msra.mxu0 0.0
  %92 = vmatprep.subr.mxu0 0.0
  %93 = vmatpush1.msra.mxu0 0.0
  %94 = vmatprep.subr.mxu0 0.0
  %95 = vmatpush1.msra.mxu0 0.0
  %96 = vmatprep.subr.mxu0 0.0
  %97 = vmatpush1.msra.mxu0 0.0
  %98 = vmatprep.mubr.f32.mxu0 0.0
  %99 = vmatmul.mubr.f32.gmra.mrb[0].mxu0 %v29
  %v100 = vpop.f32.mrb[0].mxu0
  %v101 = vadd.f32 %v25, %v100
  %v102 = vpop.f32.mrb[0].mxu0
  %103 = vmatprep.mubr.f32.mxu0 0.0
  %104 = vmatmul.mubr.f32.gmra.mrb[0].mxu0 %v32
  %v105 = vpop.f32.mrb[0].mxu0
  %v106 = vadd.f32 %v25, %v105
  %v107 = vpop.f32.mrb[0].mxu0
  %108 = vdwg.mxu0
  %109 = vst.msk [vmem:[%s3] sm:$0xff] %vm27, %v101
  %110 = vst.msk [vmem:[%s3 + $0x8] sm:$0xff] %vm27, %v106
  // Predicated region
  $region14: #{attention_model_forward.11} parent=0 // pred_check
    _
  $region15: #{attention_model_forward.11} parent=0 // pred_check_branch
    %112 = sbr.rel (0) target = $region17
  $region16: #{attention_model_forward.11} parent=0 // pred_region
    _
  $region17: #{attention_model_forward.11} parent=0 // pred_fallthru
    _
  // Predicated region
  $region18: #{attention_model_forward.11} parent=0 // pred_check
    _
  $region19: #{attention_model_forward.11} parent=0 // pred_check_branch
    %114 = sbr.rel (0) target = $region21
  $region20: #{attention_model_forward.11} parent=0 // pred_region
    _
  $region21: #{attention_model_forward.11} parent=0 // pred_fallthru
    _

// kernel: attention_model_forward.7
$region0: #{attention_model_forward.7}
  #allocation0 [shape = 'u32[]', space=smem, size = 0x4, offset = 0x4, fixed_abs, tag = 'smem constant byte address 0x4 - core index']
  #allocation1 [shape = 'u32[144,128]{1,0:T(1,128)}', space=vmem, size = 0x12000, scoped, tag = 'internal scratch']
  %s0 = inlined_call_operand.vmem [shape: f32[16,8], index: 0, kind: input, shape index: {}]
  %s1 = inlined_call_operand.vmem [shape: f32[8,32], index: 1, kind: input, shape index: {}]
  %s2 = inlined_call_operand.vmem [shape: f32[1,32], index: 2, kind: input, shape index: {}]
  %s3 = inlined_call_operand.vmem [shape: f32[16,32], index: 3, kind: output, shape index: {}]
  %s4 = sld [smem:[#allocation0]]
  $region22: #{attention_model_forward.7} parent=0
    _
  %s6 = ssub.s32 1, %s4
  %s7 = scalar_select 0, %s6, %s4
  // Predicated region
  $region2: #{attention_model_forward.7} parent=0 // pred_check
    _
  $region3: #{attention_model_forward.7} parent=0 // pred_check_branch
    %9 = sbr.rel (0) target = $region5
  $region4: #{attention_model_forward.7} parent=0 // pred_region
    _
  $region5: #{attention_model_forward.7} parent=0 // pred_fallthru
    _
  // Predicated region
  $region6: #{attention_model_forward.7} parent=0 // pred_check
    _
  $region7: #{attention_model_forward.7} parent=0 // pred_check_branch
    %11 = sbr.rel (0) target = $region9
  $region8: #{attention_model_forward.7} parent=0 // pred_region
    _
  $region9: #{attention_model_forward.7} parent=0 // pred_fallthru
    _
  // Predicated region
  $region10: #{attention_model_forward.7} parent=0 // pred_check
    _
  $region11: #{attention_model_forward.7} parent=0 // pred_check_branch
    %13 = sbr.rel (0) target = $region13
  $region12: #{attention_model_forward.7} parent=0 // pred_region
    _
  $region13: #{attention_model_forward.7} parent=0 // pred_fallthru
    _
  %v14 = vld [vmem:[%s0] sm:$0xff]
  %v15 = vld [vmem:[%s0 + $0x8] sm:$0xff]
  %v16 = vld [vmem:[%s1] sm:$0xff]
  %v17 = vld [vmem:[%s2] sm:$0x1]
  %v19 = vlaneseq
  %v20 = vshrl.u32 %v19, 7
  %v21 = vsub.s32 0, %v20
  %v22 = vrot.slane %v17, %v21
  %vm24 = vcmask 64512
  %v26 = vsel %vm24, %v14, 0
  %v29 = vsel %vm24, %v15, 0
  %31 = vmatprep.subr.mxu0 0.0
  %32 = vmatpush1.msra.mxu0 %v16
  %33 = vmatprep.subr.mxu0 0.0
  %34 = vmatpush1.msra.mxu0 0.0
  %35 = vmatprep.subr.mxu0 0.0
  %36 = vmatpush1.msra.mxu0 0.0
  %37 = vmatprep.subr.mxu0 0.0
  %38 = vmatpush1.msra.mxu0 0.0
  %39 = vmatprep.subr.mxu0 0.0
  %40 = vmatpush1.msra.mxu0 0.0
  %41 = vmatprep.subr.mxu0 0.0
  %42 = vmatpush1.msra.mxu0 0.0
  %43 = vmatprep.subr.mxu0 0.0
  %44 = vmatpush1.msra.mxu0 0.0
  %45 = vmatprep.subr.mxu0 0.0
  %46 = vmatpush1.msra.mxu0 0.0
  %47 = vmatprep.subr.mxu0 0.0
  %48 = vmatpush1.msra.mxu0 0.0
  %49 = vmatprep.subr.mxu0 0.0
  %50 = vmatpush1.msra.mxu0 0.0
  %51 = vmatprep.subr.mxu0 0.0
  %52 = vmatpush1.msra.mxu0 0.0
  %53 = vmatprep.subr.mxu0 0.0
  %54 = vmatpush1.msra.mxu0 0.0
  %55 = vmatprep.subr.mxu0 0.0
  %56 = vmatpush1.msra.mxu0 0.0
  %57 = vmatprep.subr.mxu0 0.0
  %58 = vmatpush1.msra.mxu0 0.0
  %59 = vmatprep.subr.mxu0 0.0
  %60 = vmatpush1.msra.mxu0 0.0
  %61 = vmatprep.subr.mxu0 0.0
  %62 = vmatpush1.msra.mxu0 0.0
  %63 = vmatprep.subr.mxu0 0.0
  %64 = vmatpush1.msra.mxu0 0.0
  %65 = vmatprep.subr.mxu0 0.0
  %66 = vmatpush1.msra.mxu0 0.0
  %67 = vmatprep.subr.mxu0 0.0
  %68 = vmatpush1.msra.mxu0 0.0
  %69 = vmatprep.subr.mxu0 0.0
  %70 = vmatpush1.msra.mxu0 0.0
  %71 = vmatprep.subr.mxu0 0.0
  %72 = vmatpush1.msra.mxu0 0.0
  %73 = vmatprep.subr.mxu0 0.0
  %74 = vmatpush1.msra.mxu0 0.0
  %75 = vmatprep.subr.mxu0 0.0
  %76 = vmatpush1.msra.mxu0 0.0
  %77 = vmatprep.subr.mxu0 0.0
  %78 = vmatpush1.msra.mxu0 0.0
  %79 = vmatprep.subr.mxu0 0.0
  %80 = vmatpush1.msra.mxu0 0.0
  %81 = vmatprep.subr.mxu0 0.0
  %82 = vmatpush1.msra.mxu0 0.0
  %83 = vmatprep.subr.mxu0 0.0
  %84 = vmatpush1.msra.mxu0 0.0
  %85 = vmatprep.subr.mxu0 0.0
  %86 = vmatpush1.msra.mxu0 0.0
  %87 = vmatprep.subr.mxu0 0.0
  %88 = vmatpush1.msra.mxu0 0.0
  %89 = vmatprep.subr.mxu0 0.0
  %90 = vmatpush1.msra.mxu0 0.0
  %91 = vmatprep.subr.mxu0 0.0
  %92 = vmatpush1.msra.mxu0 0.0
  %93 = vmatprep.subr.mxu0 0.0
  %94 = vmatpush1.msra.mxu0 0.0
  %95 = vmatprep.mubr.f32.mxu0 0.0
  %96 = vmatmul.mubr.f32.gmra.mrb[0].mxu0 %v26
  %v97 = vpop.f32.mrb[0].mxu0
  %v98 = vadd.f32 %v22, %v97
  %v99 = vpop.f32.mrb[0].mxu0
  %100 = vmatprep.mubr.f32.mxu0 0.0
  %101 = vmatmul.mubr.f32.gmra.mrb[0].mxu0 %v29
  %v102 = vpop.f32.mrb[0].mxu0
  %v103 = vadd.f32 %v22, %v102
  %v104 = vpop.f32.mrb[0].mxu0
  %105 = vdwg.mxu0
  %vm106 = vcmask 261120
  %107 = vst.msk [vmem:[%s3] sm:$0xff] %vm106, %v98
  %108 = vst.msk [vmem:[%s3 + $0x8] sm:$0xff] %vm106, %v103
  // Predicated region
  $region14: #{attention_model_forward.7} parent=0 // pred_check
    _
  $region15: #{attention_model_forward.7} parent=0 // pred_check_branch
    %110 = sbr.rel (0) target = $region17
  $region16: #{attention_model_forward.7} parent=0 // pred_region
    _
  $region17: #{attention_model_forward.7} parent=0 // pred_fallthru
    _
  // Predicated region
  $region18: #{attention_model_forward.7} parent=0 // pred_check
    _
  $region19: #{attention_model_forward.7} parent=0 // pred_check_branch
    %112 = sbr.rel (0) target = $region21
  $region20: #{attention_model_forward.7} parent=0 // pred_region
    _
  $region21: #{attention_model_forward.7} parent=0 // pred_fallthru
    _

// kernel: attention_model_forward.13
$region0: #{attention_model_forward.13}
  #allocation0 [shape = 'u32[]', space=smem, size = 0x4, offset = 0x4, fixed_abs, tag = 'smem constant byte address 0x4 - core index']
  #allocation1 [shape = 'u32[144,128]{1,0:T(1,128)}', space=vmem, size = 0x12000, scoped, tag = 'internal scratch']
  %s0 = inlined_call_operand.vmem [shape: f32[2,64], index: 0, kind: input, shape index: {}]
  %s1 = inlined_call_operand.vmem [shape: f32[64,32], index: 1, kind: input, shape index: {}]
  %s2 = inlined_call_operand.vmem [shape: f32[1,32], index: 2, kind: input, shape index: {}]
  %s3 = inlined_call_operand.vmem [shape: f32[2,32], index: 3, kind: output, shape index: {}]
  %s4 = sld [smem:[#allocation0]]
  $region22: #{attention_model_forward.13} parent=0
    _
  %s6 = ssub.s32 1, %s4
  %s7 = scalar_select 0, %s6, %s4
  // Predicated region
  $region2: #{attention_model_forward.13} parent=0 // pred_check
    _
  $region3: #{attention_model_forward.13} parent=0 // pred_check_branch
    %9 = sbr.rel (0) target = $region5
  $region4: #{attention_model_forward.13} parent=0 // pred_region
    _
  $region5: #{attention_model_forward.13} parent=0 // pred_fallthru
    _
  // Predicated region
  $region6: #{attention_model_forward.13} parent=0 // pred_check
    _
  $region7: #{attention_model_forward.13} parent=0 // pred_check_branch
    %11 = sbr.rel (0) target = $region9
  $region8: #{attention_model_forward.13} parent=0 // pred_region
    _
  $region9: #{attention_model_forward.13} parent=0 // pred_fallthru
    _
  // Predicated region
  $region10: #{attention_model_forward.13} parent=0 // pred_check
    _
  $region11: #{attention_model_forward.13} parent=0 // pred_check_branch
    %13 = sbr.rel (0) target = $region13
  $region12: #{attention_model_forward.13} parent=0 // pred_region
    _
  $region13: #{attention_model_forward.13} parent=0 // pred_fallthru
    _
  %v14 = vld [vmem:[%s0] sm:$0x3]
  %v15 = vld [vmem:[%s1] sm:$0xff]
  %v16 = vld [vmem:[%s1 + $0x8] sm:$0xff]
  %v17 = vld [vmem:[%s1 + $0x10] sm:$0xff]
  %v18 = vld [vmem:[%s1 + $0x18] sm:$0xff]
  %v19 = vld [vmem:[%s1 + $0x20] sm:$0xff]
  %v20 = vld [vmem:[%s1 + $0x28] sm:$0xff]
  %v21 = vld [vmem:[%s1 + $0x30] sm:$0xff]
  %v22 = vld [vmem:[%s1 + $0x38] sm:$0xff]
  %v23 = vld [vmem:[%s2] sm:$0x1]
  %v25 = vlaneseq
  %v26 = vshrl.u32 %v25, 7
  %v27 = vsub.s32 0, %v26
  %v28 = vrot.slane %v23, %v27
  %vm30 = vcmask 523264
  %v32 = vsel %vm30, %v14, 0
  %34 = vmatprep.subr.mxu0 0.0
  %35 = vmatpush1.msra.mxu0 %v15
  %36 = vmatprep.subr.mxu0 0.0
  %37 = vmatpush1.msra.mxu0 %v16
  %38 = vmatprep.subr.mxu0 0.0
  %39 = vmatpush1.msra.mxu0 %v17
  %40 = vmatprep.subr.mxu0 0.0
  %41 = vmatpush1.msra.mxu0 %v18
  %42 = vmatprep.subr.mxu0 0.0
  %43 = vmatpush1.msra.mxu0 %v19
  %44 = vmatprep.subr.mxu0 0.0
  %45 = vmatpush1.msra.mxu0 %v20
  %46 = vmatprep.subr.mxu0 0.0
  %47 = vmatpush1.msra.mxu0 %v21
  %48 = vmatprep.subr.mxu0 0.0
  %49 = vmatpush1.msra.mxu0 %v22
  %50 = vmatprep.subr.mxu0 0.0
  %51 = vmatpush1.msra.mxu0 0.0
  %52 = vmatprep.subr.mxu0 0.0
  %53 = vmatpush1.msra.mxu0 0.0
  %54 = vmatprep.subr.mxu0 0.0
  %55 = vmatpush1.msra.mxu0 0.0
  %56 = vmatprep.subr.mxu0 0.0
  %57 = vmatpush1.msra.mxu0 0.0
  %58 = vmatprep.subr.mxu0 0.0
  %59 = vmatpush1.msra.mxu0 0.0
  %60 = vmatprep.subr.mxu0 0.0
  %61 = vmatpush1.msra.mxu0 0.0
  %62 = vmatprep.subr.mxu0 0.0
  %63 = vmatpush1.msra.mxu0 0.0
  %64 = vmatprep.subr.mxu0 0.0
  %65 = vmatpush1.msra.mxu0 0.0
  %66 = vmatprep.subr.mxu0 0.0
  %67 = vmatpush1.msra.mxu0 0.0
  %68 = vmatprep.subr.mxu0 0.0
  %69 = vmatpush1.msra.mxu0 0.0
  %70 = vmatprep.subr.mxu0 0.0
  %71 = vmatpush1.msra.mxu0 0.0
  %72 = vmatprep.subr.mxu0 0.0
  %73 = vmatpush1.msra.mxu0 0.0
  %74 = vmatprep.subr.mxu0 0.0
  %75 = vmatpush1.msra.mxu0 0.0
  %76 = vmatprep.subr.mxu0 0.0
  %77 = vmatpush1.msra.mxu0 0.0
  %78 = vmatprep.subr.mxu0 0.0
  %79 = vmatpush1.msra.mxu0 0.0
  %80 = vmatprep.subr.mxu0 0.0
  %81 = vmatpush1.msra.mxu0 0.0
  %82 = vmatprep.subr.mxu0 0.0
  %83 = vmatpush1.msra.mxu0 0.0
  %84 = vmatprep.subr.mxu0 0.0
  %85 = vmatpush1.msra.mxu0 0.0
  %86 = vmatprep.subr.mxu0 0.0
  %87 = vmatpush1.msra.mxu0 0.0
  %88 = vmatprep.subr.mxu0 0.0
  %89 = vmatpush1.msra.mxu0 0.0
  %90 = vmatprep.subr.mxu0 0.0
  %91 = vmatpush1.msra.mxu0 0.0
  %92 = vmatprep.subr.mxu0 0.0
  %93 = vmatpush1.msra.mxu0 0.0
  %94 = vmatprep.subr.mxu0 0.0
  %95 = vmatpush1.msra.mxu0 0.0
  %96 = vmatprep.subr.mxu0 0.0
  %97 = vmatpush1.msra.mxu0 0.0
  %98 = vmatprep.mubr.f32.mxu0 0.0
  %99 = vmatmul.mubr.f32.gmra.mrb[0].mxu0 %v32
  %v100 = vpop.f32.mrb[0].mxu0
  %v101 = vadd.f32 %v28, %v100
  %v102 = vpop.f32.mrb[0].mxu0
  %103 = vdwg.mxu0
  %vm104 = vcmask 254976
  %105 = vst.msk [vmem:[%s3] sm:$0x3] %vm104, %v101
  // Predicated region
  $region14: #{attention_model_forward.13} parent=0 // pred_check
    _
  $region15: #{attention_model_forward.13} parent=0 // pred_check_branch
    %107 = sbr.rel (0) target = $region17
  $region16: #{attention_model_forward.13} parent=0 // pred_region
    _
  $region17: #{attention_model_forward.13} parent=0 // pred_fallthru
    _
  // Predicated region
  $region18: #{attention_model_forward.13} parent=0 // pred_check
    _
  $region19: #{attention_model_forward.13} parent=0 // pred_check_branch
    %109 = sbr.rel (0) target = $region21
  $region20: #{attention_model_forward.13} parent=0 // pred_region
    _
  $region21: #{attention_model_forward.13} parent=0 // pred_fallthru
    _

// kernel: custom-call.13
$region0: #{custom-call.13}
  %s0 = inlined_call_operand.vmem [shape: s32[7,2], index: 0, kind: output, shape index: {}]

// kernel: custom-call.14
$region0: #{custom-call.14}
  %s0 = inlined_call_operand.vmem [shape: f32[7,2], index: 0, kind: output, shape index: {}]

// kernel: attention_model_forward.8
$region0: #{attention_model_forward.8}
  #allocation0 [shape = 'u32[]', space=smem, size = 0x4, offset = 0x4, fixed_abs, tag = 'smem constant byte address 0x4 - core index']
  #allocation1 [shape = 'u32[144,128]{1,0:T(1,128)}', space=vmem, size = 0x12000, scoped, tag = 'internal scratch']
  #allocation2 [shape = 'f32[16,32]{1,0:T(8,128)}', space=vmem, size = 0x2000, scoped, tag = 'scratch operand']
  %s0 = inlined_call_operand.vmem [shape: f32[16,32], index: 0, kind: input, shape index: {}]
  %s1 = inlined_call_operand.vmem [shape: f32[32,96], index: 1, kind: input, shape index: {}]
  %s2 = inlined_call_operand.vmem [shape: f32[1,96], index: 2, kind: input, shape index: {}]
  %s3 = inlined_call_operand.vmem [shape: f32[32,32], index: 3, kind: input, shape index: {}]
  %s4 = inlined_call_operand.vmem [shape: f32[1,32], index: 4, kind: input, shape index: {}]
  %s5 = inlined_call_operand.vmem [shape: f32[32,64], index: 5, kind: input, shape index: {}]
  %s6 = inlined_call_operand.vmem [shape: f32[1,64], index: 6, kind: input, shape index: {}]
  %s7 = inlined_call_operand.vmem [shape: f32[64,32], index: 7, kind: input, shape index: {}]
  %s8 = inlined_call_operand.vmem [shape: f32[1,32], index: 8, kind: input, shape index: {}]
  %s9 = inlined_call_operand.vmem [shape: f32[16,32], index: 9, kind: output, shape index: {}]
  %s10 = sld [smem:[#allocation0]]
  $region46: #{attention_model_forward.8} parent=0
    _
  %s12 = ssub.s32 1, %s10
  %s13 = scalar_select 0, %s12, %s10
  // Predicated region
  $region2: #{attention_model_forward.8} parent=0 // pred_check
    _
  $region3: #{attention_model_forward.8} parent=0 // pred_check_branch
    %15 = sbr.rel (0) target = $region5
  $region4: #{attention_model_forward.8} parent=0 // pred_region
    _
  $region5: #{attention_model_forward.8} parent=0 // pred_fallthru
    _
  // Predicated region
  $region6: #{attention_model_forward.8} parent=0 // pred_check
    _
  $region7: #{attention_model_forward.8} parent=0 // pred_check_branch
    %17 = sbr.rel (0) target = $region9
  $region8: #{attention_model_forward.8} parent=0 // pred_region
    _
  $region9: #{attention_model_forward.8} parent=0 // pred_fallthru
    _
  // Predicated region
  $region10: #{attention_model_forward.8} parent=0 // pred_check
    _
  $region11: #{attention_model_forward.8} parent=0 // pred_check_branch
    %19 = sbr.rel (0) target = $region13
  $region12: #{attention_model_forward.8} parent=0 // pred_region
    _
  $region13: #{attention_model_forward.8} parent=0 // pred_fallthru
    _
  // Predicated region
  $region14: #{attention_model_forward.8} parent=0 // pred_check
    _
  $region15: #{attention_model_forward.8} parent=0 // pred_check_branch
    %21 = sbr.rel (0) target = $region17
  $region16: #{attention_model_forward.8} parent=0 // pred_region
    _
  $region17: #{attention_model_forward.8} parent=0 // pred_fallthru
    _
  // Predicated region
  $region18: #{attention_model_forward.8} parent=0 // pred_check
    _
  $region19: #{attention_model_forward.8} parent=0 // pred_check_branch
    %23 = sbr.rel (0) target = $region21
  $region20: #{attention_model_forward.8} parent=0 // pred_region
    _
  $region21: #{attention_model_forward.8} parent=0 // pred_fallthru
    _
  // Predicated region
  $region22: #{attention_model_forward.8} parent=0 // pred_check
    _
  $region23: #{attention_model_forward.8} parent=0 // pred_check_branch
    %25 = sbr.rel (0) target = $region25
  $region24: #{attention_model_forward.8} parent=0 // pred_region
    _
  $region25: #{attention_model_forward.8} parent=0 // pred_fallthru
    _
  // Predicated region
  $region26: #{attention_model_forward.8} parent=0 // pred_check
    _
  $region27: #{attention_model_forward.8} parent=0 // pred_check_branch
    %27 = sbr.rel (0) target = $region29
  $region28: #{attention_model_forward.8} parent=0 // pred_region
    _
  $region29: #{attention_model_forward.8} parent=0 // pred_fallthru
    _
  // Predicated region
  $region30: #{attention_model_forward.8} parent=0 // pred_check
    _
  $region31: #{attention_model_forward.8} parent=0 // pred_check_branch
    %29 = sbr.rel (0) target = $region33
  $region32: #{attention_model_forward.8} parent=0 // pred_region
    _
  $region33: #{attention_model_forward.8} parent=0 // pred_fallthru
    _
  // Predicated region
  $region34: #{attention_model_forward.8} parent=0 // pred_check
    _
  $region35: #{attention_model_forward.8} parent=0 // pred_check_branch
    %31 = sbr.rel (0) target = $region37
  $region36: #{attention_model_forward.8} parent=0 // pred_region
    _
  $region37: #{attention_model_forward.8} parent=0 // pred_fallthru
    _
  %v32 = vld [vmem:[%s0] sm:$0xff]
  %v33 = vld [vmem:[%s0 + $0x8] sm:$0xff]
  %v34 = vld [vmem:[%s1] sm:$0xff]
  %v35 = vld [vmem:[%s1 + $0x8] sm:$0xff]
  %v36 = vld [vmem:[%s1 + $0x10] sm:$0xff]
  %v37 = vld [vmem:[%s1 + $0x18] sm:$0xff]
  %v38 = vld [vmem:[%s2] sm:$0x1]
  %v40 = vlaneseq
  %v41 = vshrl.u32 %v40, 7
  %v42 = vsub.s32 0, %v41
  %v43 = vrot.slane %v38, %v42
  %vm45 = vcmask 261120
  %v47 = vsel %vm45, %v32, 0
  %v50 = vsel %vm45, %v33, 0
  %52 = vmatprep.subr.mxu0 0.0
  %53 = vmatpush1.msra.mxu0 %v34
  %54 = vmatprep.subr.mxu0 0.0
  %55 = vmatpush1.msra.mxu0 %v35
  %56 = vmatprep.subr.mxu0 0.0
  %57 = vmatpush1.msra.mxu0 %v36
  %58 = vmatprep.subr.mxu0 0.0
  %59 = vmatpush1.msra.mxu0 %v37
  %60 = vmatprep.subr.mxu0 0.0
  %61 = vmatpush1.msra.mxu0 0.0
  %62 = vmatprep.subr.mxu0 0.0
  %63 = vmatpush1.msra.mxu0 0.0
  %64 = vmatprep.subr.mxu0 0.0
  %65 = vmatpush1.msra.mxu0 0.0
  %66 = vmatprep.subr.mxu0 0.0
  %67 = vmatpush1.msra.mxu0 0.0
  %68 = vmatprep.subr.mxu0 0.0
  %69 = vmatpush1.msra.mxu0 0.0
  %70 = vmatprep.subr.mxu0 0.0
  %71 = vmatpush1.msra.mxu0 0.0
  %72 = vmatprep.subr.mxu0 0.0
  %73 = vmatpush1.msra.mxu0 0.0
  %74 = vmatprep.subr.mxu0 0.0
  %75 = vmatpush1.msra.mxu0 0.0
  %76 = vmatprep.subr.mxu0 0.0
  %77 = vmatpush1.msra.mxu0 0.0
  %78 = vmatprep.subr.mxu0 0.0
  %79 = vmatpush1.msra.mxu0 0.0
  %80 = vmatprep.subr.mxu0 0.0
  %81 = vmatpush1.msra.mxu0 0.0
  %82 = vmatprep.subr.mxu0 0.0
  %83 = vmatpush1.msra.mxu0 0.0
  %84 = vmatprep.subr.mxu0 0.0
  %85 = vmatpush1.msra.mxu0 0.0
  %86 = vmatprep.subr.mxu0 0.0
  %87 = vmatpush1.msra.mxu0 0.0
  %88 = vmatprep.subr.mxu0 0.0
  %89 = vmatpush1.msra.mxu0 0.0
  %90 = vmatprep.subr.mxu0 0.0
  %91 = vmatpush1.msra.mxu0 0.0
  %92 = vmatprep.subr.mxu0 0.0
  %93 = vmatpush1.msra.mxu0 0.0
  %94 = vmatprep.subr.mxu0 0.0
  %95 = vmatpush1.msra.mxu0 0.0
  %96 = vmatprep.subr.mxu0 0.0
  %97 = vmatpush1.msra.mxu0 0.0
  %98 = vmatprep.subr.mxu0 0.0
  %99 = vmatpush1.msra.mxu0 0.0
  %100 = vmatprep.subr.mxu0 0.0
  %101 = vmatpush1.msra.mxu0 0.0
  %102 = vmatprep.subr.mxu0 0.0
  %103 = vmatpush1.msra.mxu0 0.0
  %104 = vmatprep.subr.mxu0 0.0
  %105 = vmatpush1.msra.mxu0 0.0
  %106 = vmatprep.subr.mxu0 0.0
  %107 = vmatpush1.msra.mxu0 0.0
  %108 = vmatprep.subr.mxu0 0.0
  %109 = vmatpush1.msra.mxu0 0.0
  %110 = vmatprep.subr.mxu0 0.0
  %111 = vmatpush1.msra.mxu0 0.0
  %112 = vmatprep.subr.mxu0 0.0
  %113 = vmatpush1.msra.mxu0 0.0
  %114 = vmatprep.subr.mxu0 0.0
  %115 = vmatpush1.msra.mxu0 0.0
  %116 = vmatprep.mubr.f32.mxu0 0.0
  %117 = vmatmul.mubr.f32.gmra.mrb[0].mxu0 %v47
  %v118 = vpop.f32.mrb[0].mxu0
  %v119 = vadd.f32 %v43, %v118
  %v120 = vpop.f32.mrb[0].mxu0
  %121 = vmatprep.mubr.f32.mxu0 0.0
  %122 = vmatmul.mubr.f32.gmra.mrb[0].mxu0 %v50
  %v123 = vpop.f32.mrb[0].mxu0
  %v124 = vadd.f32 %v43, %v123
  %v125 = vpop.f32.mrb[0].mxu0
  %126 = vdwg.mxu0
  %v127 = vld [vmem:[%s3] sm:$0xff]
  %v128 = vld [vmem:[%s3 + $0x8] sm:$0xff]
  %v129 = vld [vmem:[%s3 + $0x10] sm:$0xff]
  %v130 = vld [vmem:[%s3 + $0x18] sm:$0xff]
  %v131 = vmul.f32 %v119, 0.35355338
  %133 = vrot.lane.b32.xlu0 %v119, 96
  %v134 = vpop.permute.xlu0 %133
  %vm135 = vcmask 64512
  %v137 = vsel %vm135, %v131, 0
  %v139 = vsel %vm135, %v134, 0
  %141 = vmatprep.subr.mxu0 0.0
  %142 = vmatpush1.xpose.msra.mxu0 %v139
  %143 = vmatprep.subr.mxu0 0.0
  %144 = vmatpush1.xpose.msra.mxu0 0.0
  %145 = vmatprep.subr.mxu0 0.0
  %146 = vmatpush1.xpose.msra.mxu0 0.0
  %147 = vmatprep.subr.mxu0 0.0
  %148 = vmatpush1.xpose.msra.mxu0 0.0
  %149 = vmatprep.subr.mxu0 0.0
  %150 = vmatpush1.xpose.msra.mxu0 0.0
  %151 = vmatprep.subr.mxu0 0.0
  %152 = vmatpush1.xpose.msra.mxu0 0.0
  %153 = vmatprep.subr.mxu0 0.0
  %154 = vmatpush1.xpose.msra.mxu0 0.0
  %155 = vmatprep.subr.mxu0 0.0
  %156 = vmatpush1.xpose.msra.mxu0 0.0
  %157 = vmatprep.subr.mxu0 0.0
  %158 = vmatpush1.xpose.msra.mxu0 0.0
  %159 = vmatprep.subr.mxu0 0.0
  %160 = vmatpush1.xpose.msra.mxu0 0.0
  %161 = vmatprep.subr.mxu0 0.0
  %162 = vmatpush1.xpose.msra.mxu0 0.0
  %163 = vmatprep.subr.mxu0 0.0
  %164 = vmatpush1.xpose.msra.mxu0 0.0
  %165 = vmatprep.subr.mxu0 0.0
  %166 = vmatpush1.xpose.msra.mxu0 0.0
  %167 = vmatprep.subr.mxu0 0.0
  %168 = vmatpush1.xpose.msra.mxu0 0.0
  %169 = vmatprep.subr.mxu0 0.0
  %170 = vmatpush1.xpose.msra.mxu0 0.0
  %171 = vmatprep.subr.mxu0 0.0
  %172 = vmatpush1.xpose.msra.mxu0 0.0
  %173 = vmatprep.subr.mxu0 0.0
  %174 = vmatpush1.xpose.msra.mxu0 0.0
  %175 = vmatprep.subr.mxu0 0.0
  %176 = vmatpush1.xpose.msra.mxu0 0.0
  %177 = vmatprep.subr.mxu0 0.0
  %178 = vmatpush1.xpose.msra.mxu0 0.0
  %179 = vmatprep.subr.mxu0 0.0
  %180 = vmatpush1.xpose.msra.mxu0 0.0
  %181 = vmatprep.subr.mxu0 0.0
  %182 = vmatpush1.xpose.msra.mxu0 0.0
  %183 = vmatprep.subr.mxu0 0.0
  %184 = vmatpush1.xpose.msra.mxu0 0.0
  %185 = vmatprep.subr.mxu0 0.0
  %186 = vmatpush1.xpose.msra.mxu0 0.0
  %187 = vmatprep.subr.mxu0 0.0
  %188 = vmatpush1.xpose.msra.mxu0 0.0
  %189 = vmatprep.subr.mxu0 0.0
  %190 = vmatpush1.xpose.msra.mxu0 0.0
  %191 = vmatprep.subr.mxu0 0.0
  %192 = vmatpush1.xpose.msra.mxu0 0.0
  %193 = vmatprep.subr.mxu0 0.0
  %194 = vmatpush1.xpose.msra.mxu0 0.0
  %195 = vmatprep.subr.mxu0 0.0
  %196 = vmatpush1.xpose.msra.mxu0 0.0
  %197 = vmatprep.subr.mxu0 0.0
  %198 = vmatpush1.xpose.msra.mxu0 0.0
  %199 = vmatprep.subr.mxu0 0.0
  %200 = vmatpush1.xpose.msra.mxu0 0.0
  %201 = vmatprep.subr.mxu0 0.0
  %202 = vmatpush1.xpose.msra.mxu0 0.0
  %203 = vmatprep.subr.mxu0 0.0
  %204 = vmatpush1.xpose.msra.mxu0 0.0
  %205 = vmatprep.mubr.f32.mxu0 0.0
  %206 = vmatmul.mubr.f32.gmra.mrb[0].mxu0 %v137
  %v207 = vpop.f32.mrb[0].mxu0
  %v208 = vadd.f32 0.0, %v207
  %v209 = vpop.f32.mrb[0].mxu0
  %210 = vdwg.mxu0
  %v211 = vsel %vm135, %v208, -inf
  %212 = vmax.xlane.f32.xlu0 %v211
  %v213 = vpop.xlane.xlu0 %212
  %v214 = vsub.f32 %v208, %v213
  %v215 = vmul.f32 %v214, 1.442695
  %v216 = vpow.pop %v215
  %v217 = vsel %vm135, %v216, 0.0
  %218 = vadd.xlane.f32.xlu0 %v217
  %v219 = vpop.xlane.xlu0 %218
  %v220 = vrcp.pop %v219
  %v221 = vmul.f32 %v216, %v220
  %222 = vrot.lane.b32.xlu0 %v119, 64
  %v223 = vpop.permute.xlu0 %222
  %v226 = vsel %vm135, %v221, 0
  %228 = vmatprep.subr.mxu0 0.0
  %229 = vmatpush1.msra.mxu0 %v223
  %230 = vmatprep.subr.mxu0 0.0
  %231 = vmatpush1.msra.mxu0 0.0
  %232 = vmatprep.subr.mxu0 0.0
  %233 = vmatpush1.msra.mxu0 0.0
  %234 = vmatprep.subr.mxu0 0.0
  %235 = vmatpush1.msra.mxu0 0.0
  %236 = vmatprep.subr.mxu0 0.0
  %237 = vmatpush1.msra.mxu0 0.0
  %238 = vmatprep.subr.mxu0 0.0
  %239 = vmatpush1.msra.mxu0 0.0
  %240 = vmatprep.subr.mxu0 0.0
  %241 = vmatpush1.msra.mxu0 0.0
  %242 = vmatprep.subr.mxu0 0.0
  %243 = vmatpush1.msra.mxu0 0.0
  %244 = vmatprep.subr.mxu0 0.0
  %245 = vmatpush1.msra.mxu0 0.0
  %246 = vmatprep.subr.mxu0 0.0
  %247 = vmatpush1.msra.mxu0 0.0
  %248 = vmatprep.subr.mxu0 0.0
  %249 = vmatpush1.msra.mxu0 0.0
  %250 = vmatprep.subr.mxu0 0.0
  %251 = vmatpush1.msra.mxu0 0.0
  %252 = vmatprep.subr.mxu0 0.0
  %253 = vmatpush1.msra.mxu0 0.0
  %254 = vmatprep.subr.mxu0 0.0
  %255 = vmatpush1.msra.mxu0 0.0
  %256 = vmatprep.subr.mxu0 0.0
  %257 = vmatpush1.msra.mxu0 0.0
  %258 = vmatprep.subr.mxu0 0.0
  %259 = vmatpush1.msra.mxu0 0.0
  %260 = vmatprep.subr.mxu0 0.0
  %261 = vmatpush1.msra.mxu0 0.0
  %262 = vmatprep.subr.mxu0 0.0
  %263 = vmatpush1.msra.mxu0 0.0
  %264 = vmatprep.subr.mxu0 0.0
  %265 = vmatpush1.msra.mxu0 0.0
  %266 = vmatprep.subr.mxu0 0.0
  %267 = vmatpush1.msra.mxu0 0.0
  %268 = vmatprep.subr.mxu0 0.0
  %269 = vmatpush1.msra.mxu0 0.0
  %270 = vmatprep.subr.mxu0 0.0
  %271 = vmatpush1.msra.mxu0 0.0
  %272 = vmatprep.subr.mxu0 0.0
  %273 = vmatpush1.msra.mxu0 0.0
  %274 = vmatprep.subr.mxu0 0.0
  %275 = vmatpush1.msra.mxu0 0.0
  %276 = vmatprep.subr.mxu0 0.0
  %277 = vmatpush1.msra.mxu0 0.0
  %278 = vmatprep.subr.mxu0 0.0
  %279 = vmatpush1.msra.mxu0 0.0
  %280 = vmatprep.subr.mxu0 0.0
  %281 = vmatpush1.msra.mxu0 0.0
  %282 = vmatprep.subr.mxu0 0.0
  %283 = vmatpush1.msra.mxu0 0.0
  %284 = vmatprep.subr.mxu0 0.0
  %285 = vmatpush1.msra.mxu0 0.0
  %286 = vmatprep.subr.mxu0 0.0
  %287 = vmatpush1.msra.mxu0 0.0
  %288 = vmatprep.subr.mxu0 0.0
  %289 = vmatpush1.msra.mxu0 0.0
  %290 = vmatprep.subr.mxu0 0.0
  %291 = vmatpush1.msra.mxu0 0.0
  %292 = vmatprep.mubr.f32.mxu0 0.0
  %293 = vmatmul.mubr.f32.gmra.mrb[0].mxu0 %v226
  %v294 = vpop.f32.mrb[0].mxu0
  %v295 = vadd.f32 0.0, %v294
  %v296 = vpop.f32.mrb[0].mxu0
  %297 = vdwg.mxu0
  %298 = vrot.lane.b32.xlu0 %v131, 120
  %v299 = vpop.permute.xlu0 %298
  %300 = vrot.lane.b32.xlu0 %v119, 88
  %v301 = vpop.permute.xlu0 %300
  %v302 = vsel %vm135, %v299, 0
  %v304 = vsel %vm135, %v301, 0
  %306 = vmatprep.subr.mxu0 0.0
  %307 = vmatpush1.xpose.msra.mxu0 %v304
  %308 = vmatprep.subr.mxu0 0.0
  %309 = vmatpush1.xpose.msra.mxu0 0.0
  %310 = vmatprep.subr.mxu0 0.0
  %311 = vmatpush1.xpose.msra.mxu0 0.0
  %312 = vmatprep.subr.mxu0 0.0
  %313 = vmatpush1.xpose.msra.mxu0 0.0
  %314 = vmatprep.subr.mxu0 0.0
  %315 = vmatpush1.xpose.msra.mxu0 0.0
  %316 = vmatprep.subr.mxu0 0.0
  %317 = vmatpush1.xpose.msra.mxu0 0.0
  %318 = vmatprep.subr.mxu0 0.0
  %319 = vmatpush1.xpose.msra.mxu0 0.0
  %320 = vmatprep.subr.mxu0 0.0
  %321 = vmatpush1.xpose.msra.mxu0 0.0
  %322 = vmatprep.subr.mxu0 0.0
  %323 = vmatpush1.xpose.msra.mxu0 0.0
  %324 = vmatprep.subr.mxu0 0.0
  %325 = vmatpush1.xpose.msra.mxu0 0.0
  %326 = vmatprep.subr.mxu0 0.0
  %327 = vmatpush1.xpose.msra.mxu0 0.0
  %328 = vmatprep.subr.mxu0 0.0
  %329 = vmatpush1.xpose.msra.mxu0 0.0
  %330 = vmatprep.subr.mxu0 0.0
  %331 = vmatpush1.xpose.msra.mxu0 0.0
  %332 = vmatprep.subr.mxu0 0.0
  %333 = vmatpush1.xpose.msra.mxu0 0.0
  %334 = vmatprep.subr.mxu0 0.0
  %335 = vmatpush1.xpose.msra.mxu0 0.0
  %336 = vmatprep.subr.mxu0 0.0
  %337 = vmatpush1.xpose.msra.mxu0 0.0
  %338 = vmatprep.subr.mxu0 0.0
  %339 = vmatpush1.xpose.msra.mxu0 0.0
  %340 = vmatprep.subr.mxu0 0.0
  %341 = vmatpush1.xpose.msra.mxu0 0.0
  %342 = vmatprep.subr.mxu0 0.0
  %343 = vmatpush1.xpose.msra.mxu0 0.0
  %344 = vmatprep.subr.mxu0 0.0
  %345 = vmatpush1.xpose.msra.mxu0 0.0
  %346 = vmatprep.subr.mxu0 0.0
  %347 = vmatpush1.xpose.msra.mxu0 0.0
  %348 = vmatprep.subr.mxu0 0.0
  %349 = vmatpush1.xpose.msra.mxu0 0.0
  %350 = vmatprep.subr.mxu0 0.0
  %351 = vmatpush1.xpose.msra.mxu0 0.0
  %352 = vmatprep.subr.mxu0 0.0
  %353 = vmatpush1.xpose.msra.mxu0 0.0
  %354 = vmatprep.subr.mxu0 0.0
  %355 = vmatpush1.xpose.msra.mxu0 0.0
  %356 = vmatprep.subr.mxu0 0.0
  %357 = vmatpush1.xpose.msra.mxu0 0.0
  %358 = vmatprep.subr.mxu0 0.0
  %359 = vmatpush1.xpose.msra.mxu0 0.0
  %360 = vmatprep.subr.mxu0 0.0
  %361 = vmatpush1.xpose.msra.mxu0 0.0
  %362 = vmatprep.subr.mxu0 0.0
  %363 = vmatpush1.xpose.msra.mxu0 0.0
  %364 = vmatprep.subr.mxu0 0.0
  %365 = vmatpush1.xpose.msra.mxu0 0.0
  %366 = vmatprep.subr.mxu0 0.0
  %367 = vmatpush1.xpose.msra.mxu0 0.0
  %368 = vmatprep.subr.mxu0 0.0
  %369 = vmatpush1.xpose.msra.mxu0 0.0
  %370 = vmatprep.mubr.f32.mxu0 0.0
  %371 = vmatmul.mubr.f32.gmra.mrb[0].mxu0 %v302
  %v372 = vpop.f32.mrb[0].mxu0
  %v373 = vadd.f32 0.0, %v372
  %v374 = vpop.f32.mrb[0].mxu0
  %375 = vdwg.mxu0
  %v376 = vsel %vm135, %v373, -inf
  %377 = vmax.xlane.f32.xlu0 %v376
  %v378 = vpop.xlane.xlu0 %377
  %v379 = vsub.f32 %v373, %v378
  %v380 = vmul.f32 %v379, 1.442695
  %v381 = vpow.pop %v380
  %v382 = vsel %vm135, %v381, 0.0
  %383 = vadd.xlane.f32.xlu0 %v382
  %v384 = vpop.xlane.xlu0 %383
  %v385 = vrcp.pop %v384
  %v386 = vmul.f32 %v381, %v385
  %387 = vrot.lane.b32.xlu0 %v119, 56
  %v388 = vpop.permute.xlu0 %387
  %v391 = vsel %vm135, %v386, 0
  %393 = vmatprep.subr.mxu0 0.0
  %394 = vmatpush1.msra.mxu0 %v388
  %395 = vmatprep.subr.mxu0 0.0
  %396 = vmatpush1.msra.mxu0 0.0
  %397 = vmatprep.subr.mxu0 0.0
  %398 = vmatpush1.msra.mxu0 0.0
  %399 = vmatprep.subr.mxu0 0.0
  %400 = vmatpush1.msra.mxu0 0.0
  %401 = vmatprep.subr.mxu0 0.0
  %402 = vmatpush1.msra.mxu0 0.0
  %403 = vmatprep.subr.mxu0 0.0
  %404 = vmatpush1.msra.mxu0 0.0
  %405 = vmatprep.subr.mxu0 0.0
  %406 = vmatpush1.msra.mxu0 0.0
  %407 = vmatprep.subr.mxu0 0.0
  %408 = vmatpush1.msra.mxu0 0.0
  %409 = vmatprep.subr.mxu0 0.0
  %410 = vmatpush1.msra.mxu0 0.0
  %411 = vmatprep.subr.mxu0 0.0
  %412 = vmatpush1.msra.mxu0 0.0
  %413 = vmatprep.subr.mxu0 0.0
  %414 = vmatpush1.msra.mxu0 0.0
  %415 = vmatprep.subr.mxu0 0.0
  %416 = vmatpush1.msra.mxu0 0.0
  %417 = vmatprep.subr.mxu0 0.0
  %418 = vmatpush1.msra.mxu0 0.0
  %419 = vmatprep.subr.mxu0 0.0
  %420 = vmatpush1.msra.mxu0 0.0
  %421 = vmatprep.subr.mxu0 0.0
  %422 = vmatpush1.msra.mxu0 0.0
  %423 = vmatprep.subr.mxu0 0.0
  %424 = vmatpush1.msra.mxu0 0.0
  %425 = vmatprep.subr.mxu0 0.0
  %426 = vmatpush1.msra.mxu0 0.0
  %427 = vmatprep.subr.mxu0 0.0
  %428 = vmatpush1.msra.mxu0 0.0
  %429 = vmatprep.subr.mxu0 0.0
  %430 = vmatpush1.msra.mxu0 0.0
  %431 = vmatprep.subr.mxu0 0.0
  %432 = vmatpush1.msra.mxu0 0.0
  %433 = vmatprep.subr.mxu0 0.0
  %434 = vmatpush1.msra.mxu0 0.0
  %435 = vmatprep.subr.mxu0 0.0
  %436 = vmatpush1.msra.mxu0 0.0
  %437 = vmatprep.subr.mxu0 0.0
  %438 = vmatpush1.msra.mxu0 0.0
  %439 = vmatprep.subr.mxu0 0.0
  %440 = vmatpush1.msra.mxu0 0.0
  %441 = vmatprep.subr.mxu0 0.0
  %442 = vmatpush1.msra.mxu0 0.0
  %443 = vmatprep.subr.mxu0 0.0
  %444 = vmatpush1.msra.mxu0 0.0
  %445 = vmatprep.subr.mxu0 0.0
  %446 = vmatpush1.msra.mxu0 0.0
  %447 = vmatprep.subr.mxu0 0.0
  %448 = vmatpush1.msra.mxu0 0.0
  %449 = vmatprep.subr.mxu0 0.0
  %450 = vmatpush1.msra.mxu0 0.0
  %451 = vmatprep.subr.mxu0 0.0
  %452 = vmatpush1.msra.mxu0 0.0
  %453 = vmatprep.subr.mxu0 0.0
  %454 = vmatpush1.msra.mxu0 0.0
  %455 = vmatprep.subr.mxu0 0.0
  %456 = vmatpush1.msra.mxu0 0.0
  %457 = vmatprep.mubr.f32.mxu0 0.0
  %458 = vmatmul.mubr.f32.gmra.mrb[0].mxu0 %v391
  %v459 = vpop.f32.mrb[0].mxu0
  %v460 = vadd.f32 0.0, %v459
  %v461 = vpop.f32.mrb[0].mxu0
  %462 = vdwg.mxu0
  %v464 = vsel %vm135, %v460, 0
  %466 = vmatprep.subr.mxu0 0.0
  %467 = vmatpush1.msra.mxu0 %v128
  %468 = vmatprep.subr.mxu0 0.0
  %469 = vmatpush1.msra.mxu0 0.0
  %470 = vmatprep.subr.mxu0 0.0
  %471 = vmatpush1.msra.mxu0 0.0
  %472 = vmatprep.subr.mxu0 0.0
  %473 = vmatpush1.msra.mxu0 0.0
  %474 = vmatprep.subr.mxu0 0.0
  %475 = vmatpush1.msra.mxu0 0.0
  %476 = vmatprep.subr.mxu0 0.0
  %477 = vmatpush1.msra.mxu0 0.0
  %478 = vmatprep.subr.mxu0 0.0
  %479 = vmatpush1.msra.mxu0 0.0
  %480 = vmatprep.subr.mxu0 0.0
  %481 = vmatpush1.msra.mxu0 0.0
  %482 = vmatprep.subr.mxu0 0.0
  %483 = vmatpush1.msra.mxu0 0.0
  %484 = vmatprep.subr.mxu0 0.0
  %485 = vmatpush1.msra.mxu0 0.0
  %486 = vmatprep.subr.mxu0 0.0
  %487 = vmatpush1.msra.mxu0 0.0
  %488 = vmatprep.subr.mxu0 0.0
  %489 = vmatpush1.msra.mxu0 0.0
  %490 = vmatprep.subr.mxu0 0.0
  %491 = vmatpush1.msra.mxu0 0.0
  %492 = vmatprep.subr.mxu0 0.0
  %493 = vmatpush1.msra.mxu0 0.0
  %494 = vmatprep.subr.mxu0 0.0
  %495 = vmatpush1.msra.mxu0 0.0
  %496 = vmatprep.subr.mxu0 0.0
  %497 = vmatpush1.msra.mxu0 0.0
  %498 = vmatprep.subr.mxu0 0.0
  %499 = vmatpush1.msra.mxu0 0.0
  %500 = vmatprep.subr.mxu0 0.0
  %501 = vmatpush1.msra.mxu0 0.0
  %502 = vmatprep.subr.mxu0 0.0
  %503 = vmatpush1.msra.mxu0 0.0
  %504 = vmatprep.subr.mxu0 0.0
  %505 = vmatpush1.msra.mxu0 0.0
  %506 = vmatprep.subr.mxu0 0.0
  %507 = vmatpush1.msra.mxu0 0.0
  %508 = vmatprep.subr.mxu0 0.0
  %509 = vmatpush1.msra.mxu0 0.0
  %510 = vmatprep.subr.mxu0 0.0
  %511 = vmatpush1.msra.mxu0 0.0
  %512 = vmatprep.subr.mxu0 0.0
  %513 = vmatpush1.msra.mxu0 0.0
  %514 = vmatprep.subr.mxu0 0.0
  %515 = vmatpush1.msra.mxu0 0.0
  %516 = vmatprep.subr.mxu0 0.0
  %517 = vmatpush1.msra.mxu0 0.0
  %518 = vmatprep.subr.mxu0 0.0
  %519 = vmatpush1.msra.mxu0 0.0
  %520 = vmatprep.subr.mxu0 0.0
  %521 = vmatpush1.msra.mxu0 0.0
  %522 = vmatprep.subr.mxu0 0.0
  %523 = vmatpush1.msra.mxu0 0.0
  %524 = vmatprep.subr.mxu0 0.0
  %525 = vmatpush1.msra.mxu0 0.0
  %526 = vmatprep.subr.mxu0 0.0
  %527 = vmatpush1.msra.mxu0 0.0
  %528 = vmatprep.subr.mxu0 0.0
  %529 = vmatpush1.msra.mxu0 0.0
  %530 = vmatprep.mubr.f32.mxu0 0.0
  %531 = vmatmul.mubr.f32.gmra.mrb[0].mxu0 %v464
  %v532 = vpop.f32.mrb[0].mxu0
  %v533 = vadd.f32 0.0, %v532
  %v534 = vpop.f32.mrb[0].mxu0
  %535 = vdwg.mxu0
  %v537 = vsel %vm135, %v295, 0
  %539 = vmatprep.subr.mxu0 0.0
  %540 = vmatpush1.msra.mxu0 %v127
  %541 = vmatprep.subr.mxu0 0.0
  %542 = vmatpush1.msra.mxu0 0.0
  %543 = vmatprep.subr.mxu0 0.0
  %544 = vmatpush1.msra.mxu0 0.0
  %545 = vmatprep.subr.mxu0 0.0
  %546 = vmatpush1.msra.mxu0 0.0
  %547 = vmatprep.subr.mxu0 0.0
  %548 = vmatpush1.msra.mxu0 0.0
  %549 = vmatprep.subr.mxu0 0.0
  %550 = vmatpush1.msra.mxu0 0.0
  %551 = vmatprep.subr.mxu0 0.0
  %552 = vmatpush1.msra.mxu0 0.0
  %553 = vmatprep.subr.mxu0 0.0
  %554 = vmatpush1.msra.mxu0 0.0
  %555 = vmatprep.subr.mxu0 0.0
  %556 = vmatpush1.msra.mxu0 0.0
  %557 = vmatprep.subr.mxu0 0.0
  %558 = vmatpush1.msra.mxu0 0.0
  %559 = vmatprep.subr.mxu0 0.0
  %560 = vmatpush1.msra.mxu0 0.0
  %561 = vmatprep.subr.mxu0 0.0
  %562 = vmatpush1.msra.mxu0 0.0
  %563 = vmatprep.subr.mxu0 0.0
  %564 = vmatpush1.msra.mxu0 0.0
  %565 = vmatprep.subr.mxu0 0.0
  %566 = vmatpush1.msra.mxu0 0.0
  %567 = vmatprep.subr.mxu0 0.0
  %568 = vmatpush1.msra.mxu0 0.0
  %569 = vmatprep.subr.mxu0 0.0
  %570 = vmatpush1.msra.mxu0 0.0
  %571 = vmatprep.subr.mxu0 0.0
  %572 = vmatpush1.msra.mxu0 0.0
  %573 = vmatprep.subr.mxu0 0.0
  %574 = vmatpush1.msra.mxu0 0.0
  %575 = vmatprep.subr.mxu0 0.0
  %576 = vmatpush1.msra.mxu0 0.0
  %577 = vmatprep.subr.mxu0 0.0
  %578 = vmatpush1.msra.mxu0 0.0
  %579 = vmatprep.subr.mxu0 0.0
  %580 = vmatpush1.msra.mxu0 0.0
  %581 = vmatprep.subr.mxu0 0.0
  %582 = vmatpush1.msra.mxu0 0.0
  %583 = vmatprep.subr.mxu0 0.0
  %584 = vmatpush1.msra.mxu0 0.0
  %585 = vmatprep.subr.mxu0 0.0
  %586 = vmatpush1.msra.mxu0 0.0
  %587 = vmatprep.subr.mxu0 0.0
  %588 = vmatpush1.msra.mxu0 0.0
  %589 = vmatprep.subr.mxu0 0.0
  %590 = vmatpush1.msra.mxu0 0.0
  %591 = vmatprep.subr.mxu0 0.0
  %592 = vmatpush1.msra.mxu0 0.0
  %593 = vmatprep.subr.mxu0 0.0
  %594 = vmatpush1.msra.mxu0 0.0
  %595 = vmatprep.subr.mxu0 0.0
  %596 = vmatpush1.msra.mxu0 0.0
  %597 = vmatprep.subr.mxu0 0.0
  %598 = vmatpush1.msra.mxu0 0.0
  %599 = vmatprep.subr.mxu0 0.0
  %600 = vmatpush1.msra.mxu0 0.0
  %601 = vmatprep.subr.mxu0 0.0
  %602 = vmatpush1.msra.mxu0 0.0
  %603 = vmatprep.mubr.f32.mxu0 0.0
  %604 = vmatmul.mubr.f32.gmra.mrb[0].mxu0 %v537
  %v605 = vpop.f32.mrb[0].mxu0
  %v606 = vadd.f32 %v533, %v605
  %v607 = vpop.f32.mrb[0].mxu0
  %608 = vdwg.mxu0
  %609 = vrot.lane.b32.xlu0 %v131, 112
  %v610 = vpop.permute.xlu0 %609
  %611 = vrot.lane.b32.xlu0 %v119, 80
  %v612 = vpop.permute.xlu0 %611
  %v613 = vsel %vm135, %v610, 0
  %v615 = vsel %vm135, %v612, 0
  %617 = vmatprep.subr.mxu0 0.0
  %618 = vmatpush1.xpose.msra.mxu0 %v615
  %619 = vmatprep.subr.mxu0 0.0
  %620 = vmatpush1.xpose.msra.mxu0 0.0
  %621 = vmatprep.subr.mxu0 0.0
  %622 = vmatpush1.xpose.msra.mxu0 0.0
  %623 = vmatprep.subr.mxu0 0.0
  %624 = vmatpush1.xpose.msra.mxu0 0.0
  %625 = vmatprep.subr.mxu0 0.0
  %626 = vmatpush1.xpose.msra.mxu0 0.0
  %627 = vmatprep.subr.mxu0 0.0
  %628 = vmatpush1.xpose.msra.mxu0 0.0
  %629 = vmatprep.subr.mxu0 0.0
  %630 = vmatpush1.xpose.msra.mxu0 0.0
  %631 = vmatprep.subr.mxu0 0.0
  %632 = vmatpush1.xpose.msra.mxu0 0.0
  %633 = vmatprep.subr.mxu0 0.0
  %634 = vmatpush1.xpose.msra.mxu0 0.0
  %635 = vmatprep.subr.mxu0 0.0
  %636 = vmatpush1.xpose.msra.mxu0 0.0
  %637 = vmatprep.subr.mxu0 0.0
  %638 = vmatpush1.xpose.msra.mxu0 0.0
  %639 = vmatprep.subr.mxu0 0.0
  %640 = vmatpush1.xpose.msra.mxu0 0.0
  %641 = vmatprep.subr.mxu0 0.0
  %642 = vmatpush1.xpose.msra.mxu0 0.0
  %643 = vmatprep.subr.mxu0 0.0
  %644 = vmatpush1.xpose.msra.mxu0 0.0
  %645 = vmatprep.subr.mxu0 0.0
  %646 = vmatpush1.xpose.msra.mxu0 0.0
  %647 = vmatprep.subr.mxu0 0.0
  %648 = vmatpush1.xpose.msra.mxu0 0.0
  %649 = vmatprep.subr.mxu0 0.0
  %650 = vmatpush1.xpose.msra.mxu0 0.0
  %651 = vmatprep.subr.mxu0 0.0
  %652 = vmatpush1.xpose.msra.mxu0 0.0
  %653 = vmatprep.subr.mxu0 0.0
  %654 = vmatpush1.xpose.msra.mxu0 0.0
  %655 = vmatprep.subr.mxu0 0.0
  %656 = vmatpush1.xpose.msra.mxu0 0.0
  %657 = vmatprep.subr.mxu0 0.0
  %658 = vmatpush1.xpose.msra.mxu0 0.0
  %659 = vmatprep.subr.mxu0 0.0
  %660 = vmatpush1.xpose.msra.mxu0 0.0
  %661 = vmatprep.subr.mxu0 0.0
  %662 = vmatpush1.xpose.msra.mxu0 0.0
  %663 = vmatprep.subr.mxu0 0.0
  %664 = vmatpush1.xpose.msra.mxu0 0.0
  %665 = vmatprep.subr.mxu0 0.0
  %666 = vmatpush1.xpose.msra.mxu0 0.0
  %667 = vmatprep.subr.mxu0 0.0
  %668 = vmatpush1.xpose.msra.mxu0 0.0
  %669 = vmatprep.subr.mxu0 0.0
  %670 = vmatpush1.xpose.msra.mxu0 0.0
  %671 = vmatprep.subr.mxu0 0.0
  %672 = vmatpush1.xpose.msra.mxu0 0.0
  %673 = vmatprep.subr.mxu0 0.0
  %674 = vmatpush1.xpose.msra.mxu0 0.0
  %675 = vmatprep.subr.mxu0 0.0
  %676 = vmatpush1.xpose.msra.mxu0 0.0
  %677 = vmatprep.subr.mxu0 0.0
  %678 = vmatpush1.xpose.msra.mxu0 0.0
  %679 = vmatprep.subr.mxu0 0.0
  %680 = vmatpush1.xpose.msra.mxu0 0.0
  %681 = vmatprep.mubr.f32.mxu0 0.0
  %682 = vmatmul.mubr.f32.gmra.mrb[0].mxu0 %v613
  %v683 = vpop.f32.mrb[0].mxu0
  %v684 = vadd.f32 0.0, %v683
  %v685 = vpop.f32.mrb[0].mxu0
  %686 = vdwg.mxu0
  %v687 = vsel %vm135, %v684, -inf
  %688 = vmax.xlane.f32.xlu0 %v687
  %v689 = vpop.xlane.xlu0 %688
  %v690 = vsub.f32 %v684, %v689
  %v691 = vmul.f32 %v690, 1.442695
  %v692 = vpow.pop %v691
  %v693 = vsel %vm135, %v692, 0.0
  %694 = vadd.xlane.f32.xlu0 %v693
  %v695 = vpop.xlane.xlu0 %694
  %v696 = vrcp.pop %v695
  %v697 = vmul.f32 %v692, %v696
  %698 = vrot.lane.b32.xlu0 %v119, 48
  %v699 = vpop.permute.xlu0 %698
  %v702 = vsel %vm135, %v697, 0
  %704 = vmatprep.subr.mxu0 0.0
  %705 = vmatpush1.msra.mxu0 %v699
  %706 = vmatprep.subr.mxu0 0.0
  %707 = vmatpush1.msra.mxu0 0.0
  %708 = vmatprep.subr.mxu0 0.0
  %709 = vmatpush1.msra.mxu0 0.0
  %710 = vmatprep.subr.mxu0 0.0
  %711 = vmatpush1.msra.mxu0 0.0
  %712 = vmatprep.subr.mxu0 0.0
  %713 = vmatpush1.msra.mxu0 0.0
  %714 = vmatprep.subr.mxu0 0.0
  %715 = vmatpush1.msra.mxu0 0.0
  %716 = vmatprep.subr.mxu0 0.0
  %717 = vmatpush1.msra.mxu0 0.0
  %718 = vmatprep.subr.mxu0 0.0
  %719 = vmatpush1.msra.mxu0 0.0
  %720 = vmatprep.subr.mxu0 0.0
  %721 = vmatpush1.msra.mxu0 0.0
  %722 = vmatprep.subr.mxu0 0.0
  %723 = vmatpush1.msra.mxu0 0.0
  %724 = vmatprep.subr.mxu0 0.0
  %725 = vmatpush1.msra.mxu0 0.0
  %726 = vmatprep.subr.mxu0 0.0
  %727 = vmatpush1.msra.mxu0 0.0
  %728 = vmatprep.subr.mxu0 0.0
  %729 = vmatpush1.msra.mxu0 0.0
  %730 = vmatprep.subr.mxu0 0.0
  %731 = vmatpush1.msra.mxu0 0.0
  %732 = vmatprep.subr.mxu0 0.0
  %733 = vmatpush1.msra.mxu0 0.0
  %734 = vmatprep.subr.mxu0 0.0
  %735 = vmatpush1.msra.mxu0 0.0
  %736 = vmatprep.subr.mxu0 0.0
  %737 = vmatpush1.msra.mxu0 0.0
  %738 = vmatprep.subr.mxu0 0.0
  %739 = vmatpush1.msra.mxu0 0.0
  %740 = vmatprep.subr.mxu0 0.0
  %741 = vmatpush1.msra.mxu0 0.0
  %742 = vmatprep.subr.mxu0 0.0
  %743 = vmatpush1.msra.mxu0 0.0
  %744 = vmatprep.subr.mxu0 0.0
  %745 = vmatpush1.msra.mxu0 0.0
  %746 = vmatprep.subr.mxu0 0.0
  %747 = vmatpush1.msra.mxu0 0.0
  %748 = vmatprep.subr.mxu0 0.0
  %749 = vmatpush1.msra.mxu0 0.0
  %750 = vmatprep.subr.mxu0 0.0
  %751 = vmatpush1.msra.mxu0 0.0
  %752 = vmatprep.subr.mxu0 0.0
  %753 = vmatpush1.msra.mxu0 0.0
  %754 = vmatprep.subr.mxu0 0.0
  %755 = vmatpush1.msra.mxu0 0.0
  %756 = vmatprep.subr.mxu0 0.0
  %757 = vmatpush1.msra.mxu0 0.0
  %758 = vmatprep.subr.mxu0 0.0
  %759 = vmatpush1.msra.mxu0 0.0
  %760 = vmatprep.subr.mxu0 0.0
  %761 = vmatpush1.msra.mxu0 0.0
  %762 = vmatprep.subr.mxu0 0.0
  %763 = vmatpush1.msra.mxu0 0.0
  %764 = vmatprep.subr.mxu0 0.0
  %765 = vmatpush1.msra.mxu0 0.0
  %766 = vmatprep.subr.mxu0 0.0
  %767 = vmatpush1.msra.mxu0 0.0
  %768 = vmatprep.mubr.f32.mxu0 0.0
  %769 = vmatmul.mubr.f32.gmra.mrb[0].mxu0 %v702
  %v770 = vpop.f32.mrb[0].mxu0
  %v771 = vadd.f32 0.0, %v770
  %v772 = vpop.f32.mrb[0].mxu0
  %773 = vdwg.mxu0
  %v775 = vsel %vm135, %v771, 0
  %777 = vmatprep.subr.mxu0 0.0
  %778 = vmatpush1.msra.mxu0 %v129
  %779 = vmatprep.subr.mxu0 0.0
  %780 = vmatpush1.msra.mxu0 0.0
  %781 = vmatprep.subr.mxu0 0.0
  %782 = vmatpush1.msra.mxu0 0.0
  %783 = vmatprep.subr.mxu0 0.0
  %784 = vmatpush1.msra.mxu0 0.0
  %785 = vmatprep.subr.mxu0 0.0
  %786 = vmatpush1.msra.mxu0 0.0
  %787 = vmatprep.subr.mxu0 0.0
  %788 = vmatpush1.msra.mxu0 0.0
  %789 = vmatprep.subr.mxu0 0.0
  %790 = vmatpush1.msra.mxu0 0.0
  %791 = vmatprep.subr.mxu0 0.0
  %792 = vmatpush1.msra.mxu0 0.0
  %793 = vmatprep.subr.mxu0 0.0
  %794 = vmatpush1.msra.mxu0 0.0
  %795 = vmatprep.subr.mxu0 0.0
  %796 = vmatpush1.msra.mxu0 0.0
  %797 = vmatprep.subr.mxu0 0.0
  %798 = vmatpush1.msra.mxu0 0.0
  %799 = vmatprep.subr.mxu0 0.0
  %800 = vmatpush1.msra.mxu0 0.0
  %801 = vmatprep.subr.mxu0 0.0
  %802 = vmatpush1.msra.mxu0 0.0
  %803 = vmatprep.subr.mxu0 0.0
  %804 = vmatpush1.msra.mxu0 0.0
  %805 = vmatprep.subr.mxu0 0.0
  %806 = vmatpush1.msra.mxu0 0.0
  %807 = vmatprep.subr.mxu0 0.0
  %808 = vmatpush1.msra.mxu0 0.0
  %809 = vmatprep.subr.mxu0 0.0
  %810 = vmatpush1.msra.mxu0 0.0
  %811 = vmatprep.subr.mxu0 0.0
  %812 = vmatpush1.msra.mxu0 0.0
  %813 = vmatprep.subr.mxu0 0.0
  %814 = vmatpush1.msra.mxu0 0.0
  %815 = vmatprep.subr.mxu0 0.0
  %816 = vmatpush1.msra.mxu0 0.0
  %817 = vmatprep.subr.mxu0 0.0
  %818 = vmatpush1.msra.mxu0 0.0
  %819 = vmatprep.subr.mxu0 0.0
  %820 = vmatpush1.msra.mxu0 0.0
  %821 = vmatprep.subr.mxu0 0.0
  %822 = vmatpush1.msra.mxu0 0.0
  %823 = vmatprep.subr.mxu0 0.0
  %824 = vmatpush1.msra.mxu0 0.0
  %825 = vmatprep.subr.mxu0 0.0
  %826 = vmatpush1.msra.mxu0 0.0
  %827 = vmatprep.subr.mxu0 0.0
  %828 = vmatpush1.msra.mxu0 0.0
  %829 = vmatprep.subr.mxu0 0.0
  %830 = vmatpush1.msra.mxu0 0.0
  %831 = vmatprep.subr.mxu0 0.0
  %832 = vmatpush1.msra.mxu0 0.0
  %833 = vmatprep.subr.mxu0 0.0
  %834 = vmatpush1.msra.mxu0 0.0
  %835 = vmatprep.subr.mxu0 0.0
  %836 = vmatpush1.msra.mxu0 0.0
  %837 = vmatprep.subr.mxu0 0.0
  %838 = vmatpush1.msra.mxu0 0.0
  %839 = vmatprep.subr.mxu0 0.0
  %840 = vmatpush1.msra.mxu0 0.0
  %841 = vmatprep.mubr.f32.mxu0 0.0
  %842 = vmatmul.mubr.f32.gmra.mrb[0].mxu0 %v775
  %v843 = vpop.f32.mrb[0].mxu0
  %v844 = vadd.f32 0.0, %v843
  %v845 = vpop.f32.mrb[0].mxu0
  %846 = vdwg.mxu0
  %v847 = vadd.f32 %v606, %v844
  %848 = vrot.lane.b32.xlu0 %v131, 104
  %v849 = vpop.permute.xlu0 %848
  %850 = vrot.lane.b32.xlu0 %v119, 72
  %v851 = vpop.permute.xlu0 %850
  %v852 = vsel %vm135, %v849, 0
  %v854 = vsel %vm135, %v851, 0
  %856 = vmatprep.subr.mxu0 0.0
  %857 = vmatpush1.xpose.msra.mxu0 %v854
  %858 = vmatprep.subr.mxu0 0.0
  %859 = vmatpush1.xpose.msra.mxu0 0.0
  %860 = vmatprep.subr.mxu0 0.0
  %861 = vmatpush1.xpose.msra.mxu0 0.0
  %862 = vmatprep.subr.mxu0 0.0
  %863 = vmatpush1.xpose.msra.mxu0 0.0
  %864 = vmatprep.subr.mxu0 0.0
  %865 = vmatpush1.xpose.msra.mxu0 0.0
  %866 = vmatprep.subr.mxu0 0.0
  %867 = vmatpush1.xpose.msra.mxu0 0.0
  %868 = vmatprep.subr.mxu0 0.0
  %869 = vmatpush1.xpose.msra.mxu0 0.0
  %870 = vmatprep.subr.mxu0 0.0
  %871 = vmatpush1.xpose.msra.mxu0 0.0
  %872 = vmatprep.subr.mxu0 0.0
  %873 = vmatpush1.xpose.msra.mxu0 0.0
  %874 = vmatprep.subr.mxu0 0.0
  %875 = vmatpush1.xpose.msra.mxu0 0.0
  %876 = vmatprep.subr.mxu0 0.0
  %877 = vmatpush1.xpose.msra.mxu0 0.0
  %878 = vmatprep.subr.mxu0 0.0
  %879 = vmatpush1.xpose.msra.mxu0 0.0
  %880 = vmatprep.subr.mxu0 0.0
  %881 = vmatpush1.xpose.msra.mxu0 0.0
  %882 = vmatprep.subr.mxu0 0.0
  %883 = vmatpush1.xpose.msra.mxu0 0.0
  %884 = vmatprep.subr.mxu0 0.0
  %885 = vmatpush1.xpose.msra.mxu0 0.0
  %886 = vmatprep.subr.mxu0 0.0
  %887 = vmatpush1.xpose.msra.mxu0 0.0
  %888 = vmatprep.subr.mxu0 0.0
  %889 = vmatpush1.xpose.msra.mxu0 0.0
  %890 = vmatprep.subr.mxu0 0.0
  %891 = vmatpush1.xpose.msra.mxu0 0.0
  %892 = vmatprep.subr.mxu0 0.0
  %893 = vmatpush1.xpose.msra.mxu0 0.0
  %894 = vmatprep.subr.mxu0 0.0
  %895 = vmatpush1.xpose.msra.mxu0 0.0
  %896 = vmatprep.subr.mxu0 0.0
  %897 = vmatpush1.xpose.msra.mxu0 0.0
  %898 = vmatprep.subr.mxu0 0.0
  %899 = vmatpush1.xpose.msra.mxu0 0.0
  %900 = vmatprep.subr.mxu0 0.0
  %901 = vmatpush1.xpose.msra.mxu0 0.0
  %902 = vmatprep.subr.mxu0 0.0
  %903 = vmatpush1.xpose.msra.mxu0 0.0
  %904 = vmatprep.subr.mxu0 0.0
  %905 = vmatpush1.xpose.msra.mxu0 0.0
  %906 = vmatprep.subr.mxu0 0.0
  %907 = vmatpush1.xpose.msra.mxu0 0.0
  %908 = vmatprep.subr.mxu0 0.0
  %909 = vmatpush1.xpose.msra.mxu0 0.0
  %910 = vmatprep.subr.mxu0 0.0
  %911 = vmatpush1.xpose.msra.mxu0 0.0
  %912 = vmatprep.subr.mxu0 0.0
  %913 = vmatpush1.xpose.msra.mxu0 0.0
  %914 = vmatprep.subr.mxu0 0.0
  %915 = vmatpush1.xpose.msra.mxu0 0.0
  %916 = vmatprep.subr.mxu0 0.0
  %917 = vmatpush1.xpose.msra.mxu0 0.0
  %918 = vmatprep.subr.mxu0 0.0
  %919 = vmatpush1.xpose.msra.mxu0 0.0
  %920 = vmatprep.mubr.f32.mxu0 0.0
  %921 = vmatmul.mubr.f32.gmra.mrb[0].mxu0 %v852
  %v922 = vpop.f32.mrb[0].mxu0
  %v923 = vadd.f32 0.0, %v922
  %v924 = vpop.f32.mrb[0].mxu0
  %925 = vdwg.mxu0
  %v926 = vsel %vm135, %v923, -inf
  %927 = vmax.xlane.f32.xlu0 %v926
  %v928 = vpop.xlane.xlu0 %927
  %v929 = vsub.f32 %v923, %v928
  %v930 = vmul.f32 %v929, 1.442695
  %v931 = vpow.pop %v930
  %v932 = vsel %vm135, %v931, 0.0
  %933 = vadd.xlane.f32.xlu0 %v932
  %v934 = vpop.xlane.xlu0 %933
  %v935 = vrcp.pop %v934
  %v936 = vmul.f32 %v931, %v935
  %937 = vrot.lane.b32.xlu0 %v119, 40
  %v938 = vpop.permute.xlu0 %937
  %v941 = vsel %vm135, %v936, 0
  %943 = vmatprep.subr.mxu0 0.0
  %944 = vmatpush1.msra.mxu0 %v938
  %945 = vmatprep.subr.mxu0 0.0
  %946 = vmatpush1.msra.mxu0 0.0
  %947 = vmatprep.subr.mxu0 0.0
  %948 = vmatpush1.msra.mxu0 0.0
  %949 = vmatprep.subr.mxu0 0.0
  %950 = vmatpush1.msra.mxu0 0.0
  %951 = vmatprep.subr.mxu0 0.0
  %952 = vmatpush1.msra.mxu0 0.0
  %953 = vmatprep.subr.mxu0 0.0
  %954 = vmatpush1.msra.mxu0 0.0
  %955 = vmatprep.subr.mxu0 0.0
  %956 = vmatpush1.msra.mxu0 0.0
  %957 = vmatprep.subr.mxu0 0.0
  %958 = vmatpush1.msra.mxu0 0.0
  %959 = vmatprep.subr.mxu0 0.0
  %960 = vmatpush1.msra.mxu0 0.0
  %961 = vmatprep.subr.mxu0 0.0
  %962 = vmatpush1.msra.mxu0 0.0
  %963 = vmatprep.subr.mxu0 0.0
  %964 = vmatpush1.msra.mxu0 0.0
  %965 = vmatprep.subr.mxu0 0.0
  %966 = vmatpush1.msra.mxu0 0.0
  %967 = vmatprep.subr.mxu0 0.0
  %968 = vmatpush1.msra.mxu0 0.0
  %969 = vmatprep.subr.mxu0 0.0
  %970 = vmatpush1.msra.mxu0 0.0
  %971 = vmatprep.subr.mxu0 0.0
  %972 = vmatpush1.msra.mxu0 0.0
  %973 = vmatprep.subr.mxu0 0.0
  %974 = vmatpush1.msra.mxu0 0.0
  %975 = vmatprep.subr.mxu0 0.0
  %976 = vmatpush1.msra.mxu0 0.0
  %977 = vmatprep.subr.mxu0 0.0
  %978 = vmatpush1.msra.mxu0 0.0
  %979 = vmatprep.subr.mxu0 0.0
  %980 = vmatpush1.msra.mxu0 0.0
  %981 = vmatprep.subr.mxu0 0.0
  %982 = vmatpush1.msra.mxu0 0.0
  %983 = vmatprep.subr.mxu0 0.0
  %984 = vmatpush1.msra.mxu0 0.0
  %985 = vmatprep.subr.mxu0 0.0
  %986 = vmatpush1.msra.mxu0 0.0
  %987 = vmatprep.subr.mxu0 0.0
  %988 = vmatpush1.msra.mxu0 0.0
  %989 = vmatprep.subr.mxu0 0.0
  %990 = vmatpush1.msra.mxu0 0.0
  %991 = vmatprep.subr.mxu0 0.0
  %992 = vmatpush1.msra.mxu0 0.0
  %993 = vmatprep.subr.mxu0 0.0
  %994 = vmatpush1.msra.mxu0 0.0
  %995 = vmatprep.subr.mxu0 0.0
  %996 = vmatpush1.msra.mxu0 0.0
  %997 = vmatprep.subr.mxu0 0.0
  %998 = vmatpush1.msra.mxu0 0.0
  %999 = vmatprep.subr.mxu0 0.0
  %1000 = vmatpush1.msra.mxu0 0.0
  %1001 = vmatprep.subr.mxu0 0.0
  %1002 = vmatpush1.msra.mxu0 0.0
  %1003 = vmatprep.subr.mxu0 0.0
  %1004 = vmatpush1.msra.mxu0 0.0
  %1005 = vmatprep.subr.mxu0 0.0
  %1006 = vmatpush1.msra.mxu0 0.0
  %1007 = vmatprep.mubr.f32.mxu0 0.0
  %1008 = vmatmul.mubr.f32.gmra.mrb[0].mxu0 %v941
  %v1009 = vpop.f32.mrb[0].mxu0
  %v1010 = vadd.f32 0.0, %v1009
  %v1011 = vpop.f32.mrb[0].mxu0
  %1012 = vdwg.mxu0
  %v1014 = vsel %vm135, %v1010, 0
  %1016 = vmatprep.subr.mxu0 0.0
  %1017 = vmatpush1.msra.mxu0 %v130
  %1018 = vmatprep.subr.mxu0 0.0
  %1019 = vmatpush1.msra.mxu0 0.0
  %1020 = vmatprep.subr.mxu0 0.0
  %1021 = vmatpush1.msra.mxu0 0.0
  %1022 = vmatprep.subr.mxu0 0.0
  %1023 = vmatpush1.msra.mxu0 0.0
  %1024 = vmatprep.subr.mxu0 0.0
  %1025 = vmatpush1.msra.mxu0 0.0
  %1026 = vmatprep.subr.mxu0 0.0
  %1027 = vmatpush1.msra.mxu0 0.0
  %1028 = vmatprep.subr.mxu0 0.0
  %1029 = vmatpush1.msra.mxu0 0.0
  %1030 = vmatprep.subr.mxu0 0.0
  %1031 = vmatpush1.msra.mxu0 0.0
  %1032 = vmatprep.subr.mxu0 0.0
  %1033 = vmatpush1.msra.mxu0 0.0
  %1034 = vmatprep.subr.mxu0 0.0
  %1035 = vmatpush1.msra.mxu0 0.0
  %1036 = vmatprep.subr.mxu0 0.0
  %1037 = vmatpush1.msra.mxu0 0.0
  %1038 = vmatprep.subr.mxu0 0.0
  %1039 = vmatpush1.msra.mxu0 0.0
  %1040 = vmatprep.subr.mxu0 0.0
  %1041 = vmatpush1.msra.mxu0 0.0
  %1042 = vmatprep.subr.mxu0 0.0
  %1043 = vmatpush1.msra.mxu0 0.0
  %1044 = vmatprep.subr.mxu0 0.0
  %1045 = vmatpush1.msra.mxu0 0.0
  %1046 = vmatprep.subr.mxu0 0.0
  %1047 = vmatpush1.msra.mxu0 0.0
  %1048 = vmatprep.subr.mxu0 0.0
  %1049 = vmatpush1.msra.mxu0 0.0
  %1050 = vmatprep.subr.mxu0 0.0
  %1051 = vmatpush1.msra.mxu0 0.0
  %1052 = vmatprep.subr.mxu0 0.0
  %1053 = vmatpush1.msra.mxu0 0.0
  %1054 = vmatprep.subr.mxu0 0.0
  %1055 = vmatpush1.msra.mxu0 0.0
  %1056 = vmatprep.subr.mxu0 0.0
  %1057 = vmatpush1.msra.mxu0 0.0
  %1058 = vmatprep.subr.mxu0 0.0
  %1059 = vmatpush1.msra.mxu0 0.0
  %1060 = vmatprep.subr.mxu0 0.0
  %1061 = vmatpush1.msra.mxu0 0.0
  %1062 = vmatprep.subr.mxu0 0.0
  %1063 = vmatpush1.msra.mxu0 0.0
  %1064 = vmatprep.subr.mxu0 0.0
  %1065 = vmatpush1.msra.mxu0 0.0
  %1066 = vmatprep.subr.mxu0 0.0
  %1067 = vmatpush1.msra.mxu0 0.0
  %1068 = vmatprep.subr.mxu0 0.0
  %1069 = vmatpush1.msra.mxu0 0.0
  %1070 = vmatprep.subr.mxu0 0.0
  %1071 = vmatpush1.msra.mxu0 0.0
  %1072 = vmatprep.subr.mxu0 0.0
  %1073 = vmatpush1.msra.mxu0 0.0
  %1074 = vmatprep.subr.mxu0 0.0
  %1075 = vmatpush1.msra.mxu0 0.0
  %1076 = vmatprep.subr.mxu0 0.0
  %1077 = vmatpush1.msra.mxu0 0.0
  %1078 = vmatprep.subr.mxu0 0.0
  %1079 = vmatpush1.msra.mxu0 0.0
  %1080 = vmatprep.mubr.f32.mxu0 0.0
  %1081 = vmatmul.mubr.f32.gmra.mrb[0].mxu0 %v1014
  %v1082 = vpop.f32.mrb[0].mxu0
  %v1083 = vadd.f32 0.0, %v1082
  %v1084 = vpop.f32.mrb[0].mxu0
  %1085 = vdwg.mxu0
  %v1086 = vadd.f32 %v847, %v1083
  %1087 = vst.msk [vmem:[#allocation2] sm:$0xff] %vm45, %v1086
  %v1088 = vmul.f32 %v124, 0.35355338
  %1090 = vrot.lane.b32.xlu0 %v124, 96
  %v1091 = vpop.permute.xlu0 %1090
  %v1093 = vsel %vm135, %v1088, 0
  %v1095 = vsel %vm135, %v1091, 0
  %1097 = vmatprep.subr.mxu0 0.0
  %1098 = vmatpush1.xpose.msra.mxu0 %v1095
  %1099 = vmatprep.subr.mxu0 0.0
  %1100 = vmatpush1.xpose.msra.mxu0 0.0
  %1101 = vmatprep.subr.mxu0 0.0
  %1102 = vmatpush1.xpose.msra.mxu0 0.0
  %1103 = vmatprep.subr.mxu0 0.0
  %1104 = vmatpush1.xpose.msra.mxu0 0.0
  %1105 = vmatprep.subr.mxu0 0.0
  %1106 = vmatpush1.xpose.msra.mxu0 0.0
  %1107 = vmatprep.subr.mxu0 0.0
  %1108 = vmatpush1.xpose.msra.mxu0 0.0
  %1109 = vmatprep.subr.mxu0 0.0
  %1110 = vmatpush1.xpose.msra.mxu0 0.0
  %1111 = vmatprep.subr.mxu0 0.0
  %1112 = vmatpush1.xpose.msra.mxu0 0.0
  %1113 = vmatprep.subr.mxu0 0.0
  %1114 = vmatpush1.xpose.msra.mxu0 0.0
  %1115 = vmatprep.subr.mxu0 0.0
  %1116 = vmatpush1.xpose.msra.mxu0 0.0
  %1117 = vmatprep.subr.mxu0 0.0
  %1118 = vmatpush1.xpose.msra.mxu0 0.0
  %1119 = vmatprep.subr.mxu0 0.0
  %1120 = vmatpush1.xpose.msra.mxu0 0.0
  %1121 = vmatprep.subr.mxu0 0.0
  %1122 = vmatpush1.xpose.msra.mxu0 0.0
  %1123 = vmatprep.subr.mxu0 0.0
  %1124 = vmatpush1.xpose.msra.mxu0 0.0
  %1125 = vmatprep.subr.mxu0 0.0
  %1126 = vmatpush1.xpose.msra.mxu0 0.0
  %1127 = vmatprep.subr.mxu0 0.0
  %1128 = vmatpush1.xpose.msra.mxu0 0.0
  %1129 = vmatprep.subr.mxu0 0.0
  %1130 = vmatpush1.xpose.msra.mxu0 0.0
  %1131 = vmatprep.subr.mxu0 0.0
  %1132 = vmatpush1.xpose.msra.mxu0 0.0
  %1133 = vmatprep.subr.mxu0 0.0
  %1134 = vmatpush1.xpose.msra.mxu0 0.0
  %1135 = vmatprep.subr.mxu0 0.0
  %1136 = vmatpush1.xpose.msra.mxu0 0.0
  %1137 = vmatprep.subr.mxu0 0.0
  %1138 = vmatpush1.xpose.msra.mxu0 0.0
  %1139 = vmatprep.subr.mxu0 0.0
  %1140 = vmatpush1.xpose.msra.mxu0 0.0
  %1141 = vmatprep.subr.mxu0 0.0
  %1142 = vmatpush1.xpose.msra.mxu0 0.0
  %1143 = vmatprep.subr.mxu0 0.0
  %1144 = vmatpush1.xpose.msra.mxu0 0.0
  %1145 = vmatprep.subr.mxu0 0.0
  %1146 = vmatpush1.xpose.msra.mxu0 0.0
  %1147 = vmatprep.subr.mxu0 0.0
  %1148 = vmatpush1.xpose.msra.mxu0 0.0
  %1149 = vmatprep.subr.mxu0 0.0
  %1150 = vmatpush1.xpose.msra.mxu0 0.0
  %1151 = vmatprep.subr.mxu0 0.0
  %1152 = vmatpush1.xpose.msra.mxu0 0.0
  %1153 = vmatprep.subr.mxu0 0.0
  %1154 = vmatpush1.xpose.msra.mxu0 0.0
  %1155 = vmatprep.subr.mxu0 0.0
  %1156 = vmatpush1.xpose.msra.mxu0 0.0
  %1157 = vmatprep.subr.mxu0 0.0
  %1158 = vmatpush1.xpose.msra.mxu0 0.0
  %1159 = vmatprep.subr.mxu0 0.0
  %1160 = vmatpush1.xpose.msra.mxu0 0.0
  %1161 = vmatprep.mubr.f32.mxu0 0.0
  %1162 = vmatmul.mubr.f32.gmra.mrb[0].mxu0 %v1093
  %v1163 = vpop.f32.mrb[0].mxu0
  %v1164 = vadd.f32 0.0, %v1163
  %v1165 = vpop.f32.mrb[0].mxu0
  %1166 = vdwg.mxu0
  %v1167 = vsel %vm135, %v1164, -inf
  %1168 = vmax.xlane.f32.xlu0 %v1167
  %v1169 = vpop.xlane.xlu0 %1168
  %v1170 = vsub.f32 %v1164, %v1169
  %v1171 = vmul.f32 %v1170, 1.442695
  %v1172 = vpow.pop %v1171
  %v1173 = vsel %vm135, %v1172, 0.0
  %1174 = vadd.xlane.f32.xlu0 %v1173
  %v1175 = vpop.xlane.xlu0 %1174
  %v1176 = vrcp.pop %v1175
  %v1177 = vmul.f32 %v1172, %v1176
  %1178 = vrot.lane.b32.xlu0 %v124, 64
  %v1179 = vpop.permute.xlu0 %1178
  %v1182 = vsel %vm135, %v1177, 0
  %1184 = vmatprep.subr.mxu0 0.0
  %1185 = vmatpush1.msra.mxu0 %v1179
  %1186 = vmatprep.subr.mxu0 0.0
  %1187 = vmatpush1.msra.mxu0 0.0
  %1188 = vmatprep.subr.mxu0 0.0
  %1189 = vmatpush1.msra.mxu0 0.0
  %1190 = vmatprep.subr.mxu0 0.0
  %1191 = vmatpush1.msra.mxu0 0.0
  %1192 = vmatprep.subr.mxu0 0.0
  %1193 = vmatpush1.msra.mxu0 0.0
  %1194 = vmatprep.subr.mxu0 0.0
  %1195 = vmatpush1.msra.mxu0 0.0
  %1196 = vmatprep.subr.mxu0 0.0
  %1197 = vmatpush1.msra.mxu0 0.0
  %1198 = vmatprep.subr.mxu0 0.0
  %1199 = vmatpush1.msra.mxu0 0.0
  %1200 = vmatprep.subr.mxu0 0.0
  %1201 = vmatpush1.msra.mxu0 0.0
  %1202 = vmatprep.subr.mxu0 0.0
  %1203 = vmatpush1.msra.mxu0 0.0
  %1204 = vmatprep.subr.mxu0 0.0
  %1205 = vmatpush1.msra.mxu0 0.0
  %1206 = vmatprep.subr.mxu0 0.0
  %1207 = vmatpush1.msra.mxu0 0.0
  %1208 = vmatprep.subr.mxu0 0.0
  %1209 = vmatpush1.msra.mxu0 0.0
  %1210 = vmatprep.subr.mxu0 0.0
  %1211 = vmatpush1.msra.mxu0 0.0
  %1212 = vmatprep.subr.mxu0 0.0
  %1213 = vmatpush1.msra.mxu0 0.0
  %1214 = vmatprep.subr.mxu0 0.0
  %1215 = vmatpush1.msra.mxu0 0.0
  %1216 = vmatprep.subr.mxu0 0.0
  %1217 = vmatpush1.msra.mxu0 0.0
  %1218 = vmatprep.subr.mxu0 0.0
  %1219 = vmatpush1.msra.mxu0 0.0
  %1220 = vmatprep.subr.mxu0 0.0
  %1221 = vmatpush1.msra.mxu0 0.0
  %1222 = vmatprep.subr.mxu0 0.0
  %1223 = vmatpush1.msra.mxu0 0.0
  %1224 = vmatprep.subr.mxu0 0.0
  %1225 = vmatpush1.msra.mxu0 0.0
  %1226 = vmatprep.subr.mxu0 0.0
  %1227 = vmatpush1.msra.mxu0 0.0
  %1228 = vmatprep.subr.mxu0 0.0
  %1229 = vmatpush1.msra.mxu0 0.0
  %1230 = vmatprep.subr.mxu0 0.0
  %1231 = vmatpush1.msra.mxu0 0.0
  %1232 = vmatprep.subr.mxu0 0.0
  %1233 = vmatpush1.msra.mxu0 0.0
  %1234 = vmatprep.subr.mxu0 0.0
  %1235 = vmatpush1.msra.mxu0 0.0
  %1236 = vmatprep.subr.mxu0 0.0
  %1237 = vmatpush1.msra.mxu0 0.0
  %1238 = vmatprep.subr.mxu0 0.0
  %1239 = vmatpush1.msra.mxu0 0.0
  %1240 = vmatprep.subr.mxu0 0.0
  %1241 = vmatpush1.msra.mxu0 0.0
  %1242 = vmatprep.subr.mxu0 0.0
  %1243 = vmatpush1.msra.mxu0 0.0
  %1244 = vmatprep.subr.mxu0 0.0
  %1245 = vmatpush1.msra.mxu0 0.0
  %1246 = vmatprep.subr.mxu0 0.0
  %1247 = vmatpush1.msra.mxu0 0.0
  %1248 = vmatprep.mubr.f32.mxu0 0.0
  %1249 = vmatmul.mubr.f32.gmra.mrb[0].mxu0 %v1182
  %v1250 = vpop.f32.mrb[0].mxu0
  %v1251 = vadd.f32 0.0, %v1250
  %v1252 = vpop.f32.mrb[0].mxu0
  %1253 = vdwg.mxu0
  %1254 = vrot.lane.b32.xlu0 %v1088, 120
  %v1255 = vpop.permute.xlu0 %1254
  %1256 = vrot.lane.b32.xlu0 %v124, 88
  %v1257 = vpop.permute.xlu0 %1256
  %v1258 = vsel %vm135, %v1255, 0
  %v1260 = vsel %vm135, %v1257, 0
  %1262 = vmatprep.subr.mxu0 0.0
  %1263 = vmatpush1.xpose.msra.mxu0 %v1260
  %1264 = vmatprep.subr.mxu0 0.0
  %1265 = vmatpush1.xpose.msra.mxu0 0.0
  %1266 = vmatprep.subr.mxu0 0.0
  %1267 = vmatpush1.xpose.msra.mxu0 0.0
  %1268 = vmatprep.subr.mxu0 0.0
  %1269 = vmatpush1.xpose.msra.mxu0 0.0
  %1270 = vmatprep.subr.mxu0 0.0
  %1271 = vmatpush1.xpose.msra.mxu0 0.0
  %1272 = vmatprep.subr.mxu0 0.0
  %1273 = vmatpush1.xpose.msra.mxu0 0.0
  %1274 = vmatprep.subr.mxu0 0.0
  %1275 = vmatpush1.xpose.msra.mxu0 0.0
  %1276 = vmatprep.subr.mxu0 0.0
  %1277 = vmatpush1.xpose.msra.mxu0 0.0
  %1278 = vmatprep.subr.mxu0 0.0
  %1279 = vmatpush1.xpose.msra.mxu0 0.0
  %1280 = vmatprep.subr.mxu0 0.0
  %1281 = vmatpush1.xpose.msra.mxu0 0.0
  %1282 = vmatprep.subr.mxu0 0.0
  %1283 = vmatpush1.xpose.msra.mxu0 0.0
  %1284 = vmatprep.subr.mxu0 0.0
  %1285 = vmatpush1.xpose.msra.mxu0 0.0
  %1286 = vmatprep.subr.mxu0 0.0
  %1287 = vmatpush1.xpose.msra.mxu0 0.0
  %1288 = vmatprep.subr.mxu0 0.0
  %1289 = vmatpush1.xpose.msra.mxu0 0.0
  %1290 = vmatprep.subr.mxu0 0.0
  %1291 = vmatpush1.xpose.msra.mxu0 0.0
  %1292 = vmatprep.subr.mxu0 0.0
  %1293 = vmatpush1.xpose.msra.mxu0 0.0
  %1294 = vmatprep.subr.mxu0 0.0
  %1295 = vmatpush1.xpose.msra.mxu0 0.0
  %1296 = vmatprep.subr.mxu0 0.0
  %1297 = vmatpush1.xpose.msra.mxu0 0.0
  %1298 = vmatprep.subr.mxu0 0.0
  %1299 = vmatpush1.xpose.msra.mxu0 0.0
  %1300 = vmatprep.subr.mxu0 0.0
  %1301 = vmatpush1.xpose.msra.mxu0 0.0
  %1302 = vmatprep.subr.mxu0 0.0
  %1303 = vmatpush1.xpose.msra.mxu0 0.0
  %1304 = vmatprep.subr.mxu0 0.0
  %1305 = vmatpush1.xpose.msra.mxu0 0.0
  %1306 = vmatprep.subr.mxu0 0.0
  %1307 = vmatpush1.xpose.msra.mxu0 0.0
  %1308 = vmatprep.subr.mxu0 0.0
  %1309 = vmatpush1.xpose.msra.mxu0 0.0
  %1310 = vmatprep.subr.mxu0 0.0
  %1311 = vmatpush1.xpose.msra.mxu0 0.0
  %1312 = vmatprep.subr.mxu0 0.0
  %1313 = vmatpush1.xpose.msra.mxu0 0.0
  %1314 = vmatprep.subr.mxu0 0.0
  %1315 = vmatpush1.xpose.msra.mxu0 0.0
  %1316 = vmatprep.subr.mxu0 0.0
  %1317 = vmatpush1.xpose.msra.mxu0 0.0
  %1318 = vmatprep.subr.mxu0 0.0
  %1319 = vmatpush1.xpose.msra.mxu0 0.0
  %1320 = vmatprep.subr.mxu0 0.0
  %1321 = vmatpush1.xpose.msra.mxu0 0.0
  %1322 = vmatprep.subr.mxu0 0.0
  %1323 = vmatpush1.xpose.msra.mxu0 0.0
  %1324 = vmatprep.subr.mxu0 0.0
  %1325 = vmatpush1.xpose.msra.mxu0 0.0
  %1326 = vmatprep.mubr.f32.mxu0 0.0
  %1327 = vmatmul.mubr.f32.gmra.mrb[0].mxu0 %v1258
  %v1328 = vpop.f32.mrb[0].mxu0
  %v1329 = vadd.f32 0.0, %v1328
  %v1330 = vpop.f32.mrb[0].mxu0
  %1331 = vdwg.mxu0
  %v1332 = vsel %vm135, %v1329, -inf
  %1333 = vmax.xlane.f32.xlu0 %v1332
  %v1334 = vpop.xlane.xlu0 %1333
  %v1335 = vsub.f32 %v1329, %v1334
  %v1336 = vmul.f32 %v1335, 1.442695
  %v1337 = vpow.pop %v1336
  %v1338 = vsel %vm135, %v1337, 0.0
  %1339 = vadd.xlane.f32.xlu0 %v1338
  %v1340 = vpop.xlane.xlu0 %1339
  %v1341 = vrcp.pop %v1340
  %v1342 = vmul.f32 %v1337, %v1341
  %1343 = vrot.lane.b32.xlu0 %v124, 56
  %v1344 = vpop.permute.xlu0 %1343
  %v1347 = vsel %vm135, %v1342, 0
  %1349 = vmatprep.subr.mxu0 0.0
  %1350 = vmatpush1.msra.mxu0 %v1344
  %1351 = vmatprep.subr.mxu0 0.0
  %1352 = vmatpush1.msra.mxu0 0.0
  %1353 = vmatprep.subr.mxu0 0.0
  %1354 = vmatpush1.msra.mxu0 0.0
  %1355 = vmatprep.subr.mxu0 0.0
  %1356 = vmatpush1.msra.mxu0 0.0
  %1357 = vmatprep.subr.mxu0 0.0
  %1358 = vmatpush1.msra.mxu0 0.0
  %1359 = vmatprep.subr.mxu0 0.0
  %1360 = vmatpush1.msra.mxu0 0.0
  %1361 = vmatprep.subr.mxu0 0.0
  %1362 = vmatpush1.msra.mxu0 0.0
  %1363 = vmatprep.subr.mxu0 0.0
  %1364 = vmatpush1.msra.mxu0 0.0
  %1365 = vmatprep.subr.mxu0 0.0
  %1366 = vmatpush1.msra.mxu0 0.0
  %1367 = vmatprep.subr.mxu0 0.0
  %1368 = vmatpush1.msra.mxu0 0.0
  %1369 = vmatprep.subr.mxu0 0.0
  %1370 = vmatpush1.msra.mxu0 0.0
  %1371 = vmatprep.subr.mxu0 0.0
  %1372 = vmatpush1.msra.mxu0 0.0
  %1373 = vmatprep.subr.mxu0 0.0
  %1374 = vmatpush1.msra.mxu0 0.0
  %1375 = vmatprep.subr.mxu0 0.0
  %1376 = vmatpush1.msra.mxu0 0.0
  %1377 = vmatprep.subr.mxu0 0.0
  %1378 = vmatpush1.msra.mxu0 0.0
  %1379 = vmatprep.subr.mxu0 0.0
  %1380 = vmatpush1.msra.mxu0 0.0
  %1381 = vmatprep.subr.mxu0 0.0
  %1382 = vmatpush1.msra.mxu0 0.0
  %1383 = vmatprep.subr.mxu0 0.0
  %1384 = vmatpush1.msra.mxu0 0.0
  %1385 = vmatprep.subr.mxu0 0.0
  %1386 = vmatpush1.msra.mxu0 0.0
  %1387 = vmatprep.subr.mxu0 0.0
  %1388 = vmatpush1.msra.mxu0 0.0
  %1389 = vmatprep.subr.mxu0 0.0
  %1390 = vmatpush1.msra.mxu0 0.0
  %1391 = vmatprep.subr.mxu0 0.0
  %1392 = vmatpush1.msra.mxu0 0.0
  %1393 = vmatprep.subr.mxu0 0.0
  %1394 = vmatpush1.msra.mxu0 0.0
  %1395 = vmatprep.subr.mxu0 0.0
  %1396 = vmatpush1.msra.mxu0 0.0
  %1397 = vmatprep.subr.mxu0 0.0
  %1398 = vmatpush1.msra.mxu0 0.0
  %1399 = vmatprep.subr.mxu0 0.0
  %1400 = vmatpush1.msra.mxu0 0.0
  %1401 = vmatprep.subr.mxu0 0.0
  %1402 = vmatpush1.msra.mxu0 0.0
  %1403 = vmatprep.subr.mxu0 0.0
  %1404 = vmatpush1.msra.mxu0 0.0
  %1405 = vmatprep.subr.mxu0 0.0
  %1406 = vmatpush1.msra.mxu0 0.0
  %1407 = vmatprep.subr.mxu0 0.0
  %1408 = vmatpush1.msra.mxu0 0.0
  %1409 = vmatprep.subr.mxu0 0.0
  %1410 = vmatpush1.msra.mxu0 0.0
  %1411 = vmatprep.subr.mxu0 0.0
  %1412 = vmatpush1.msra.mxu0 0.0
  %1413 = vmatprep.mubr.f32.mxu0 0.0
  %1414 = vmatmul.mubr.f32.gmra.mrb[0].mxu0 %v1347
  %v1415 = vpop.f32.mrb[0].mxu0
  %v1416 = vadd.f32 0.0, %v1415
  %v1417 = vpop.f32.mrb[0].mxu0
  %1418 = vdwg.mxu0
  %v1420 = vsel %vm135, %v1416, 0
  %1422 = vmatprep.subr.mxu0 0.0
  %1423 = vmatpush1.msra.mxu0 %v128
  %1424 = vmatprep.subr.mxu0 0.0
  %1425 = vmatpush1.msra.mxu0 0.0
  %1426 = vmatprep.subr.mxu0 0.0
  %1427 = vmatpush1.msra.mxu0 0.0
  %1428 = vmatprep.subr.mxu0 0.0
  %1429 = vmatpush1.msra.mxu0 0.0
  %1430 = vmatprep.subr.mxu0 0.0
  %1431 = vmatpush1.msra.mxu0 0.0
  %1432 = vmatprep.subr.mxu0 0.0
  %1433 = vmatpush1.msra.mxu0 0.0
  %1434 = vmatprep.subr.mxu0 0.0
  %1435 = vmatpush1.msra.mxu0 0.0
  %1436 = vmatprep.subr.mxu0 0.0
  %1437 = vmatpush1.msra.mxu0 0.0
  %1438 = vmatprep.subr.mxu0 0.0
  %1439 = vmatpush1.msra.mxu0 0.0
  %1440 = vmatprep.subr.mxu0 0.0
  %1441 = vmatpush1.msra.mxu0 0.0
  %1442 = vmatprep.subr.mxu0 0.0
  %1443 = vmatpush1.msra.mxu0 0.0
  %1444 = vmatprep.subr.mxu0 0.0
  %1445 = vmatpush1.msra.mxu0 0.0
  %1446 = vmatprep.subr.mxu0 0.0
  %1447 = vmatpush1.msra.mxu0 0.0
  %1448 = vmatprep.subr.mxu0 0.0
  %1449 = vmatpush1.msra.mxu0 0.0
  %1450 = vmatprep.subr.mxu0 0.0
  %1451 = vmatpush1.msra.mxu0 0.0
  %1452 = vmatprep.subr.mxu0 0.0
  %1453 = vmatpush1.msra.mxu0 0.0
  %1454 = vmatprep.subr.mxu0 0.0
  %1455 = vmatpush1.msra.mxu0 0.0
  %1456 = vmatprep.subr.mxu0 0.0
  %1457 = vmatpush1.msra.mxu0 0.0
  %1458 = vmatprep.subr.mxu0 0.0
  %1459 = vmatpush1.msra.mxu0 0.0
  %1460 = vmatprep.subr.mxu0 0.0
  %1461 = vmatpush1.msra.mxu0 0.0
  %1462 = vmatprep.subr.mxu0 0.0
  %1463 = vmatpush1.msra.mxu0 0.0
  %1464 = vmatprep.subr.mxu0 0.0
  %1465 = vmatpush1.msra.mxu0 0.0
  %1466 = vmatprep.subr.mxu0 0.0
  %1467 = vmatpush1.msra.mxu0 0.0
  %1468 = vmatprep.subr.mxu0 0.0
  %1469 = vmatpush1.msra.mxu0 0.0
  %1470 = vmatprep.subr.mxu0 0.0
  %1471 = vmatpush1.msra.mxu0 0.0
  %1472 = vmatprep.subr.mxu0 0.0
  %1473 = vmatpush1.msra.mxu0 0.0
  %1474 = vmatprep.subr.mxu0 0.0
  %1475 = vmatpush1.msra.mxu0 0.0
  %1476 = vmatprep.subr.mxu0 0.0
  %1477 = vmatpush1.msra.mxu0 0.0
  %1478 = vmatprep.subr.mxu0 0.0
  %1479 = vmatpush1.msra.mxu0 0.0
  %1480 = vmatprep.subr.mxu0 0.0
  %1481 = vmatpush1.msra.mxu0 0.0
  %1482 = vmatprep.subr.mxu0 0.0
  %1483 = vmatpush1.msra.mxu0 0.0
  %1484 = vmatprep.subr.mxu0 0.0
  %1485 = vmatpush1.msra.mxu0 0.0
  %1486 = vmatprep.mubr.f32.mxu0 0.0
  %1487 = vmatmul.mubr.f32.gmra.mrb[0].mxu0 %v1420
  %v1488 = vpop.f32.mrb[0].mxu0
  %v1489 = vadd.f32 0.0, %v1488
  %v1490 = vpop.f32.mrb[0].mxu0
  %1491 = vdwg.mxu0
  %v1493 = vsel %vm135, %v1251, 0
  %1495 = vmatprep.subr.mxu0 0.0
  %1496 = vmatpush1.msra.mxu0 %v127
  %1497 = vmatprep.subr.mxu0 0.0
  %1498 = vmatpush1.msra.mxu0 0.0
  %1499 = vmatprep.subr.mxu0 0.0
  %1500 = vmatpush1.msra.mxu0 0.0
  %1501 = vmatprep.subr.mxu0 0.0
  %1502 = vmatpush1.msra.mxu0 0.0
  %1503 = vmatprep.subr.mxu0 0.0
  %1504 = vmatpush1.msra.mxu0 0.0
  %1505 = vmatprep.subr.mxu0 0.0
  %1506 = vmatpush1.msra.mxu0 0.0
  %1507 = vmatprep.subr.mxu0 0.0
  %1508 = vmatpush1.msra.mxu0 0.0
  %1509 = vmatprep.subr.mxu0 0.0
  %1510 = vmatpush1.msra.mxu0 0.0
  %1511 = vmatprep.subr.mxu0 0.0
  %1512 = vmatpush1.msra.mxu0 0.0
  %1513 = vmatprep.subr.mxu0 0.0
  %1514 = vmatpush1.msra.mxu0 0.0
  %1515 = vmatprep.subr.mxu0 0.0
  %1516 = vmatpush1.msra.mxu0 0.0
  %1517 = vmatprep.subr.mxu0 0.0
  %1518 = vmatpush1.msra.mxu0 0.0
  %1519 = vmatprep.subr.mxu0 0.0
  %1520 = vmatpush1.msra.mxu0 0.0
  %1521 = vmatprep.subr.mxu0 0.0
  %1522 = vmatpush1.msra.mxu0 0.0
  %1523 = vmatprep.subr.mxu0 0.0
  %1524 = vmatpush1.msra.mxu0 0.0
  %1525 = vmatprep.subr.mxu0 0.0
  %1526 = vmatpush1.msra.mxu0 0.0
  %1527 = vmatprep.subr.mxu0 0.0
  %1528 = vmatpush1.msra.mxu0 0.0
  %1529 = vmatprep.subr.mxu0 0.0
  %1530 = vmatpush1.msra.mxu0 0.0
  %1531 = vmatprep.subr.mxu0 0.0
  %1532 = vmatpush1.msra.mxu0 0.0
  %1533 = vmatprep.subr.mxu0 0.0
  %1534 = vmatpush1.msra.mxu0 0.0
  %1535 = vmatprep.subr.mxu0 0.0
  %1536 = vmatpush1.msra.mxu0 0.0
  %1537 = vmatprep.subr.mxu0 0.0
  %1538 = vmatpush1.msra.mxu0 0.0
  %1539 = vmatprep.subr.mxu0 0.0
  %1540 = vmatpush1.msra.mxu0 0.0
  %1541 = vmatprep.subr.mxu0 0.0
  %1542 = vmatpush1.msra.mxu0 0.0
  %1543 = vmatprep.subr.mxu0 0.0
  %1544 = vmatpush1.msra.mxu0 0.0
  %1545 = vmatprep.subr.mxu0 0.0
  %1546 = vmatpush1.msra.mxu0 0.0
  %1547 = vmatprep.subr.mxu0 0.0
  %1548 = vmatpush1.msra.mxu0 0.0
  %1549 = vmatprep.subr.mxu0 0.0
  %1550 = vmatpush1.msra.mxu0 0.0
  %1551 = vmatprep.subr.mxu0 0.0
  %1552 = vmatpush1.msra.mxu0 0.0
  %1553 = vmatprep.subr.mxu0 0.0
  %1554 = vmatpush1.msra.mxu0 0.0
  %1555 = vmatprep.subr.mxu0 0.0
  %1556 = vmatpush1.msra.mxu0 0.0
  %1557 = vmatprep.subr.mxu0 0.0
  %1558 = vmatpush1.msra.mxu0 0.0
  %1559 = vmatprep.mubr.f32.mxu0 0.0
  %1560 = vmatmul.mubr.f32.gmra.mrb[0].mxu0 %v1493
  %v1561 = vpop.f32.mrb[0].mxu0
  %v1562 = vadd.f32 %v1489, %v1561
  %v1563 = vpop.f32.mrb[0].mxu0
  %1564 = vdwg.mxu0
  %1565 = vrot.lane.b32.xlu0 %v1088, 112
  %v1566 = vpop.permute.xlu0 %1565
  %1567 = vrot.lane.b32.xlu0 %v124, 80
  %v1568 = vpop.permute.xlu0 %1567
  %v1569 = vsel %vm135, %v1566, 0
  %v1571 = vsel %vm135, %v1568, 0
  %1573 = vmatprep.subr.mxu0 0.0
  %1574 = vmatpush1.xpose.msra.mxu0 %v1571
  %1575 = vmatprep.subr.mxu0 0.0
  %1576 = vmatpush1.xpose.msra.mxu0 0.0
  %1577 = vmatprep.subr.mxu0 0.0
  %1578 = vmatpush1.xpose.msra.mxu0 0.0
  %1579 = vmatprep.subr.mxu0 0.0
  %1580 = vmatpush1.xpose.msra.mxu0 0.0
  %1581 = vmatprep.subr.mxu0 0.0
  %1582 = vmatpush1.xpose.msra.mxu0 0.0
  %1583 = vmatprep.subr.mxu0 0.0
  %1584 = vmatpush1.xpose.msra.mxu0 0.0
  %1585 = vmatprep.subr.mxu0 0.0
  %1586 = vmatpush1.xpose.msra.mxu0 0.0
  %1587 = vmatprep.subr.mxu0 0.0
  %1588 = vmatpush1.xpose.msra.mxu0 0.0
  %1589 = vmatprep.subr.mxu0 0.0
  %1590 = vmatpush1.xpose.msra.mxu0 0.0
  %1591 = vmatprep.subr.mxu0 0.0
  %1592 = vmatpush1.xpose.msra.mxu0 0.0
  %1593 = vmatprep.subr.mxu0 0.0
  %1594 = vmatpush1.xpose.msra.mxu0 0.0
  %1595 = vmatprep.subr.mxu0 0.0
  %1596 = vmatpush1.xpose.msra.mxu0 0.0
  %1597 = vmatprep.subr.mxu0 0.0
  %1598 = vmatpush1.xpose.msra.mxu0 0.0
  %1599 = vmatprep.subr.mxu0 0.0
  %1600 = vmatpush1.xpose.msra.mxu0 0.0
  %1601 = vmatprep.subr.mxu0 0.0
  %1602 = vmatpush1.xpose.msra.mxu0 0.0
  %1603 = vmatprep.subr.mxu0 0.0
  %1604 = vmatpush1.xpose.msra.mxu0 0.0
  %1605 = vmatprep.subr.mxu0 0.0
  %1606 = vmatpush1.xpose.msra.mxu0 0.0
  %1607 = vmatprep.subr.mxu0 0.0
  %1608 = vmatpush1.xpose.msra.mxu0 0.0
  %1609 = vmatprep.subr.mxu0 0.0
  %1610 = vmatpush1.xpose.msra.mxu0 0.0
  %1611 = vmatprep.subr.mxu0 0.0
  %1612 = vmatpush1.xpose.msra.mxu0 0.0
  %1613 = vmatprep.subr.mxu0 0.0
  %1614 = vmatpush1.xpose.msra.mxu0 0.0
  %1615 = vmatprep.subr.mxu0 0.0
  %1616 = vmatpush1.xpose.msra.mxu0 0.0
  %1617 = vmatprep.subr.mxu0 0.0
  %1618 = vmatpush1.xpose.msra.mxu0 0.0
  %1619 = vmatprep.subr.mxu0 0.0
  %1620 = vmatpush1.xpose.msra.mxu0 0.0
  %1621 = vmatprep.subr.mxu0 0.0
  %1622 = vmatpush1.xpose.msra.mxu0 0.0
  %1623 = vmatprep.subr.mxu0 0.0
  %1624 = vmatpush1.xpose.msra.mxu0 0.0
  %1625 = vmatprep.subr.mxu0 0.0
  %1626 = vmatpush1.xpose.msra.mxu0 0.0
  %1627 = vmatprep.subr.mxu0 0.0
  %1628 = vmatpush1.xpose.msra.mxu0 0.0
  %1629 = vmatprep.subr.mxu0 0.0
  %1630 = vmatpush1.xpose.msra.mxu0 0.0
  %1631 = vmatprep.subr.mxu0 0.0
  %1632 = vmatpush1.xpose.msra.mxu0 0.0
  %1633 = vmatprep.subr.mxu0 0.0
  %1634 = vmatpush1.xpose.msra.mxu0 0.0
  %1635 = vmatprep.subr.mxu0 0.0
  %1636 = vmatpush1.xpose.msra.mxu0 0.0
  %1637 = vmatprep.mubr.f32.mxu0 0.0
  %1638 = vmatmul.mubr.f32.gmra.mrb[0].mxu0 %v1569
  %v1639 = vpop.f32.mrb[0].mxu0
  %v1640 = vadd.f32 0.0, %v1639
  %v1641 = vpop.f32.mrb[0].mxu0
  %1642 = vdwg.mxu0
  %v1643 = vsel %vm135, %v1640, -inf
  %1644 = vmax.xlane.f32.xlu0 %v1643
  %v1645 = vpop.xlane.xlu0 %1644
  %v1646 = vsub.f32 %v1640, %v1645
  %v1647 = vmul.f32 %v1646, 1.442695
  %v1648 = vpow.pop %v1647
  %v1649 = vsel %vm135, %v1648, 0.0
  %1650 = vadd.xlane.f32.xlu0 %v1649
  %v1651 = vpop.xlane.xlu0 %1650
  %v1652 = vrcp.pop %v1651
  %v1653 = vmul.f32 %v1648, %v1652
  %1654 = vrot.lane.b32.xlu0 %v124, 48
  %v1655 = vpop.permute.xlu0 %1654
  %v1658 = vsel %vm135, %v1653, 0
  %1660 = vmatprep.subr.mxu0 0.0
  %1661 = vmatpush1.msra.mxu0 %v1655
  %1662 = vmatprep.subr.mxu0 0.0
  %1663 = vmatpush1.msra.mxu0 0.0
  %1664 = vmatprep.subr.mxu0 0.0
  %1665 = vmatpush1.msra.mxu0 0.0
  %1666 = vmatprep.subr.mxu0 0.0
  %1667 = vmatpush1.msra.mxu0 0.0
  %1668 = vmatprep.subr.mxu0 0.0
  %1669 = vmatpush1.msra.mxu0 0.0
  %1670 = vmatprep.subr.mxu0 0.0
  %1671 = vmatpush1.msra.mxu0 0.0
  %1672 = vmatprep.subr.mxu0 0.0
  %1673 = vmatpush1.msra.mxu0 0.0
  %1674 = vmatprep.subr.mxu0 0.0
  %1675 = vmatpush1.msra.mxu0 0.0
  %1676 = vmatprep.subr.mxu0 0.0
  %1677 = vmatpush1.msra.mxu0 0.0
  %1678 = vmatprep.subr.mxu0 0.0
  %1679 = vmatpush1.msra.mxu0 0.0
  %1680 = vmatprep.subr.mxu0 0.0
  %1681 = vmatpush1.msra.mxu0 0.0
  %1682 = vmatprep.subr.mxu0 0.0
  %1683 = vmatpush1.msra.mxu0 0.0
  %1684 = vmatprep.subr.mxu0 0.0
  %1685 = vmatpush1.msra.mxu0 0.0
  %1686 = vmatprep.subr.mxu0 0.0
  %1687 = vmatpush1.msra.mxu0 0.0
  %1688 = vmatprep.subr.mxu0 0.0
  %1689 = vmatpush1.msra.mxu0 0.0
  %1690 = vmatprep.subr.mxu0 0.0
  %1691 = vmatpush1.msra.mxu0 0.0
  %1692 = vmatprep.subr.mxu0 0.0
  %1693 = vmatpush1.msra.mxu0 0.0
  %1694 = vmatprep.subr.mxu0 0.0
  %1695 = vmatpush1.msra.mxu0 0.0
  %1696 = vmatprep.subr.mxu0 0.0
  %1697 = vmatpush1.msra.mxu0 0.0
  %1698 = vmatprep.subr.mxu0 0.0
  %1699 = vmatpush1.msra.mxu0 0.0
  %1700 = vmatprep.subr.mxu0 0.0
  %1701 = vmatpush1.msra.mxu0 0.0
  %1702 = vmatprep.subr.mxu0 0.0
  %1703 = vmatpush1.msra.mxu0 0.0
  %1704 = vmatprep.subr.mxu0 0.0
  %1705 = vmatpush1.msra.mxu0 0.0
  %1706 = vmatprep.subr.mxu0 0.0
  %1707 = vmatpush1.msra.mxu0 0.0
  %1708 = vmatprep.subr.mxu0 0.0
  %1709 = vmatpush1.msra.mxu0 0.0
  %1710 = vmatprep.subr.mxu0 0.0
  %1711 = vmatpush1.msra.mxu0 0.0
  %1712 = vmatprep.subr.mxu0 0.0
  %1713 = vmatpush1.msra.mxu0 0.0
  %1714 = vmatprep.subr.mxu0 0.0
  %1715 = vmatpush1.msra.mxu0 0.0
  %1716 = vmatprep.subr.mxu0 0.0
  %1717 = vmatpush1.msra.mxu0 0.0
  %1718 = vmatprep.subr.mxu0 0.0
  %1719 = vmatpush1.msra.mxu0 0.0
  %1720 = vmatprep.subr.mxu0 0.0
  %1721 = vmatpush1.msra.mxu0 0.0
  %1722 = vmatprep.subr.mxu0 0.0
  %1723 = vmatpush1.msra.mxu0 0.0
  %1724 = vmatprep.mubr.f32.mxu0 0.0
  %1725 = vmatmul.mubr.f32.gmra.mrb[0].mxu0 %v1658
  %v1726 = vpop.f32.mrb[0].mxu0
  %v1727 = vadd.f32 0.0, %v1726
  %v1728 = vpop.f32.mrb[0].mxu0
  %1729 = vdwg.mxu0
  %v1731 = vsel %vm135, %v1727, 0
  %1733 = vmatprep.subr.mxu0 0.0
  %1734 = vmatpush1.msra.mxu0 %v129
  %1735 = vmatprep.subr.mxu0 0.0
  %1736 = vmatpush1.msra.mxu0 0.0
  %1737 = vmatprep.subr.mxu0 0.0
  %1738 = vmatpush1.msra.mxu0 0.0
  %1739 = vmatprep.subr.mxu0 0.0
  %1740 = vmatpush1.msra.mxu0 0.0
  %1741 = vmatprep.subr.mxu0 0.0
  %1742 = vmatpush1.msra.mxu0 0.0
  %1743 = vmatprep.subr.mxu0 0.0
  %1744 = vmatpush1.msra.mxu0 0.0
  %1745 = vmatprep.subr.mxu0 0.0
  %1746 = vmatpush1.msra.mxu0 0.0
  %1747 = vmatprep.subr.mxu0 0.0
  %1748 = vmatpush1.msra.mxu0 0.0
  %1749 = vmatprep.subr.mxu0 0.0
  %1750 = vmatpush1.msra.mxu0 0.0
  %1751 = vmatprep.subr.mxu0 0.0
  %1752 = vmatpush1.msra.mxu0 0.0
  %1753 = vmatprep.subr.mxu0 0.0
  %1754 = vmatpush1.msra.mxu0 0.0
  %1755 = vmatprep.subr.mxu0 0.0
  %1756 = vmatpush1.msra.mxu0 0.0
  %1757 = vmatprep.subr.mxu0 0.0
  %1758 = vmatpush1.msra.mxu0 0.0
  %1759 = vmatprep.subr.mxu0 0.0
  %1760 = vmatpush1.msra.mxu0 0.0
  %1761 = vmatprep.subr.mxu0 0.0
  %1762 = vmatpush1.msra.mxu0 0.0
  %1763 = vmatprep.subr.mxu0 0.0
  %1764 = vmatpush1.msra.mxu0 0.0
  %1765 = vmatprep.subr.mxu0 0.0
  %1766 = vmatpush1.msra.mxu0 0.0
  %1767 = vmatprep.subr.mxu0 0.0
  %1768 = vmatpush1.msra.mxu0 0.0
  %1769 = vmatprep.subr.mxu0 0.0
  %1770 = vmatpush1.msra.mxu0 0.0
  %1771 = vmatprep.subr.mxu0 0.0
  %1772 = vmatpush1.msra.mxu0 0.0
  %1773 = vmatprep.subr.mxu0 0.0
  %1774 = vmatpush1.msra.mxu0 0.0
  %1775 = vmatprep.subr.mxu0 0.0
  %1776 = vmatpush1.msra.mxu0 0.0
  %1777 = vmatprep.subr.mxu0 0.0
  %1778 = vmatpush1.msra.mxu0 0.0
  %1779 = vmatprep.subr.mxu0 0.0
  %1780 = vmatpush1.msra.mxu0 0.0
  %1781 = vmatprep.subr.mxu0 0.0
  %1782 = vmatpush1.msra.mxu0 0.0
  %1783 = vmatprep.subr.mxu0 0.0
  %1784 = vmatpush1.msra.mxu0 0.0
  %1785 = vmatprep.subr.mxu0 0.0
  %1786 = vmatpush1.msra.mxu0 0.0
  %1787 = vmatprep.subr.mxu0 0.0
  %1788 = vmatpush1.msra.mxu0 0.0
  %1789 = vmatprep.subr.mxu0 0.0
  %1790 = vmatpush1.msra.mxu0 0.0
  %1791 = vmatprep.subr.mxu0 0.0
  %1792 = vmatpush1.msra.mxu0 0.0
  %1793 = vmatprep.subr.mxu0 0.0
  %1794 = vmatpush1.msra.mxu0 0.0
  %1795 = vmatprep.subr.mxu0 0.0
  %1796 = vmatpush1.msra.mxu0 0.0
  %1797 = vmatprep.mubr.f32.mxu0 0.0
  %1798 = vmatmul.mubr.f32.gmra.mrb[0].mxu0 %v1731
  %v1799 = vpop.f32.mrb[0].mxu0
  %v1800 = vadd.f32 0.0, %v1799
  %v1801 = vpop.f32.mrb[0].mxu0
  %1802 = vdwg.mxu0
  %v1803 = vadd.f32 %v1562, %v1800
  %1804 = vrot.lane.b32.xlu0 %v1088, 104
  %v1805 = vpop.permute.xlu0 %1804
  %1806 = vrot.lane.b32.xlu0 %v124, 72
  %v1807 = vpop.permute.xlu0 %1806
  %v1808 = vsel %vm135, %v1805, 0
  %v1810 = vsel %vm135, %v1807, 0
  %1812 = vmatprep.subr.mxu0 0.0
  %1813 = vmatpush1.xpose.msra.mxu0 %v1810
  %1814 = vmatprep.subr.mxu0 0.0
  %1815 = vmatpush1.xpose.msra.mxu0 0.0
  %1816 = vmatprep.subr.mxu0 0.0
  %1817 = vmatpush1.xpose.msra.mxu0 0.0
  %1818 = vmatprep.subr.mxu0 0.0
  %1819 = vmatpush1.xpose.msra.mxu0 0.0
  %1820 = vmatprep.subr.mxu0 0.0
  %1821 = vmatpush1.xpose.msra.mxu0 0.0
  %1822 = vmatprep.subr.mxu0 0.0
  %1823 = vmatpush1.xpose.msra.mxu0 0.0
  %1824 = vmatprep.subr.mxu0 0.0
  %1825 = vmatpush1.xpose.msra.mxu0 0.0
  %1826 = vmatprep.subr.mxu0 0.0
  %1827 = vmatpush1.xpose.msra.mxu0 0.0
  %1828 = vmatprep.subr.mxu0 0.0
  %1829 = vmatpush1.xpose.msra.mxu0 0.0
  %1830 = vmatprep.subr.mxu0 0.0
  %1831 = vmatpush1.xpose.msra.mxu0 0.0
  %1832 = vmatprep.subr.mxu0 0.0
  %1833 = vmatpush1.xpose.msra.mxu0 0.0
  %1834 = vmatprep.subr.mxu0 0.0
  %1835 = vmatpush1.xpose.msra.mxu0 0.0
  %1836 = vmatprep.subr.mxu0 0.0
  %1837 = vmatpush1.xpose.msra.mxu0 0.0
  %1838 = vmatprep.subr.mxu0 0.0
  %1839 = vmatpush1.xpose.msra.mxu0 0.0
  %1840 = vmatprep.subr.mxu0 0.0
  %1841 = vmatpush1.xpose.msra.mxu0 0.0
  %1842 = vmatprep.subr.mxu0 0.0
  %1843 = vmatpush1.xpose.msra.mxu0 0.0
  %1844 = vmatprep.subr.mxu0 0.0
  %1845 = vmatpush1.xpose.msra.mxu0 0.0
  %1846 = vmatprep.subr.mxu0 0.0
  %1847 = vmatpush1.xpose.msra.mxu0 0.0
  %1848 = vmatprep.subr.mxu0 0.0
  %1849 = vmatpush1.xpose.msra.mxu0 0.0
  %1850 = vmatprep.subr.mxu0 0.0
  %1851 = vmatpush1.xpose.msra.mxu0 0.0
  %1852 = vmatprep.subr.mxu0 0.0
  %1853 = vmatpush1.xpose.msra.mxu0 0.0
  %1854 = vmatprep.subr.mxu0 0.0
  %1855 = vmatpush1.xpose.msra.mxu0 0.0
  %1856 = vmatprep.subr.mxu0 0.0
  %1857 = vmatpush1.xpose.msra.mxu0 0.0
  %1858 = vmatprep.subr.mxu0 0.0
  %1859 = vmatpush1.xpose.msra.mxu0 0.0
  %1860 = vmatprep.subr.mxu0 0.0
  %1861 = vmatpush1.xpose.msra.mxu0 0.0
  %1862 = vmatprep.subr.mxu0 0.0
  %1863 = vmatpush1.xpose.msra.mxu0 0.0
  %1864 = vmatprep.subr.mxu0 0.0
  %1865 = vmatpush1.xpose.msra.mxu0 0.0
  %1866 = vmatprep.subr.mxu0 0.0
  %1867 = vmatpush1.xpose.msra.mxu0 0.0
  %1868 = vmatprep.subr.mxu0 0.0
  %1869 = vmatpush1.xpose.msra.mxu0 0.0
  %1870 = vmatprep.subr.mxu0 0.0
  %1871 = vmatpush1.xpose.msra.mxu0 0.0
  %1872 = vmatprep.subr.mxu0 0.0
  %1873 = vmatpush1.xpose.msra.mxu0 0.0
  %1874 = vmatprep.subr.mxu0 0.0
  %1875 = vmatpush1.xpose.msra.mxu0 0.0
  %1876 = vmatprep.mubr.f32.mxu0 0.0
  %1877 = vmatmul.mubr.f32.gmra.mrb[0].mxu0 %v1808
  %v1878 = vpop.f32.mrb[0].mxu0
  %v1879 = vadd.f32 0.0, %v1878
  %v1880 = vpop.f32.mrb[0].mxu0
  %1881 = vdwg.mxu0
  %v1882 = vsel %vm135, %v1879, -inf
  %1883 = vmax.xlane.f32.xlu0 %v1882
  %v1884 = vpop.xlane.xlu0 %1883
  %v1885 = vsub.f32 %v1879, %v1884
  %v1886 = vmul.f32 %v1885, 1.442695
  %v1887 = vpow.pop %v1886
  %v1888 = vsel %vm135, %v1887, 0.0
  %1889 = vadd.xlane.f32.xlu0 %v1888
  %v1890 = vpop.xlane.xlu0 %1889
  %v1891 = vrcp.pop %v1890
  %v1892 = vmul.f32 %v1887, %v1891
  %1893 = vrot.lane.b32.xlu0 %v124, 40
  %v1894 = vpop.permute.xlu0 %1893
  %v1897 = vsel %vm135, %v1892, 0
  %1899 = vmatprep.subr.mxu0 0.0
  %1900 = vmatpush1.msra.mxu0 %v1894
  %1901 = vmatprep.subr.mxu0 0.0
  %1902 = vmatpush1.msra.mxu0 0.0
  %1903 = vmatprep.subr.mxu0 0.0
  %1904 = vmatpush1.msra.mxu0 0.0
  %1905 = vmatprep.subr.mxu0 0.0
  %1906 = vmatpush1.msra.mxu0 0.0
  %1907 = vmatprep.subr.mxu0 0.0
  %1908 = vmatpush1.msra.mxu0 0.0
  %1909 = vmatprep.subr.mxu0 0.0
  %1910 = vmatpush1.msra.mxu0 0.0
  %1911 = vmatprep.subr.mxu0 0.0
  %1912 = vmatpush1.msra.mxu0 0.0
  %1913 = vmatprep.subr.mxu0 0.0
  %1914 = vmatpush1.msra.mxu0 0.0
  %1915 = vmatprep.subr.mxu0 0.0
  %1916 = vmatpush1.msra.mxu0 0.0
  %1917 = vmatprep.subr.mxu0 0.0
  %1918 = vmatpush1.msra.mxu0 0.0
  %1919 = vmatprep.subr.mxu0 0.0
  %1920 = vmatpush1.msra.mxu0 0.0
  %1921 = vmatprep.subr.mxu0 0.0
  %1922 = vmatpush1.msra.mxu0 0.0
  %1923 = vmatprep.subr.mxu0 0.0
  %1924 = vmatpush1.msra.mxu0 0.0
  %1925 = vmatprep.subr.mxu0 0.0
  %1926 = vmatpush1.msra.mxu0 0.0
  %1927 = vmatprep.subr.mxu0 0.0
  %1928 = vmatpush1.msra.mxu0 0.0
  %1929 = vmatprep.subr.mxu0 0.0
  %1930 = vmatpush1.msra.mxu0 0.0
  %1931 = vmatprep.subr.mxu0 0.0
  %1932 = vmatpush1.msra.mxu0 0.0
  %1933 = vmatprep.subr.mxu0 0.0
  %1934 = vmatpush1.msra.mxu0 0.0
  %1935 = vmatprep.subr.mxu0 0.0
  %1936 = vmatpush1.msra.mxu0 0.0
  %1937 = vmatprep.subr.mxu0 0.0
  %1938 = vmatpush1.msra.mxu0 0.0
  %1939 = vmatprep.subr.mxu0 0.0
  %1940 = vmatpush1.msra.mxu0 0.0
  %1941 = vmatprep.subr.mxu0 0.0
  %1942 = vmatpush1.msra.mxu0 0.0
  %1943 = vmatprep.subr.mxu0 0.0
  %1944 = vmatpush1.msra.mxu0 0.0
  %1945 = vmatprep.subr.mxu0 0.0
  %1946 = vmatpush1.msra.mxu0 0.0
  %1947 = vmatprep.subr.mxu0 0.0
  %1948 = vmatpush1.msra.mxu0 0.0
  %1949 = vmatprep.subr.mxu0 0.0
  %1950 = vmatpush1.msra.mxu0 0.0
  %1951 = vmatprep.subr.mxu0 0.0
  %1952 = vmatpush1.msra.mxu0 0.0
  %1953 = vmatprep.subr.mxu0 0.0
  %1954 = vmatpush1.msra.mxu0 0.0
  %1955 = vmatprep.subr.mxu0 0.0
  %1956 = vmatpush1.msra.mxu0 0.0
  %1957 = vmatprep.subr.mxu0 0.0
  %1958 = vmatpush1.msra.mxu0 0.0
  %1959 = vmatprep.subr.mxu0 0.0
  %1960 = vmatpush1.msra.mxu0 0.0
  %1961 = vmatprep.subr.mxu0 0.0
  %1962 = vmatpush1.msra.mxu0 0.0
  %1963 = vmatprep.mubr.f32.mxu0 0.0
  %1964 = vmatmul.mubr.f32.gmra.mrb[0].mxu0 %v1897
  %v1965 = vpop.f32.mrb[0].mxu0
  %v1966 = vadd.f32 0.0, %v1965
  %v1967 = vpop.f32.mrb[0].mxu0
  %1968 = vdwg.mxu0
  %v1970 = vsel %vm135, %v1966, 0
  %1972 = vmatprep.subr.mxu0 0.0
  %1973 = vmatpush1.msra.mxu0 %v130
  %1974 = vmatprep.subr.mxu0 0.0
  %1975 = vmatpush1.msra.mxu0 0.0
  %1976 = vmatprep.subr.mxu0 0.0
  %1977 = vmatpush1.msra.mxu0 0.0
  %1978 = vmatprep.subr.mxu0 0.0
  %1979 = vmatpush1.msra.mxu0 0.0
  %1980 = vmatprep.subr.mxu0 0.0
  %1981 = vmatpush1.msra.mxu0 0.0
  %1982 = vmatprep.subr.mxu0 0.0
  %1983 = vmatpush1.msra.mxu0 0.0
  %1984 = vmatprep.subr.mxu0 0.0
  %1985 = vmatpush1.msra.mxu0 0.0
  %1986 = vmatprep.subr.mxu0 0.0
  %1987 = vmatpush1.msra.mxu0 0.0
  %1988 = vmatprep.subr.mxu0 0.0
  %1989 = vmatpush1.msra.mxu0 0.0
  %1990 = vmatprep.subr.mxu0 0.0
  %1991 = vmatpush1.msra.mxu0 0.0
  %1992 = vmatprep.subr.mxu0 0.0
  %1993 = vmatpush1.msra.mxu0 0.0
  %1994 = vmatprep.subr.mxu0 0.0
  %1995 = vmatpush1.msra.mxu0 0.0
  %1996 = vmatprep.subr.mxu0 0.0
  %1997 = vmatpush1.msra.mxu0 0.0
  %1998 = vmatprep.subr.mxu0 0.0
  %1999 = vmatpush1.msra.mxu0 0.0
  %2000 = vmatprep.subr.mxu0 0.0
  %2001 = vmatpush1.msra.mxu0 0.0
  %2002 = vmatprep.subr.mxu0 0.0
  %2003 = vmatpush1.msra.mxu0 0.0
  %2004 = vmatprep.subr.mxu0 0.0
  %2005 = vmatpush1.msra.mxu0 0.0
  %2006 = vmatprep.subr.mxu0 0.0
  %2007 = vmatpush1.msra.mxu0 0.0
  %2008 = vmatprep.subr.mxu0 0.0
  %2009 = vmatpush1.msra.mxu0 0.0
  %2010 = vmatprep.subr.mxu0 0.0
  %2011 = vmatpush1.msra.mxu0 0.0
  %2012 = vmatprep.subr.mxu0 0.0
  %2013 = vmatpush1.msra.mxu0 0.0
  %2014 = vmatprep.subr.mxu0 0.0
  %2015 = vmatpush1.msra.mxu0 0.0
  %2016 = vmatprep.subr.mxu0 0.0
  %2017 = vmatpush1.msra.mxu0 0.0
  %2018 = vmatprep.subr.mxu0 0.0
  %2019 = vmatpush1.msra.mxu0 0.0
  %2020 = vmatprep.subr.mxu0 0.0
  %2021 = vmatpush1.msra.mxu0 0.0
  %2022 = vmatprep.subr.mxu0 0.0
  %2023 = vmatpush1.msra.mxu0 0.0
  %2024 = vmatprep.subr.mxu0 0.0
  %2025 = vmatpush1.msra.mxu0 0.0
  %2026 = vmatprep.subr.mxu0 0.0
  %2027 = vmatpush1.msra.mxu0 0.0
  %2028 = vmatprep.subr.mxu0 0.0
  %2029 = vmatpush1.msra.mxu0 0.0
  %2030 = vmatprep.subr.mxu0 0.0
  %2031 = vmatpush1.msra.mxu0 0.0
  %2032 = vmatprep.subr.mxu0 0.0
  %2033 = vmatpush1.msra.mxu0 0.0
  %2034 = vmatprep.subr.mxu0 0.0
  %2035 = vmatpush1.msra.mxu0 0.0
  %2036 = vmatprep.mubr.f32.mxu0 0.0
  %2037 = vmatmul.mubr.f32.gmra.mrb[0].mxu0 %v1970
  %v2038 = vpop.f32.mrb[0].mxu0
  %v2039 = vadd.f32 0.0, %v2038
  %v2040 = vpop.f32.mrb[0].mxu0
  %2041 = vdwg.mxu0
  %v2042 = vadd.f32 %v1803, %v2039
  %2043 = vst.msk [vmem:[#allocation2 + $0x8] sm:$0xff] %vm45, %v2042
  %v2044 = vld [vmem:[#allocation2] sm:$0xff]
  %v2045 = vld [vmem:[#allocation2 + $0x8] sm:$0xff]
  %v2046 = vadd.f32 %v32, %v2044
  %v2047 = vadd.f32 %v33, %v2045
  %v2048 = vld [vmem:[%s4] sm:$0x1]
  %v2050 = vlaneseq
  %v2051 = vshrl.u32 %v2050, 7
  %v2052 = vsub.s32 0, %v2051
  %v2053 = vrot.slane %v2048, %v2052
  %v2055 = vadd.f32 %v2046, %v2053
  %v2056 = vadd.f32 %v2047, %v2053
  %v2057 = vmul.f32 %v2055, 0.999995
  %v2058 = vmul.f32 %v2056, 0.999995
  %v2059 = vld [vmem:[%s5] sm:$0xff]
  %v2060 = vld [vmem:[%s5 + $0x8] sm:$0xff]
  %v2061 = vld [vmem:[%s5 + $0x10] sm:$0xff]
  %v2062 = vld [vmem:[%s5 + $0x18] sm:$0xff]
  %v2063 = vld [vmem:[%s6] sm:$0x1]
  %v2065 = vlaneseq
  %v2066 = vshrl.u32 %v2065, 7
  %v2067 = vsub.s32 0, %v2066
  %v2068 = vrot.slane %v2063, %v2067
  %v2071 = vsel %vm45, %v2057, 0
  %v2074 = vsel %vm45, %v2058, 0
  %2076 = vmatprep.subr.mxu0 0.0
  %2077 = vmatpush1.msra.mxu0 %v2059
  %2078 = vmatprep.subr.mxu0 0.0
  %2079 = vmatpush1.msra.mxu0 %v2060
  %2080 = vmatprep.subr.mxu0 0.0
  %2081 = vmatpush1.msra.mxu0 %v2061
  %2082 = vmatprep.subr.mxu0 0.0
  %2083 = vmatpush1.msra.mxu0 %v2062
  %2084 = vmatprep.subr.mxu0 0.0
  %2085 = vmatpush1.msra.mxu0 0.0
  %2086 = vmatprep.subr.mxu0 0.0
  %2087 = vmatpush1.msra.mxu0 0.0
  %2088 = vmatprep.subr.mxu0 0.0
  %2089 = vmatpush1.msra.mxu0 0.0
  %2090 = vmatprep.subr.mxu0 0.0
  %2091 = vmatpush1.msra.mxu0 0.0
  %2092 = vmatprep.subr.mxu0 0.0
  %2093 = vmatpush1.msra.mxu0 0.0
  %2094 = vmatprep.subr.mxu0 0.0
  %2095 = vmatpush1.msra.mxu0 0.0
  %2096 = vmatprep.subr.mxu0 0.0
  %2097 = vmatpush1.msra.mxu0 0.0
  %2098 = vmatprep.subr.mxu0 0.0
  %2099 = vmatpush1.msra.mxu0 0.0
  %2100 = vmatprep.subr.mxu0 0.0
  %2101 = vmatpush1.msra.mxu0 0.0
  %2102 = vmatprep.subr.mxu0 0.0
  %2103 = vmatpush1.msra.mxu0 0.0
  %2104 = vmatprep.subr.mxu0 0.0
  %2105 = vmatpush1.msra.mxu0 0.0
  %2106 = vmatprep.subr.mxu0 0.0
  %2107 = vmatpush1.msra.mxu0 0.0
  %2108 = vmatprep.subr.mxu0 0.0
  %2109 = vmatpush1.msra.mxu0 0.0
  %2110 = vmatprep.subr.mxu0 0.0
  %2111 = vmatpush1.msra.mxu0 0.0
  %2112 = vmatprep.subr.mxu0 0.0
  %2113 = vmatpush1.msra.mxu0 0.0
  %2114 = vmatprep.subr.mxu0 0.0
  %2115 = vmatpush1.msra.mxu0 0.0
  %2116 = vmatprep.subr.mxu0 0.0
  %2117 = vmatpush1.msra.mxu0 0.0
  %2118 = vmatprep.subr.mxu0 0.0
  %2119 = vmatpush1.msra.mxu0 0.0
  %2120 = vmatprep.subr.mxu0 0.0
  %2121 = vmatpush1.msra.mxu0 0.0
  %2122 = vmatprep.subr.mxu0 0.0
  %2123 = vmatpush1.msra.mxu0 0.0
  %2124 = vmatprep.subr.mxu0 0.0
  %2125 = vmatpush1.msra.mxu0 0.0
  %2126 = vmatprep.subr.mxu0 0.0
  %2127 = vmatpush1.msra.mxu0 0.0
  %2128 = vmatprep.subr.mxu0 0.0
  %2129 = vmatpush1.msra.mxu0 0.0
  %2130 = vmatprep.subr.mxu0 0.0
  %2131 = vmatpush1.msra.mxu0 0.0
  %2132 = vmatprep.subr.mxu0 0.0
  %2133 = vmatpush1.msra.mxu0 0.0
  %2134 = vmatprep.subr.mxu0 0.0
  %2135 = vmatpush1.msra.mxu0 0.0
  %2136 = vmatprep.subr.mxu0 0.0
  %2137 = vmatpush1.msra.mxu0 0.0
  %2138 = vmatprep.subr.mxu0 0.0
  %2139 = vmatpush1.msra.mxu0 0.0
  %2140 = vmatprep.mubr.f32.mxu0 0.0
  %2141 = vmatmul.mubr.f32.gmra.mrb[0].mxu0 %v2071
  %v2142 = vpop.f32.mrb[0].mxu0
  %v2143 = vadd.f32 %v2068, %v2142
  %v2144 = vpop.f32.mrb[0].mxu0
  %2145 = vmatprep.mubr.f32.mxu0 0.0
  %2146 = vmatmul.mubr.f32.gmra.mrb[0].mxu0 %v2074
  %v2147 = vpop.f32.mrb[0].mxu0
  %v2148 = vadd.f32 %v2068, %v2147
  %v2149 = vpop.f32.mrb[0].mxu0
  %2150 = vdwg.mxu0
  %v2151 = vmax.f32 %v2143, 0.0
  %v2152 = vmax.f32 %v2148, 0.0
  %v2153 = vld [vmem:[%s7] sm:$0xff]
  %v2154 = vld [vmem:[%s7 + $0x8] sm:$0xff]
  %v2155 = vld [vmem:[%s7 + $0x10] sm:$0xff]
  %v2156 = vld [vmem:[%s7 + $0x18] sm:$0xff]
  %v2157 = vld [vmem:[%s7 + $0x20] sm:$0xff]
  %v2158 = vld [vmem:[%s7 + $0x28] sm:$0xff]
  %v2159 = vld [vmem:[%s7 + $0x30] sm:$0xff]
  %v2160 = vld [vmem:[%s7 + $0x38] sm:$0xff]
  %v2161 = vld [vmem:[%s8] sm:$0x1]
  %v2163 = vlaneseq
  %v2164 = vshrl.u32 %v2163, 7
  %v2165 = vsub.s32 0, %v2164
  %v2166 = vrot.slane %v2161, %v2165
  %vm2168 = vcmask 523264
  %v2170 = vsel %vm2168, %v2151, 0
  %v2173 = vsel %vm2168, %v2152, 0
  %2175 = vmatprep.subr.mxu0 0.0
  %2176 = vmatpush1.msra.mxu0 %v2153
  %2177 = vmatprep.subr.mxu0 0.0
  %2178 = vmatpush1.msra.mxu0 %v2154
  %2179 = vmatprep.subr.mxu0 0.0
  %2180 = vmatpush1.msra.mxu0 %v2155
  %2181 = vmatprep.subr.mxu0 0.0
  %2182 = vmatpush1.msra.mxu0 %v2156
  %2183 = vmatprep.subr.mxu0 0.0
  %2184 = vmatpush1.msra.mxu0 %v2157
  %2185 = vmatprep.subr.mxu0 0.0
  %2186 = vmatpush1.msra.mxu0 %v2158
  %2187 = vmatprep.subr.mxu0 0.0
  %2188 = vmatpush1.msra.mxu0 %v2159
  %2189 = vmatprep.subr.mxu0 0.0
  %2190 = vmatpush1.msra.mxu0 %v2160
  %2191 = vmatprep.subr.mxu0 0.0
  %2192 = vmatpush1.msra.mxu0 0.0
  %2193 = vmatprep.subr.mxu0 0.0
  %2194 = vmatpush1.msra.mxu0 0.0
  %2195 = vmatprep.subr.mxu0 0.0
  %2196 = vmatpush1.msra.mxu0 0.0
  %2197 = vmatprep.subr.mxu0 0.0
  %2198 = vmatpush1.msra.mxu0 0.0
  %2199 = vmatprep.subr.mxu0 0.0
  %2200 = vmatpush1.msra.mxu0 0.0
  %2201 = vmatprep.subr.mxu0 0.0
  %2202 = vmatpush1.msra.mxu0 0.0
  %2203 = vmatprep.subr.mxu0 0.0
  %2204 = vmatpush1.msra.mxu0 0.0
  %2205 = vmatprep.subr.mxu0 0.0
  %2206 = vmatpush1.msra.mxu0 0.0
  %2207 = vmatprep.subr.mxu0 0.0
  %2208 = vmatpush1.msra.mxu0 0.0
  %2209 = vmatprep.subr.mxu0 0.0
  %2210 = vmatpush1.msra.mxu0 0.0
  %2211 = vmatprep.subr.mxu0 0.0
  %2212 = vmatpush1.msra.mxu0 0.0
  %2213 = vmatprep.subr.mxu0 0.0
  %2214 = vmatpush1.msra.mxu0 0.0
  %2215 = vmatprep.subr.mxu0 0.0
  %2216 = vmatpush1.msra.mxu0 0.0
  %2217 = vmatprep.subr.mxu0 0.0
  %2218 = vmatpush1.msra.mxu0 0.0
  %2219 = vmatprep.subr.mxu0 0.0
  %2220 = vmatpush1.msra.mxu0 0.0
  %2221 = vmatprep.subr.mxu0 0.0
  %2222 = vmatpush1.msra.mxu0 0.0
  %2223 = vmatprep.subr.mxu0 0.0
  %2224 = vmatpush1.msra.mxu0 0.0
  %2225 = vmatprep.subr.mxu0 0.0
  %2226 = vmatpush1.msra.mxu0 0.0
  %2227 = vmatprep.subr.mxu0 0.0
  %2228 = vmatpush1.msra.mxu0 0.0
  %2229 = vmatprep.subr.mxu0 0.0
  %2230 = vmatpush1.msra.mxu0 0.0
  %2231 = vmatprep.subr.mxu0 0.0
  %2232 = vmatpush1.msra.mxu0 0.0
  %2233 = vmatprep.subr.mxu0 0.0
  %2234 = vmatpush1.msra.mxu0 0.0
  %2235 = vmatprep.subr.mxu0 0.0
  %2236 = vmatpush1.msra.mxu0 0.0
  %2237 = vmatprep.subr.mxu0 0.0
  %2238 = vmatpush1.msra.mxu0 0.0
  %2239 = vmatprep.mubr.f32.mxu0 0.0
  %2240 = vmatmul.mubr.f32.gmra.mrb[0].mxu0 %v2170
  %v2241 = vpop.f32.mrb[0].mxu0
  %v2242 = vadd.f32 %v2166, %v2241
  %v2243 = vpop.f32.mrb[0].mxu0
  %2244 = vmatprep.mubr.f32.mxu0 0.0
  %2245 = vmatmul.mubr.f32.gmra.mrb[0].mxu0 %v2173
  %v2246 = vpop.f32.mrb[0].mxu0
  %v2247 = vadd.f32 %v2166, %v2246
  %v2248 = vpop.f32.mrb[0].mxu0
  %2249 = vdwg.mxu0
  %v2250 = vadd.f32 %v2057, %v2242
  %v2251 = vadd.f32 %v2058, %v2247
  %v2252 = vmul.f32 %v2250, 0.999995
  %v2253 = vmul.f32 %v2251, 0.999995
  %2254 = vst.msk [vmem:[%s9] sm:$0xff] %vm45, %v2252
  %2255 = vst.msk [vmem:[%s9 + $0x8] sm:$0xff] %vm45, %v2253
  // Predicated region
  $region38: #{attention_model_forward.8} parent=0 // pred_check
    _
  $region39: #{attention_model_forward.8} parent=0 // pred_check_branch
    %2257 = sbr.rel (0) target = $region41
  $region40: #{attention_model_forward.8} parent=0 // pred_region
    _
  $region41: #{attention_model_forward.8} parent=0 // pred_fallthru
    _
  // Predicated region
  $region42: #{attention_model_forward.8} parent=0 // pred_check
    _
  $region43: #{attention_model_forward.8} parent=0 // pred_check_branch
    %2259 = sbr.rel (0) target = $region45
  $region44: #{attention_model_forward.8} parent=0 // pred_region
    _
  $region45: #{attention_model_forward.8} parent=0 // pred_fallthru
    _

// kernel: closed_call.12
$region0: #{closed_call.12}
  #allocation0 [shape = 'u32[]', space=smem, size = 0x4, offset = 0x4, fixed_abs, tag = 'smem constant byte address 0x4 - core index']
  #allocation1 [shape = 'u32[144,128]{1,0:T(1,128)}', space=vmem, size = 0x12000, scoped, tag = 'internal scratch']
  %s0 = inlined_call_operand.vmem [shape: f32[2,32], index: 0, kind: input, shape index: {}]
  %s1 = inlined_call_operand.vmem [shape: f32[2,8], index: 1, kind: input, shape index: {}]
  %s2 = inlined_call_operand.vmem [shape: f32[2,32], index: 2, kind: input, shape index: {}]
  %s3 = inlined_call_operand.vmem [shape: f32[32,32], index: 3, kind: input, shape index: {}]
  %s4 = inlined_call_operand.vmem [shape: f32[1,32,32], index: 4, kind: input, shape index: {}]
  %s5 = inlined_call_operand.vmem [shape: f32[1,1,32], index: 5, kind: input, shape index: {}]
  %s6 = inlined_call_operand.vmem [shape: f32[1,32,32], index: 6, kind: input, shape index: {}]
  %s7 = inlined_call_operand.vmem [shape: f32[1,1,32], index: 7, kind: input, shape index: {}]
  %s8 = inlined_call_operand.vmem [shape: f32[1,32,32], index: 8, kind: input, shape index: {}]
  %s9 = inlined_call_operand.vmem [shape: f32[1,1,32], index: 9, kind: input, shape index: {}]
  %s10 = inlined_call_operand.vmem [shape: f32[1,32,32], index: 10, kind: input, shape index: {}]
  %s11 = inlined_call_operand.vmem [shape: f32[1,1,32], index: 11, kind: input, shape index: {}]
  %s12 = inlined_call_operand.vmem [shape: f32[1,2,8,32], index: 12, kind: input, shape index: {}]
  %s13 = inlined_call_operand.vmem [shape: f32[1,2,8,32], index: 13, kind: input, shape index: {}]
  %s14 = inlined_call_operand.vmem [shape: f32[1,32,64], index: 14, kind: input, shape index: {}]
  %s15 = inlined_call_operand.vmem [shape: f32[1,1,64], index: 15, kind: input, shape index: {}]
  %s16 = inlined_call_operand.vmem [shape: f32[1,64,32], index: 16, kind: input, shape index: {}]
  %s17 = inlined_call_operand.vmem [shape: f32[1,1,32], index: 17, kind: input, shape index: {}]
  %s18 = inlined_call_operand.vmem [shape: f32[32,32], index: 18, kind: input, shape index: {}]
  %s19 = inlined_call_operand.vmem [shape: f32[1,32], index: 19, kind: input, shape index: {}]
  %s20 = inlined_call_operand.vmem [shape: f32[2,8,32], index: 20, kind: input, shape index: {}]
  %s21 = inlined_call_operand.vmem [shape: f32[2,8], index: 21, kind: output, shape index: {}]
  %s22 = sld [smem:[#allocation0]]
  $region94: #{closed_call.12} parent=0
    _
  %s24 = ssub.s32 1, %s22
  %s25 = scalar_select 0, %s24, %s22
  // Predicated region
  $region2: #{closed_call.12} parent=0 // pred_check
    _
  $region3: #{closed_call.12} parent=0 // pred_check_branch
    %27 = sbr.rel (0) target = $region5
  $region4: #{closed_call.12} parent=0 // pred_region
    _
  $region5: #{closed_call.12} parent=0 // pred_fallthru
    _
  // Predicated region
  $region6: #{closed_call.12} parent=0 // pred_check
    _
  $region7: #{closed_call.12} parent=0 // pred_check_branch
    %29 = sbr.rel (0) target = $region9
  $region8: #{closed_call.12} parent=0 // pred_region
    _
  $region9: #{closed_call.12} parent=0 // pred_fallthru
    _
  // Predicated region
  $region10: #{closed_call.12} parent=0 // pred_check
    _
  $region11: #{closed_call.12} parent=0 // pred_check_branch
    %31 = sbr.rel (0) target = $region13
  $region12: #{closed_call.12} parent=0 // pred_region
    _
  $region13: #{closed_call.12} parent=0 // pred_fallthru
    _
  // Predicated region
  $region14: #{closed_call.12} parent=0 // pred_check
    _
  $region15: #{closed_call.12} parent=0 // pred_check_branch
    %33 = sbr.rel (0) target = $region17
  $region16: #{closed_call.12} parent=0 // pred_region
    _
  $region17: #{closed_call.12} parent=0 // pred_fallthru
    _
  // Predicated region
  $region18: #{closed_call.12} parent=0 // pred_check
    _
  $region19: #{closed_call.12} parent=0 // pred_check_branch
    %35 = sbr.rel (0) target = $region21
  $region20: #{closed_call.12} parent=0 // pred_region
    _
  $region21: #{closed_call.12} parent=0 // pred_fallthru
    _
  // Predicated region
  $region22: #{closed_call.12} parent=0 // pred_check
    _
  $region23: #{closed_call.12} parent=0 // pred_check_branch
    %37 = sbr.rel (0) target = $region25
  $region24: #{closed_call.12} parent=0 // pred_region
    _
  $region25: #{closed_call.12} parent=0 // pred_fallthru
    _
  // Predicated region
  $region26: #{closed_call.12} parent=0 // pred_check
    _
  $region27: #{closed_call.12} parent=0 // pred_check_branch
    %39 = sbr.rel (0) target = $region29
  $region28: #{closed_call.12} parent=0 // pred_region
    _
  $region29: #{closed_call.12} parent=0 // pred_fallthru
    _
  // Predicated region
  $region30: #{closed_call.12} parent=0 // pred_check
    _
  $region31: #{closed_call.12} parent=0 // pred_check_branch
    %41 = sbr.rel (0) target = $region33
  $region32: #{closed_call.12} parent=0 // pred_region
    _
  $region33: #{closed_call.12} parent=0 // pred_fallthru
    _
  // Predicated region
  $region34: #{closed_call.12} parent=0 // pred_check
    _
  $region35: #{closed_call.12} parent=0 // pred_check_branch
    %43 = sbr.rel (0) target = $region37
  $region36: #{closed_call.12} parent=0 // pred_region
    _
  $region37: #{closed_call.12} parent=0 // pred_fallthru
    _
  // Predicated region
  $region38: #{closed_call.12} parent=0 // pred_check
    _
  $region39: #{closed_call.12} parent=0 // pred_check_branch
    %45 = sbr.rel (0) target = $region41
  $region40: #{closed_call.12} parent=0 // pred_region
    _
  $region41: #{closed_call.12} parent=0 // pred_fallthru
    _
  // Predicated region
  $region42: #{closed_call.12} parent=0 // pred_check
    _
  $region43: #{closed_call.12} parent=0 // pred_check_branch
    %47 = sbr.rel (0) target = $region45
  $region44: #{closed_call.12} parent=0 // pred_region
    _
  $region45: #{closed_call.12} parent=0 // pred_fallthru
    _
  // Predicated region
  $region46: #{closed_call.12} parent=0 // pred_check
    _
  $region47: #{closed_call.12} parent=0 // pred_check_branch
    %49 = sbr.rel (0) target = $region49
  $region48: #{closed_call.12} parent=0 // pred_region
    _
  $region49: #{closed_call.12} parent=0 // pred_fallthru
    _
  // Predicated region
  $region50: #{closed_call.12} parent=0 // pred_check
    _
  $region51: #{closed_call.12} parent=0 // pred_check_branch
    %51 = sbr.rel (0) target = $region53
  $region52: #{closed_call.12} parent=0 // pred_region
    _
  $region53: #{closed_call.12} parent=0 // pred_fallthru
    _
  // Predicated region
  $region54: #{closed_call.12} parent=0 // pred_check
    _
  $region55: #{closed_call.12} parent=0 // pred_check_branch
    %53 = sbr.rel (0) target = $region57
  $region56: #{closed_call.12} parent=0 // pred_region
    _
  $region57: #{closed_call.12} parent=0 // pred_fallthru
    _
  // Predicated region
  $region58: #{closed_call.12} parent=0 // pred_check
    _
  $region59: #{closed_call.12} parent=0 // pred_check_branch
    %55 = sbr.rel (0) target = $region61
  $region60: #{closed_call.12} parent=0 // pred_region
    _
  $region61: #{closed_call.12} parent=0 // pred_fallthru
    _
  // Predicated region
  $region62: #{closed_call.12} parent=0 // pred_check
    _
  $region63: #{closed_call.12} parent=0 // pred_check_branch
    %57 = sbr.rel (0) target = $region65
  $region64: #{closed_call.12} parent=0 // pred_region
    _
  $region65: #{closed_call.12} parent=0 // pred_fallthru
    _
  // Predicated region
  $region66: #{closed_call.12} parent=0 // pred_check
    _
  $region67: #{closed_call.12} parent=0 // pred_check_branch
    %59 = sbr.rel (0) target = $region69
  $region68: #{closed_call.12} parent=0 // pred_region
    _
  $region69: #{closed_call.12} parent=0 // pred_fallthru
    _
  // Predicated region
  $region70: #{closed_call.12} parent=0 // pred_check
    _
  $region71: #{closed_call.12} parent=0 // pred_check_branch
    %61 = sbr.rel (0) target = $region73
  $region72: #{closed_call.12} parent=0 // pred_region
    _
  $region73: #{closed_call.12} parent=0 // pred_fallthru
    _
  // Predicated region
  $region74: #{closed_call.12} parent=0 // pred_check
    _
  $region75: #{closed_call.12} parent=0 // pred_check_branch
    %63 = sbr.rel (0) target = $region77
  $region76: #{closed_call.12} parent=0 // pred_region
    _
  $region77: #{closed_call.12} parent=0 // pred_fallthru
    _
  // Predicated region
  $region78: #{closed_call.12} parent=0 // pred_check
    _
  $region79: #{closed_call.12} parent=0 // pred_check_branch
    %65 = sbr.rel (0) target = $region81
  $region80: #{closed_call.12} parent=0 // pred_region
    _
  $region81: #{closed_call.12} parent=0 // pred_fallthru
    _
  // Predicated region
  $region82: #{closed_call.12} parent=0 // pred_check
    _
  $region83: #{closed_call.12} parent=0 // pred_check_branch
    %67 = sbr.rel (0) target = $region85
  $region84: #{closed_call.12} parent=0 // pred_region
    _
  $region85: #{closed_call.12} parent=0 // pred_fallthru
    _
  %v68 = vld [vmem:[%s1] sm:$0x3]
  %v69 = vmul.f32 %v68, -1e+30
  %v70 = vld [vmem:[%s2] sm:$0x3]
  %v71 = vld [vmem:[%s0] sm:$0x3]
  %v72 = vld [vmem:[%s3] sm:$0xff]
  %v73 = vld [vmem:[%s3 + $0x8] sm:$0xff]
  %v74 = vld [vmem:[%s3 + $0x10] sm:$0xff]
  %v75 = vld [vmem:[%s3 + $0x18] sm:$0xff]
  %vm76 = vcmask 261120
  %v78 = vsel %vm76, %v71, 0
  %80 = vmatprep.subr.mxu0 0.0
  %81 = vmatpush1.msra.mxu0 %v72
  %82 = vmatprep.subr.mxu0 0.0
  %83 = vmatpush1.msra.mxu0 %v73
  %84 = vmatprep.subr.mxu0 0.0
  %85 = vmatpush1.msra.mxu0 %v74
  %86 = vmatprep.subr.mxu0 0.0
  %87 = vmatpush1.msra.mxu0 %v75
  %88 = vmatprep.subr.mxu0 0.0
  %89 = vmatpush1.msra.mxu0 0.0
  %90 = vmatprep.subr.mxu0 0.0
  %91 = vmatpush1.msra.mxu0 0.0
  %92 = vmatprep.subr.mxu0 0.0
  %93 = vmatpush1.msra.mxu0 0.0
  %94 = vmatprep.subr.mxu0 0.0
  %95 = vmatpush1.msra.mxu0 0.0
  %96 = vmatprep.subr.mxu0 0.0
  %97 = vmatpush1.msra.mxu0 0.0
  %98 = vmatprep.subr.mxu0 0.0
  %99 = vmatpush1.msra.mxu0 0.0
  %100 = vmatprep.subr.mxu0 0.0
  %101 = vmatpush1.msra.mxu0 0.0
  %102 = vmatprep.subr.mxu0 0.0
  %103 = vmatpush1.msra.mxu0 0.0
  %104 = vmatprep.subr.mxu0 0.0
  %105 = vmatpush1.msra.mxu0 0.0
  %106 = vmatprep.subr.mxu0 0.0
  %107 = vmatpush1.msra.mxu0 0.0
  %108 = vmatprep.subr.mxu0 0.0
  %109 = vmatpush1.msra.mxu0 0.0
  %110 = vmatprep.subr.mxu0 0.0
  %111 = vmatpush1.msra.mxu0 0.0
  %112 = vmatprep.subr.mxu0 0.0
  %113 = vmatpush1.msra.mxu0 0.0
  %114 = vmatprep.subr.mxu0 0.0
  %115 = vmatpush1.msra.mxu0 0.0
  %116 = vmatprep.subr.mxu0 0.0
  %117 = vmatpush1.msra.mxu0 0.0
  %118 = vmatprep.subr.mxu0 0.0
  %119 = vmatpush1.msra.mxu0 0.0
  %120 = vmatprep.subr.mxu0 0.0
  %121 = vmatpush1.msra.mxu0 0.0
  %122 = vmatprep.subr.mxu0 0.0
  %123 = vmatpush1.msra.mxu0 0.0
  %124 = vmatprep.subr.mxu0 0.0
  %125 = vmatpush1.msra.mxu0 0.0
  %126 = vmatprep.subr.mxu0 0.0
  %127 = vmatpush1.msra.mxu0 0.0
  %128 = vmatprep.subr.mxu0 0.0
  %129 = vmatpush1.msra.mxu0 0.0
  %130 = vmatprep.subr.mxu0 0.0
  %131 = vmatpush1.msra.mxu0 0.0
  %132 = vmatprep.subr.mxu0 0.0
  %133 = vmatpush1.msra.mxu0 0.0
  %134 = vmatprep.subr.mxu0 0.0
  %135 = vmatpush1.msra.mxu0 0.0
  %136 = vmatprep.subr.mxu0 0.0
  %137 = vmatpush1.msra.mxu0 0.0
  %138 = vmatprep.subr.mxu0 0.0
  %139 = vmatpush1.msra.mxu0 0.0
  %140 = vmatprep.subr.mxu0 0.0
  %141 = vmatpush1.msra.mxu0 0.0
  %142 = vmatprep.subr.mxu0 0.0
  %143 = vmatpush1.msra.mxu0 0.0
  %144 = vmatprep.mubr.f32.mxu0 0.0
  %145 = vmatmul.mubr.f32.gmra.mrb[0].mxu0 %v78
  %v146 = vpop.f32.mrb[0].mxu0
  %v147 = vadd.f32 0.0, %v146
  %v148 = vpop.f32.mrb[0].mxu0
  %149 = vdwg.mxu0
  %v150 = vadd.f32 %v70, %v147
  %v151 = vld [vmem:[%s4] sm:$0xff]
  %v152 = vld [vmem:[%s4 + $0x8] sm:$0xff]
  %v153 = vld [vmem:[%s4 + $0x10] sm:$0xff]
  %v154 = vld [vmem:[%s4 + $0x18] sm:$0xff]
  %v155 = vld [vmem:[%s5] sm:$0x1]
  %v157 = vlaneseq
  %v158 = vshrl.u32 %v157, 7
  %v159 = vsub.s32 0, %v158
  %v160 = vrot.slane %v155, %v159
  %v163 = vsel %vm76, %v150, 0
  %165 = vmatprep.subr.mxu0 0.0
  %166 = vmatpush1.msra.mxu0 %v151
  %167 = vmatprep.subr.mxu0 0.0
  %168 = vmatpush1.msra.mxu0 %v152
  %169 = vmatprep.subr.mxu0 0.0
  %170 = vmatpush1.msra.mxu0 %v153
  %171 = vmatprep.subr.mxu0 0.0
  %172 = vmatpush1.msra.mxu0 %v154
  %173 = vmatprep.subr.mxu0 0.0
  %174 = vmatpush1.msra.mxu0 0.0
  %175 = vmatprep.subr.mxu0 0.0
  %176 = vmatpush1.msra.mxu0 0.0
  %177 = vmatprep.subr.mxu0 0.0
  %178 = vmatpush1.msra.mxu0 0.0
  %179 = vmatprep.subr.mxu0 0.0
  %180 = vmatpush1.msra.mxu0 0.0
  %181 = vmatprep.subr.mxu0 0.0
  %182 = vmatpush1.msra.mxu0 0.0
  %183 = vmatprep.subr.mxu0 0.0
  %184 = vmatpush1.msra.mxu0 0.0
  %185 = vmatprep.subr.mxu0 0.0
  %186 = vmatpush1.msra.mxu0 0.0
  %187 = vmatprep.subr.mxu0 0.0
  %188 = vmatpush1.msra.mxu0 0.0
  %189 = vmatprep.subr.mxu0 0.0
  %190 = vmatpush1.msra.mxu0 0.0
  %191 = vmatprep.subr.mxu0 0.0
  %192 = vmatpush1.msra.mxu0 0.0
  %193 = vmatprep.subr.mxu0 0.0
  %194 = vmatpush1.msra.mxu0 0.0
  %195 = vmatprep.subr.mxu0 0.0
  %196 = vmatpush1.msra.mxu0 0.0
  %197 = vmatprep.subr.mxu0 0.0
  %198 = vmatpush1.msra.mxu0 0.0
  %199 = vmatprep.subr.mxu0 0.0
  %200 = vmatpush1.msra.mxu0 0.0
  %201 = vmatprep.subr.mxu0 0.0
  %202 = vmatpush1.msra.mxu0 0.0
  %203 = vmatprep.subr.mxu0 0.0
  %204 = vmatpush1.msra.mxu0 0.0
  %205 = vmatprep.subr.mxu0 0.0
  %206 = vmatpush1.msra.mxu0 0.0
  %207 = vmatprep.subr.mxu0 0.0
  %208 = vmatpush1.msra.mxu0 0.0
  %209 = vmatprep.subr.mxu0 0.0
  %210 = vmatpush1.msra.mxu0 0.0
  %211 = vmatprep.subr.mxu0 0.0
  %212 = vmatpush1.msra.mxu0 0.0
  %213 = vmatprep.subr.mxu0 0.0
  %214 = vmatpush1.msra.mxu0 0.0
  %215 = vmatprep.subr.mxu0 0.0
  %216 = vmatpush1.msra.mxu0 0.0
  %217 = vmatprep.subr.mxu0 0.0
  %218 = vmatpush1.msra.mxu0 0.0
  %219 = vmatprep.subr.mxu0 0.0
  %220 = vmatpush1.msra.mxu0 0.0
  %221 = vmatprep.subr.mxu0 0.0
  %222 = vmatpush1.msra.mxu0 0.0
  %223 = vmatprep.subr.mxu0 0.0
  %224 = vmatpush1.msra.mxu0 0.0
  %225 = vmatprep.subr.mxu0 0.0
  %226 = vmatpush1.msra.mxu0 0.0
  %227 = vmatprep.subr.mxu0 0.0
  %228 = vmatpush1.msra.mxu0 0.0
  %229 = vmatprep.mubr.f32.mxu0 0.0
  %230 = vmatmul.mubr.f32.gmra.mrb[0].mxu0 %v163
  %v231 = vpop.f32.mrb[0].mxu0
  %v232 = vadd.f32 %v160, %v231
  %v233 = vpop.f32.mrb[0].mxu0
  %234 = vdwg.mxu0
  %v235 = vld [vmem:[%s6] sm:$0xff]
  %v236 = vld [vmem:[%s6 + $0x8] sm:$0xff]
  %v237 = vld [vmem:[%s6 + $0x10] sm:$0xff]
  %v238 = vld [vmem:[%s6 + $0x18] sm:$0xff]
  %v239 = vld [vmem:[%s7] sm:$0x1]
  %v241 = vlaneseq
  %v242 = vshrl.u32 %v241, 7
  %v243 = vsub.s32 0, %v242
  %v244 = vrot.slane %v239, %v243
  %v247 = vsel %vm76, %v232, 0
  %249 = vmatprep.subr.mxu0 0.0
  %250 = vmatpush1.msra.mxu0 %v235
  %251 = vmatprep.subr.mxu0 0.0
  %252 = vmatpush1.msra.mxu0 %v236
  %253 = vmatprep.subr.mxu0 0.0
  %254 = vmatpush1.msra.mxu0 %v237
  %255 = vmatprep.subr.mxu0 0.0
  %256 = vmatpush1.msra.mxu0 %v238
  %257 = vmatprep.subr.mxu0 0.0
  %258 = vmatpush1.msra.mxu0 0.0
  %259 = vmatprep.subr.mxu0 0.0
  %260 = vmatpush1.msra.mxu0 0.0
  %261 = vmatprep.subr.mxu0 0.0
  %262 = vmatpush1.msra.mxu0 0.0
  %263 = vmatprep.subr.mxu0 0.0
  %264 = vmatpush1.msra.mxu0 0.0
  %265 = vmatprep.subr.mxu0 0.0
  %266 = vmatpush1.msra.mxu0 0.0
  %267 = vmatprep.subr.mxu0 0.0
  %268 = vmatpush1.msra.mxu0 0.0
  %269 = vmatprep.subr.mxu0 0.0
  %270 = vmatpush1.msra.mxu0 0.0
  %271 = vmatprep.subr.mxu0 0.0
  %272 = vmatpush1.msra.mxu0 0.0
  %273 = vmatprep.subr.mxu0 0.0
  %274 = vmatpush1.msra.mxu0 0.0
  %275 = vmatprep.subr.mxu0 0.0
  %276 = vmatpush1.msra.mxu0 0.0
  %277 = vmatprep.subr.mxu0 0.0
  %278 = vmatpush1.msra.mxu0 0.0
  %279 = vmatprep.subr.mxu0 0.0
  %280 = vmatpush1.msra.mxu0 0.0
  %281 = vmatprep.subr.mxu0 0.0
  %282 = vmatpush1.msra.mxu0 0.0
  %283 = vmatprep.subr.mxu0 0.0
  %284 = vmatpush1.msra.mxu0 0.0
  %285 = vmatprep.subr.mxu0 0.0
  %286 = vmatpush1.msra.mxu0 0.0
  %287 = vmatprep.subr.mxu0 0.0
  %288 = vmatpush1.msra.mxu0 0.0
  %289 = vmatprep.subr.mxu0 0.0
  %290 = vmatpush1.msra.mxu0 0.0
  %291 = vmatprep.subr.mxu0 0.0
  %292 = vmatpush1.msra.mxu0 0.0
  %293 = vmatprep.subr.mxu0 0.0
  %294 = vmatpush1.msra.mxu0 0.0
  %295 = vmatprep.subr.mxu0 0.0
  %296 = vmatpush1.msra.mxu0 0.0
  %297 = vmatprep.subr.mxu0 0.0
  %298 = vmatpush1.msra.mxu0 0.0
  %299 = vmatprep.subr.mxu0 0.0
  %300 = vmatpush1.msra.mxu0 0.0
  %301 = vmatprep.subr.mxu0 0.0
  %302 = vmatpush1.msra.mxu0 0.0
  %303 = vmatprep.subr.mxu0 0.0
  %304 = vmatpush1.msra.mxu0 0.0
  %305 = vmatprep.subr.mxu0 0.0
  %306 = vmatpush1.msra.mxu0 0.0
  %307 = vmatprep.subr.mxu0 0.0
  %308 = vmatpush1.msra.mxu0 0.0
  %309 = vmatprep.subr.mxu0 0.0
  %310 = vmatpush1.msra.mxu0 0.0
  %311 = vmatprep.subr.mxu0 0.0
  %312 = vmatpush1.msra.mxu0 0.0
  %313 = vmatprep.mubr.f32.mxu0 0.0
  %314 = vmatmul.mubr.f32.gmra.mrb[0].mxu0 %v247
  %v315 = vpop.f32.mrb[0].mxu0
  %v316 = vadd.f32 %v244, %v315
  %v317 = vpop.f32.mrb[0].mxu0
  %318 = vdwg.mxu0
  %v319 = vadd.f32 %v150, %v316
  %v320 = vmul.f32 %v319, 0.999995
  %v321 = vld [vmem:[%s8] sm:$0xff]
  %v322 = vld [vmem:[%s8 + $0x8] sm:$0xff]
  %v323 = vld [vmem:[%s8 + $0x10] sm:$0xff]
  %v324 = vld [vmem:[%s8 + $0x18] sm:$0xff]
  %v325 = vld [vmem:[%s9] sm:$0x1]
  %v327 = vlaneseq
  %v328 = vshrl.u32 %v327, 7
  %v329 = vsub.s32 0, %v328
  %v330 = vrot.slane %v325, %v329
  %v333 = vsel %vm76, %v320, 0
  %335 = vmatprep.subr.mxu0 0.0
  %336 = vmatpush1.msra.mxu0 %v321
  %337 = vmatprep.subr.mxu0 0.0
  %338 = vmatpush1.msra.mxu0 %v322
  %339 = vmatprep.subr.mxu0 0.0
  %340 = vmatpush1.msra.mxu0 %v323
  %341 = vmatprep.subr.mxu0 0.0
  %342 = vmatpush1.msra.mxu0 %v324
  %343 = vmatprep.subr.mxu0 0.0
  %344 = vmatpush1.msra.mxu0 0.0
  %345 = vmatprep.subr.mxu0 0.0
  %346 = vmatpush1.msra.mxu0 0.0
  %347 = vmatprep.subr.mxu0 0.0
  %348 = vmatpush1.msra.mxu0 0.0
  %349 = vmatprep.subr.mxu0 0.0
  %350 = vmatpush1.msra.mxu0 0.0
  %351 = vmatprep.subr.mxu0 0.0
  %352 = vmatpush1.msra.mxu0 0.0
  %353 = vmatprep.subr.mxu0 0.0
  %354 = vmatpush1.msra.mxu0 0.0
  %355 = vmatprep.subr.mxu0 0.0
  %356 = vmatpush1.msra.mxu0 0.0
  %357 = vmatprep.subr.mxu0 0.0
  %358 = vmatpush1.msra.mxu0 0.0
  %359 = vmatprep.subr.mxu0 0.0
  %360 = vmatpush1.msra.mxu0 0.0
  %361 = vmatprep.subr.mxu0 0.0
  %362 = vmatpush1.msra.mxu0 0.0
  %363 = vmatprep.subr.mxu0 0.0
  %364 = vmatpush1.msra.mxu0 0.0
  %365 = vmatprep.subr.mxu0 0.0
  %366 = vmatpush1.msra.mxu0 0.0
  %367 = vmatprep.subr.mxu0 0.0
  %368 = vmatpush1.msra.mxu0 0.0
  %369 = vmatprep.subr.mxu0 0.0
  %370 = vmatpush1.msra.mxu0 0.0
  %371 = vmatprep.subr.mxu0 0.0
  %372 = vmatpush1.msra.mxu0 0.0
  %373 = vmatprep.subr.mxu0 0.0
  %374 = vmatpush1.msra.mxu0 0.0
  %375 = vmatprep.subr.mxu0 0.0
  %376 = vmatpush1.msra.mxu0 0.0
  %377 = vmatprep.subr.mxu0 0.0
  %378 = vmatpush1.msra.mxu0 0.0
  %379 = vmatprep.subr.mxu0 0.0
  %380 = vmatpush1.msra.mxu0 0.0
  %381 = vmatprep.subr.mxu0 0.0
  %382 = vmatpush1.msra.mxu0 0.0
  %383 = vmatprep.subr.mxu0 0.0
  %384 = vmatpush1.msra.mxu0 0.0
  %385 = vmatprep.subr.mxu0 0.0
  %386 = vmatpush1.msra.mxu0 0.0
  %387 = vmatprep.subr.mxu0 0.0
  %388 = vmatpush1.msra.mxu0 0.0
  %389 = vmatprep.subr.mxu0 0.0
  %390 = vmatpush1.msra.mxu0 0.0
  %391 = vmatprep.subr.mxu0 0.0
  %392 = vmatpush1.msra.mxu0 0.0
  %393 = vmatprep.subr.mxu0 0.0
  %394 = vmatpush1.msra.mxu0 0.0
  %395 = vmatprep.subr.mxu0 0.0
  %396 = vmatpush1.msra.mxu0 0.0
  %397 = vmatprep.subr.mxu0 0.0
  %398 = vmatpush1.msra.mxu0 0.0
  %399 = vmatprep.mubr.f32.mxu0 0.0
  %400 = vmatmul.mubr.f32.gmra.mrb[0].mxu0 %v333
  %v401 = vpop.f32.mrb[0].mxu0
  %v402 = vadd.f32 %v330, %v401
  %v403 = vpop.f32.mrb[0].mxu0
  %404 = vdwg.mxu0
  %v405 = vmul.f32 %v402, 0.35355338
  %v406 = vld [vmem:[%s12] sm:$0xff]
  %v407 = vld [vmem:[%s12 + $0x8] sm:$0xff]
  %v408 = vld [vmem:[%s13] sm:$0xff]
  %v409 = vld [vmem:[%s13 + $0x8] sm:$0xff]
  %v410 = vld [vmem:[%s10] sm:$0xff]
  %v411 = vld [vmem:[%s10 + $0x8] sm:$0xff]
  %v412 = vld [vmem:[%s10 + $0x10] sm:$0xff]
  %v413 = vld [vmem:[%s10 + $0x18] sm:$0xff]
  %v416 = vunpack.c.l.s4 1966171168
  %v417 = vunpack.c.0.s8 %v416
  %v418 = vlaneseq
  %v419 = vshrl.u32 %v418, 7
  %v420 = vsub.s32 %v417, %v419
  %v421 = vrot.slane %v405, %v420
  %v422 = vcombine.high %v421, %v421
  %v424 = vunpack.c.l.s4 1966171168
  %v425 = vunpack.c.0.s8 %v424
  %v426 = vlaneseq
  %v427 = vshrl.u32 %v426, 7
  %v428 = vsub.s32 %v425, %v427
  %v429 = vrot.slane %v421, %v428
  %v431 = vunpack.c.l.s4 1966171168
  %v432 = vunpack.c.0.s8 %v431
  %v433 = vlaneseq
  %v434 = vshrl.u32 %v433, 7
  %v435 = vsub.s32 %v432, %v434
  %v436 = vrot.slane %v422, %v435
  %v437 = vlaneseq
  %v438 = vshrl.u32 %v437, 7
  %v439 = vsub.s32 0, %v438
  %v440 = vrot.slane %v429, %v439
  %v441 = vlaneseq
  %v442 = vshrl.u32 %v441, 7
  %v443 = vsub.s32 0, %v442
  %v444 = vrot.slane %v436, %v443
  %v447 = vmul.f32 %v440, %v406
  %v448 = vmul.f32 %v444, %v407
  %vm449 = vcmask 64512
  %v450 = vsel %vm449, %v447, 0.0
  %451 = vadd.xlane.f32.xlu0 %v450
  %v452 = vpop.xlane.xlu0 %451
  %v453 = vsel %vm449, %v448, 0.0
  %454 = vadd.xlane.f32.xlu0 %v453
  %v455 = vpop.xlane.xlu0 %454
  %v457 = vlaneseq
  %v458 = vshrl.u32 %v457, 7
  %v459 = vsub.s32 0, %v458
  %v460 = vrot.slane %v69, %v459
  %462 = vbcast.lane.b32.xlu0 %v460, 256
  %v463 = vpop.permute.xlu0 %462
  %v464 = vlaneseq
  %v465 = vshrl.u32 %v464, 7
  %v466 = vsub.s32 1, %v465
  %v467 = vrot.slane %v69, %v466
  %469 = vbcast.lane.b32.xlu0 %v467, 256
  %v470 = vpop.permute.xlu0 %469
  %v473 = vadd.f32 %v452, %v463
  %v474 = vadd.f32 %v455, %v470
  %477 = vset.pattern.permute.xlu0 0
  %478 = vperm.xlu0 %477, %v473
  %v479 = vpop.permute.xlu0 %478
  %480 = vset.pattern.permute.xlu0 0
  %481 = vperm.xlu0 %480, %v474
  %v482 = vpop.permute.xlu0 %481
  %v483 = vlaneseq
  %v484 = vand.u32 %v483, 127
  %v485 = vlaneseq
  %v486 = vshrl.u32 %v485, 7
  %v487 = vsub.s32 %v484, %v486
  %v488 = vrot.slane %v479, %v487
  %v489 = vlaneseq
  %v490 = vshrl.u32 %v489, 7
  %v491 = vsub.s32 %v484, %v490
  %v492 = vrot.slane %v482, %v491
  %vm493 = vcmask 1041409
  %v494 = vsel %vm493, %v492, %v488
  %vm496 = vcmask 58368
  %v497 = vsel %vm496, %v494, -inf
  %498 = vmax.xlane.f32.xlu0 %v497
  %v499 = vpop.xlane.xlu0 %498
  %v501 = vlaneseq
  %v502 = vshrl.u32 %v501, 7
  %v503 = vsub.s32 0, %v502
  %v504 = vrot.slane %v499, %v503
  %v505 = vlaneseq
  %v506 = vshrl.u32 %v505, 7
  %v507 = vsub.s32 1, %v506
  %v508 = vrot.slane %v499, %v507
  %v511 = vsub.f32 %v473, %v504
  %v512 = vsub.f32 %v474, %v508
  %v513 = vmul.f32 %v511, 1.442695
  %v514 = vpow.pop %v513
  %v515 = vmul.f32 %v512, 1.442695
  %v516 = vpow.pop %v515
  %519 = vset.pattern.permute.xlu0 0
  %520 = vperm.xlu0 %519, %v514
  %v521 = vpop.permute.xlu0 %520
  %522 = vset.pattern.permute.xlu0 0
  %523 = vperm.xlu0 %522, %v516
  %v524 = vpop.permute.xlu0 %523
  %v525 = vlaneseq
  %v526 = vshrl.u32 %v525, 7
  %v527 = vsub.s32 %v484, %v526
  %v528 = vrot.slane %v521, %v527
  %v529 = vlaneseq
  %v530 = vshrl.u32 %v529, 7
  %v531 = vsub.s32 %v484, %v530
  %v532 = vrot.slane %v524, %v531
  %v533 = vsel %vm493, %v532, %v528
  %v535 = vsel %vm496, %v533, 0.0
  %536 = vadd.xlane.f32.xlu0 %v535
  %v537 = vpop.xlane.xlu0 %536
  %v538 = vrcp.pop %v537
  %v540 = vlaneseq
  %v541 = vshrl.u32 %v540, 7
  %v542 = vsub.s32 0, %v541
  %v543 = vrot.slane %v538, %v542
  %v544 = vlaneseq
  %v545 = vshrl.u32 %v544, 7
  %v546 = vsub.s32 1, %v545
  %v547 = vrot.slane %v538, %v546
  %v550 = vmul.f32 %v514, %v543
  %v551 = vmul.f32 %v516, %v547
  %553 = vset.pattern.permute.xlu0 0
  %554 = vperm.xlu0 %553, %v550
  %v555 = vpop.permute.xlu0 %554
  %558 = vset.pattern.permute.xlu0 0
  %559 = vperm.xlu0 %558, %v551
  %v560 = vpop.permute.xlu0 %559
  %v562 = vmul.f32 %v555, %v408
  %v563 = vmul.f32 %v560, %v409
  %v564 = vsel %vm449, %v562, 0.0
  %v565 = vrot.slane %v564, 4
  %v566 = vadd.f32 %v564, %v565
  %v567 = vrot.slane %v566, 2
  %v568 = vadd.f32 %v566, %v567
  %v569 = vrot.slane %v568, 1
  %v570 = vadd.f32 %v568, %v569
  %v571 = vsel %vm449, %v563, 0.0
  %v572 = vrot.slane %v571, 4
  %v573 = vadd.f32 %v571, %v572
  %v574 = vrot.slane %v573, 2
  %v575 = vadd.f32 %v573, %v574
  %v576 = vrot.slane %v575, 1
  %v577 = vadd.f32 %v575, %v576
  %580 = vrot.lane.b32.xlu0 %v447, 120
  %v581 = vpop.permute.xlu0 %580
  %582 = vrot.lane.b32.xlu0 %v448, 120
  %v583 = vpop.permute.xlu0 %582
  %v586 = vsel %vm449, %v581, 0.0
  %587 = vadd.xlane.f32.xlu0 %v586
  %v588 = vpop.xlane.xlu0 %587
  %v589 = vsel %vm449, %v583, 0.0
  %590 = vadd.xlane.f32.xlu0 %v589
  %v591 = vpop.xlane.xlu0 %590
  %v592 = vadd.f32 %v588, %v463
  %v593 = vadd.f32 %v591, %v470
  %596 = vset.pattern.permute.xlu0 0
  %597 = vperm.xlu0 %596, %v592
  %v598 = vpop.permute.xlu0 %597
  %599 = vset.pattern.permute.xlu0 0
  %600 = vperm.xlu0 %599, %v593
  %v601 = vpop.permute.xlu0 %600
  %v602 = vlaneseq
  %v603 = vshrl.u32 %v602, 7
  %v604 = vsub.s32 %v484, %v603
  %v605 = vrot.slane %v598, %v604
  %v606 = vlaneseq
  %v607 = vshrl.u32 %v606, 7
  %v608 = vsub.s32 %v484, %v607
  %v609 = vrot.slane %v601, %v608
  %v610 = vsel %vm493, %v609, %v605
  %v612 = vsel %vm496, %v610, -inf
  %613 = vmax.xlane.f32.xlu0 %v612
  %v614 = vpop.xlane.xlu0 %613
  %v616 = vlaneseq
  %v617 = vshrl.u32 %v616, 7
  %v618 = vsub.s32 0, %v617
  %v619 = vrot.slane %v614, %v618
  %v620 = vlaneseq
  %v621 = vshrl.u32 %v620, 7
  %v622 = vsub.s32 1, %v621
  %v623 = vrot.slane %v614, %v622
  %v626 = vsub.f32 %v592, %v619
  %v627 = vsub.f32 %v593, %v623
  %v628 = vmul.f32 %v626, 1.442695
  %v629 = vpow.pop %v628
  %v630 = vmul.f32 %v627, 1.442695
  %v631 = vpow.pop %v630
  %634 = vset.pattern.permute.xlu0 0
  %635 = vperm.xlu0 %634, %v629
  %v636 = vpop.permute.xlu0 %635
  %637 = vset.pattern.permute.xlu0 0
  %638 = vperm.xlu0 %637, %v631
  %v639 = vpop.permute.xlu0 %638
  %v640 = vlaneseq
  %v641 = vshrl.u32 %v640, 7
  %v642 = vsub.s32 %v484, %v641
  %v643 = vrot.slane %v636, %v642
  %v644 = vlaneseq
  %v645 = vshrl.u32 %v644, 7
  %v646 = vsub.s32 %v484, %v645
  %v647 = vrot.slane %v639, %v646
  %v648 = vsel %vm493, %v647, %v643
  %v650 = vsel %vm496, %v648, 0.0
  %651 = vadd.xlane.f32.xlu0 %v650
  %v652 = vpop.xlane.xlu0 %651
  %v653 = vrcp.pop %v652
  %v655 = vlaneseq
  %v656 = vshrl.u32 %v655, 7
  %v657 = vsub.s32 0, %v656
  %v658 = vrot.slane %v653, %v657
  %v659 = vlaneseq
  %v660 = vshrl.u32 %v659, 7
  %v661 = vsub.s32 1, %v660
  %v662 = vrot.slane %v653, %v661
  %v665 = vmul.f32 %v629, %v658
  %v666 = vmul.f32 %v631, %v662
  %668 = vset.pattern.permute.xlu0 0
  %669 = vperm.xlu0 %668, %v665
  %v670 = vpop.permute.xlu0 %669
  %673 = vset.pattern.permute.xlu0 0
  %674 = vperm.xlu0 %673, %v666
  %v675 = vpop.permute.xlu0 %674
  %v677 = vmul.f32 %v670, %v408
  %v678 = vmul.f32 %v675, %v409
  %vm679 = vcmask 130112
  %v680 = vsel %vm679, %v677, 0.0
  %v681 = vrot.slane %v680, 4
  %v682 = vadd.f32 %v680, %v681
  %v683 = vrot.slane %v682, 2
  %v684 = vadd.f32 %v682, %v683
  %v685 = vrot.slane %v684, 1
  %v686 = vadd.f32 %v684, %v685
  %v687 = vsel %vm679, %v678, 0.0
  %v688 = vrot.slane %v687, 4
  %v689 = vadd.f32 %v687, %v688
  %v690 = vrot.slane %v689, 2
  %v691 = vadd.f32 %v689, %v690
  %v692 = vrot.slane %v691, 1
  %v693 = vadd.f32 %v691, %v692
  %v696 = vsel %vm493, %v693, %v686
  %697 = vrot.lane.b32.xlu0 %v696, 120
  %v698 = vpop.permute.xlu0 %697
  %v699 = vsel %vm449, %v698, 0
  %701 = vmatprep.subr.mxu0 0.0
  %702 = vmatpush1.msra.mxu0 %v411
  %703 = vmatprep.subr.mxu0 0.0
  %704 = vmatpush1.msra.mxu0 0.0
  %705 = vmatprep.subr.mxu0 0.0
  %706 = vmatpush1.msra.mxu0 0.0
  %707 = vmatprep.subr.mxu0 0.0
  %708 = vmatpush1.msra.mxu0 0.0
  %709 = vmatprep.subr.mxu0 0.0
  %710 = vmatpush1.msra.mxu0 0.0
  %711 = vmatprep.subr.mxu0 0.0
  %712 = vmatpush1.msra.mxu0 0.0
  %713 = vmatprep.subr.mxu0 0.0
  %714 = vmatpush1.msra.mxu0 0.0
  %715 = vmatprep.subr.mxu0 0.0
  %716 = vmatpush1.msra.mxu0 0.0
  %717 = vmatprep.subr.mxu0 0.0
  %718 = vmatpush1.msra.mxu0 0.0
  %719 = vmatprep.subr.mxu0 0.0
  %720 = vmatpush1.msra.mxu0 0.0
  %721 = vmatprep.subr.mxu0 0.0
  %722 = vmatpush1.msra.mxu0 0.0
  %723 = vmatprep.subr.mxu0 0.0
  %724 = vmatpush1.msra.mxu0 0.0
  %725 = vmatprep.subr.mxu0 0.0
  %726 = vmatpush1.msra.mxu0 0.0
  %727 = vmatprep.subr.mxu0 0.0
  %728 = vmatpush1.msra.mxu0 0.0
  %729 = vmatprep.subr.mxu0 0.0
  %730 = vmatpush1.msra.mxu0 0.0
  %731 = vmatprep.subr.mxu0 0.0
  %732 = vmatpush1.msra.mxu0 0.0
  %733 = vmatprep.subr.mxu0 0.0
  %734 = vmatpush1.msra.mxu0 0.0
  %735 = vmatprep.subr.mxu0 0.0
  %736 = vmatpush1.msra.mxu0 0.0
  %737 = vmatprep.subr.mxu0 0.0
  %738 = vmatpush1.msra.mxu0 0.0
  %739 = vmatprep.subr.mxu0 0.0
  %740 = vmatpush1.msra.mxu0 0.0
  %741 = vmatprep.subr.mxu0 0.0
  %742 = vmatpush1.msra.mxu0 0.0
  %743 = vmatprep.subr.mxu0 0.0
  %744 = vmatpush1.msra.mxu0 0.0
  %745 = vmatprep.subr.mxu0 0.0
  %746 = vmatpush1.msra.mxu0 0.0
  %747 = vmatprep.subr.mxu0 0.0
  %748 = vmatpush1.msra.mxu0 0.0
  %749 = vmatprep.subr.mxu0 0.0
  %750 = vmatpush1.msra.mxu0 0.0
  %751 = vmatprep.subr.mxu0 0.0
  %752 = vmatpush1.msra.mxu0 0.0
  %753 = vmatprep.subr.mxu0 0.0
  %754 = vmatpush1.msra.mxu0 0.0
  %755 = vmatprep.subr.mxu0 0.0
  %756 = vmatpush1.msra.mxu0 0.0
  %757 = vmatprep.subr.mxu0 0.0
  %758 = vmatpush1.msra.mxu0 0.0
  %759 = vmatprep.subr.mxu0 0.0
  %760 = vmatpush1.msra.mxu0 0.0
  %761 = vmatprep.subr.mxu0 0.0
  %762 = vmatpush1.msra.mxu0 0.0
  %763 = vmatprep.subr.mxu0 0.0
  %764 = vmatpush1.msra.mxu0 0.0
  %765 = vmatprep.mubr.f32.mxu0 0.0
  %766 = vmatmul.mubr.f32.gmra.mrb[0].mxu0 %v699
  %v767 = vpop.f32.mrb[0].mxu0
  %v768 = vadd.f32 0.0, %v767
  %v769 = vpop.f32.mrb[0].mxu0
  %770 = vdwg.mxu0
  %v773 = vsel %vm493, %v577, %v570
  %v774 = vsel %vm449, %v773, 0
  %776 = vmatprep.subr.mxu0 0.0
  %777 = vmatpush1.msra.mxu0 %v410
  %778 = vmatprep.subr.mxu0 0.0
  %779 = vmatpush1.msra.mxu0 0.0
  %780 = vmatprep.subr.mxu0 0.0
  %781 = vmatpush1.msra.mxu0 0.0
  %782 = vmatprep.subr.mxu0 0.0
  %783 = vmatpush1.msra.mxu0 0.0
  %784 = vmatprep.subr.mxu0 0.0
  %785 = vmatpush1.msra.mxu0 0.0
  %786 = vmatprep.subr.mxu0 0.0
  %787 = vmatpush1.msra.mxu0 0.0
  %788 = vmatprep.subr.mxu0 0.0
  %789 = vmatpush1.msra.mxu0 0.0
  %790 = vmatprep.subr.mxu0 0.0
  %791 = vmatpush1.msra.mxu0 0.0
  %792 = vmatprep.subr.mxu0 0.0
  %793 = vmatpush1.msra.mxu0 0.0
  %794 = vmatprep.subr.mxu0 0.0
  %795 = vmatpush1.msra.mxu0 0.0
  %796 = vmatprep.subr.mxu0 0.0
  %797 = vmatpush1.msra.mxu0 0.0
  %798 = vmatprep.subr.mxu0 0.0
  %799 = vmatpush1.msra.mxu0 0.0
  %800 = vmatprep.subr.mxu0 0.0
  %801 = vmatpush1.msra.mxu0 0.0
  %802 = vmatprep.subr.mxu0 0.0
  %803 = vmatpush1.msra.mxu0 0.0
  %804 = vmatprep.subr.mxu0 0.0
  %805 = vmatpush1.msra.mxu0 0.0
  %806 = vmatprep.subr.mxu0 0.0
  %807 = vmatpush1.msra.mxu0 0.0
  %808 = vmatprep.subr.mxu0 0.0
  %809 = vmatpush1.msra.mxu0 0.0
  %810 = vmatprep.subr.mxu0 0.0
  %811 = vmatpush1.msra.mxu0 0.0
  %812 = vmatprep.subr.mxu0 0.0
  %813 = vmatpush1.msra.mxu0 0.0
  %814 = vmatprep.subr.mxu0 0.0
  %815 = vmatpush1.msra.mxu0 0.0
  %816 = vmatprep.subr.mxu0 0.0
  %817 = vmatpush1.msra.mxu0 0.0
  %818 = vmatprep.subr.mxu0 0.0
  %819 = vmatpush1.msra.mxu0 0.0
  %820 = vmatprep.subr.mxu0 0.0
  %821 = vmatpush1.msra.mxu0 0.0
  %822 = vmatprep.subr.mxu0 0.0
  %823 = vmatpush1.msra.mxu0 0.0
  %824 = vmatprep.subr.mxu0 0.0
  %825 = vmatpush1.msra.mxu0 0.0
  %826 = vmatprep.subr.mxu0 0.0
  %827 = vmatpush1.msra.mxu0 0.0
  %828 = vmatprep.subr.mxu0 0.0
  %829 = vmatpush1.msra.mxu0 0.0
  %830 = vmatprep.subr.mxu0 0.0
  %831 = vmatpush1.msra.mxu0 0.0
  %832 = vmatprep.subr.mxu0 0.0
  %833 = vmatpush1.msra.mxu0 0.0
  %834 = vmatprep.subr.mxu0 0.0
  %835 = vmatpush1.msra.mxu0 0.0
  %836 = vmatprep.subr.mxu0 0.0
  %837 = vmatpush1.msra.mxu0 0.0
  %838 = vmatprep.subr.mxu0 0.0
  %839 = vmatpush1.msra.mxu0 0.0
  %840 = vmatprep.mubr.f32.mxu0 0.0
  %841 = vmatmul.mubr.f32.gmra.mrb[0].mxu0 %v774
  %v842 = vpop.f32.mrb[0].mxu0
  %v843 = vadd.f32 %v768, %v842
  %v844 = vpop.f32.mrb[0].mxu0
  %845 = vdwg.mxu0
  %846 = vrot.lane.b32.xlu0 %v447, 112
  %v847 = vpop.permute.xlu0 %846
  %848 = vrot.lane.b32.xlu0 %v448, 112
  %v849 = vpop.permute.xlu0 %848
  %v852 = vsel %vm449, %v847, 0.0
  %853 = vadd.xlane.f32.xlu0 %v852
  %v854 = vpop.xlane.xlu0 %853
  %v855 = vsel %vm449, %v849, 0.0
  %856 = vadd.xlane.f32.xlu0 %v855
  %v857 = vpop.xlane.xlu0 %856
  %v858 = vadd.f32 %v854, %v463
  %v859 = vadd.f32 %v857, %v470
  %862 = vset.pattern.permute.xlu0 0
  %863 = vperm.xlu0 %862, %v858
  %v864 = vpop.permute.xlu0 %863
  %865 = vset.pattern.permute.xlu0 0
  %866 = vperm.xlu0 %865, %v859
  %v867 = vpop.permute.xlu0 %866
  %v868 = vlaneseq
  %v869 = vshrl.u32 %v868, 7
  %v870 = vsub.s32 %v484, %v869
  %v871 = vrot.slane %v864, %v870
  %v872 = vlaneseq
  %v873 = vshrl.u32 %v872, 7
  %v874 = vsub.s32 %v484, %v873
  %v875 = vrot.slane %v867, %v874
  %v876 = vsel %vm493, %v875, %v871
  %v878 = vsel %vm496, %v876, -inf
  %879 = vmax.xlane.f32.xlu0 %v878
  %v880 = vpop.xlane.xlu0 %879
  %v882 = vlaneseq
  %v883 = vshrl.u32 %v882, 7
  %v884 = vsub.s32 0, %v883
  %v885 = vrot.slane %v880, %v884
  %v886 = vlaneseq
  %v887 = vshrl.u32 %v886, 7
  %v888 = vsub.s32 1, %v887
  %v889 = vrot.slane %v880, %v888
  %v892 = vsub.f32 %v858, %v885
  %v893 = vsub.f32 %v859, %v889
  %v894 = vmul.f32 %v892, 1.442695
  %v895 = vpow.pop %v894
  %v896 = vmul.f32 %v893, 1.442695
  %v897 = vpow.pop %v896
  %900 = vset.pattern.permute.xlu0 0
  %901 = vperm.xlu0 %900, %v895
  %v902 = vpop.permute.xlu0 %901
  %903 = vset.pattern.permute.xlu0 0
  %904 = vperm.xlu0 %903, %v897
  %v905 = vpop.permute.xlu0 %904
  %v906 = vlaneseq
  %v907 = vshrl.u32 %v906, 7
  %v908 = vsub.s32 %v484, %v907
  %v909 = vrot.slane %v902, %v908
  %v910 = vlaneseq
  %v911 = vshrl.u32 %v910, 7
  %v912 = vsub.s32 %v484, %v911
  %v913 = vrot.slane %v905, %v912
  %v914 = vsel %vm493, %v913, %v909
  %v916 = vsel %vm496, %v914, 0.0
  %917 = vadd.xlane.f32.xlu0 %v916
  %v918 = vpop.xlane.xlu0 %917
  %v919 = vrcp.pop %v918
  %v921 = vlaneseq
  %v922 = vshrl.u32 %v921, 7
  %v923 = vsub.s32 0, %v922
  %v924 = vrot.slane %v919, %v923
  %v925 = vlaneseq
  %v926 = vshrl.u32 %v925, 7
  %v927 = vsub.s32 1, %v926
  %v928 = vrot.slane %v919, %v927
  %v931 = vmul.f32 %v895, %v924
  %v932 = vmul.f32 %v897, %v928
  %934 = vset.pattern.permute.xlu0 0
  %935 = vperm.xlu0 %934, %v931
  %v936 = vpop.permute.xlu0 %935
  %939 = vset.pattern.permute.xlu0 0
  %940 = vperm.xlu0 %939, %v932
  %v941 = vpop.permute.xlu0 %940
  %v943 = vmul.f32 %v936, %v408
  %v944 = vmul.f32 %v941, %v409
  %vm945 = vcmask 195712
  %v946 = vsel %vm945, %v943, 0.0
  %v947 = vrot.slane %v946, 4
  %v948 = vadd.f32 %v946, %v947
  %v949 = vrot.slane %v948, 2
  %v950 = vadd.f32 %v948, %v949
  %v951 = vrot.slane %v950, 1
  %v952 = vadd.f32 %v950, %v951
  %v953 = vsel %vm945, %v944, 0.0
  %v954 = vrot.slane %v953, 4
  %v955 = vadd.f32 %v953, %v954
  %v956 = vrot.slane %v955, 2
  %v957 = vadd.f32 %v955, %v956
  %v958 = vrot.slane %v957, 1
  %v959 = vadd.f32 %v957, %v958
  %v962 = vsel %vm493, %v959, %v952
  %963 = vrot.lane.b32.xlu0 %v962, 112
  %v964 = vpop.permute.xlu0 %963
  %v965 = vsel %vm449, %v964, 0
  %967 = vmatprep.subr.mxu0 0.0
  %968 = vmatpush1.msra.mxu0 %v412
  %969 = vmatprep.subr.mxu0 0.0
  %970 = vmatpush1.msra.mxu0 0.0
  %971 = vmatprep.subr.mxu0 0.0
  %972 = vmatpush1.msra.mxu0 0.0
  %973 = vmatprep.subr.mxu0 0.0
  %974 = vmatpush1.msra.mxu0 0.0
  %975 = vmatprep.subr.mxu0 0.0
  %976 = vmatpush1.msra.mxu0 0.0
  %977 = vmatprep.subr.mxu0 0.0
  %978 = vmatpush1.msra.mxu0 0.0
  %979 = vmatprep.subr.mxu0 0.0
  %980 = vmatpush1.msra.mxu0 0.0
  %981 = vmatprep.subr.mxu0 0.0
  %982 = vmatpush1.msra.mxu0 0.0
  %983 = vmatprep.subr.mxu0 0.0
  %984 = vmatpush1.msra.mxu0 0.0
  %985 = vmatprep.subr.mxu0 0.0
  %986 = vmatpush1.msra.mxu0 0.0
  %987 = vmatprep.subr.mxu0 0.0
  %988 = vmatpush1.msra.mxu0 0.0
  %989 = vmatprep.subr.mxu0 0.0
  %990 = vmatpush1.msra.mxu0 0.0
  %991 = vmatprep.subr.mxu0 0.0
  %992 = vmatpush1.msra.mxu0 0.0
  %993 = vmatprep.subr.mxu0 0.0
  %994 = vmatpush1.msra.mxu0 0.0
  %995 = vmatprep.subr.mxu0 0.0
  %996 = vmatpush1.msra.mxu0 0.0
  %997 = vmatprep.subr.mxu0 0.0
  %998 = vmatpush1.msra.mxu0 0.0
  %999 = vmatprep.subr.mxu0 0.0
  %1000 = vmatpush1.msra.mxu0 0.0
  %1001 = vmatprep.subr.mxu0 0.0
  %1002 = vmatpush1.msra.mxu0 0.0
  %1003 = vmatprep.subr.mxu0 0.0
  %1004 = vmatpush1.msra.mxu0 0.0
  %1005 = vmatprep.subr.mxu0 0.0
  %1006 = vmatpush1.msra.mxu0 0.0
  %1007 = vmatprep.subr.mxu0 0.0
  %1008 = vmatpush1.msra.mxu0 0.0
  %1009 = vmatprep.subr.mxu0 0.0
  %1010 = vmatpush1.msra.mxu0 0.0
  %1011 = vmatprep.subr.mxu0 0.0
  %1012 = vmatpush1.msra.mxu0 0.0
  %1013 = vmatprep.subr.mxu0 0.0
  %1014 = vmatpush1.msra.mxu0 0.0
  %1015 = vmatprep.subr.mxu0 0.0
  %1016 = vmatpush1.msra.mxu0 0.0
  %1017 = vmatprep.subr.mxu0 0.0
  %1018 = vmatpush1.msra.mxu0 0.0
  %1019 = vmatprep.subr.mxu0 0.0
  %1020 = vmatpush1.msra.mxu0 0.0
  %1021 = vmatprep.subr.mxu0 0.0
  %1022 = vmatpush1.msra.mxu0 0.0
  %1023 = vmatprep.subr.mxu0 0.0
  %1024 = vmatpush1.msra.mxu0 0.0
  %1025 = vmatprep.subr.mxu0 0.0
  %1026 = vmatpush1.msra.mxu0 0.0
  %1027 = vmatprep.subr.mxu0 0.0
  %1028 = vmatpush1.msra.mxu0 0.0
  %1029 = vmatprep.subr.mxu0 0.0
  %1030 = vmatpush1.msra.mxu0 0.0
  %1031 = vmatprep.mubr.f32.mxu0 0.0
  %1032 = vmatmul.mubr.f32.gmra.mrb[0].mxu0 %v965
  %v1033 = vpop.f32.mrb[0].mxu0
  %v1034 = vadd.f32 0.0, %v1033
  %v1035 = vpop.f32.mrb[0].mxu0
  %1036 = vdwg.mxu0
  %v1037 = vadd.f32 %v843, %v1034
  %1038 = vrot.lane.b32.xlu0 %v447, 104
  %v1039 = vpop.permute.xlu0 %1038
  %1040 = vrot.lane.b32.xlu0 %v448, 104
  %v1041 = vpop.permute.xlu0 %1040
  %v1044 = vsel %vm449, %v1039, 0.0
  %1045 = vadd.xlane.f32.xlu0 %v1044
  %v1046 = vpop.xlane.xlu0 %1045
  %v1047 = vsel %vm449, %v1041, 0.0
  %1048 = vadd.xlane.f32.xlu0 %v1047
  %v1049 = vpop.xlane.xlu0 %1048
  %v1050 = vadd.f32 %v1046, %v463
  %v1051 = vadd.f32 %v1049, %v470
  %1054 = vset.pattern.permute.xlu0 0
  %1055 = vperm.xlu0 %1054, %v1050
  %v1056 = vpop.permute.xlu0 %1055
  %1057 = vset.pattern.permute.xlu0 0
  %1058 = vperm.xlu0 %1057, %v1051
  %v1059 = vpop.permute.xlu0 %1058
  %v1060 = vlaneseq
  %v1061 = vshrl.u32 %v1060, 7
  %v1062 = vsub.s32 %v484, %v1061
  %v1063 = vrot.slane %v1056, %v1062
  %v1064 = vlaneseq
  %v1065 = vshrl.u32 %v1064, 7
  %v1066 = vsub.s32 %v484, %v1065
  %v1067 = vrot.slane %v1059, %v1066
  %v1068 = vsel %vm493, %v1067, %v1063
  %v1070 = vsel %vm496, %v1068, -inf
  %1071 = vmax.xlane.f32.xlu0 %v1070
  %v1072 = vpop.xlane.xlu0 %1071
  %v1074 = vlaneseq
  %v1075 = vshrl.u32 %v1074, 7
  %v1076 = vsub.s32 0, %v1075
  %v1077 = vrot.slane %v1072, %v1076
  %v1078 = vlaneseq
  %v1079 = vshrl.u32 %v1078, 7
  %v1080 = vsub.s32 1, %v1079
  %v1081 = vrot.slane %v1072, %v1080
  %v1084 = vsub.f32 %v1050, %v1077
  %v1085 = vsub.f32 %v1051, %v1081
  %v1086 = vmul.f32 %v1084, 1.442695
  %v1087 = vpow.pop %v1086
  %v1088 = vmul.f32 %v1085, 1.442695
  %v1089 = vpow.pop %v1088
  %1092 = vset.pattern.permute.xlu0 0
  %1093 = vperm.xlu0 %1092, %v1087
  %v1094 = vpop.permute.xlu0 %1093
  %1095 = vset.pattern.permute.xlu0 0
  %1096 = vperm.xlu0 %1095, %v1089
  %v1097 = vpop.permute.xlu0 %1096
  %v1098 = vlaneseq
  %v1099 = vshrl.u32 %v1098, 7
  %v1100 = vsub.s32 %v484, %v1099
  %v1101 = vrot.slane %v1094, %v1100
  %v1102 = vlaneseq
  %v1103 = vshrl.u32 %v1102, 7
  %v1104 = vsub.s32 %v484, %v1103
  %v1105 = vrot.slane %v1097, %v1104
  %v1106 = vsel %vm493, %v1105, %v1101
  %v1108 = vsel %vm496, %v1106, 0.0
  %1109 = vadd.xlane.f32.xlu0 %v1108
  %v1110 = vpop.xlane.xlu0 %1109
  %v1111 = vrcp.pop %v1110
  %v1113 = vlaneseq
  %v1114 = vshrl.u32 %v1113, 7
  %v1115 = vsub.s32 0, %v1114
  %v1116 = vrot.slane %v1111, %v1115
  %v1117 = vlaneseq
  %v1118 = vshrl.u32 %v1117, 7
  %v1119 = vsub.s32 1, %v1118
  %v1120 = vrot.slane %v1111, %v1119
  %v1123 = vmul.f32 %v1087, %v1116
  %v1124 = vmul.f32 %v1089, %v1120
  %1126 = vset.pattern.permute.xlu0 0
  %1127 = vperm.xlu0 %1126, %v1123
  %v1128 = vpop.permute.xlu0 %1127
  %1131 = vset.pattern.permute.xlu0 0
  %1132 = vperm.xlu0 %1131, %v1124
  %v1133 = vpop.permute.xlu0 %1132
  %v1135 = vmul.f32 %v1128, %v408
  %v1136 = vmul.f32 %v1133, %v409
  %vm1137 = vcmask 261312
  %v1138 = vsel %vm1137, %v1135, 0.0
  %v1139 = vrot.slane %v1138, 4
  %v1140 = vadd.f32 %v1138, %v1139
  %v1141 = vrot.slane %v1140, 2
  %v1142 = vadd.f32 %v1140, %v1141
  %v1143 = vrot.slane %v1142, 1
  %v1144 = vadd.f32 %v1142, %v1143
  %v1145 = vsel %vm1137, %v1136, 0.0
  %v1146 = vrot.slane %v1145, 4
  %v1147 = vadd.f32 %v1145, %v1146
  %v1148 = vrot.slane %v1147, 2
  %v1149 = vadd.f32 %v1147, %v1148
  %v1150 = vrot.slane %v1149, 1
  %v1151 = vadd.f32 %v1149, %v1150
  %v1154 = vsel %vm493, %v1151, %v1144
  %1155 = vrot.lane.b32.xlu0 %v1154, 104
  %v1156 = vpop.permute.xlu0 %1155
  %v1157 = vsel %vm449, %v1156, 0
  %1159 = vmatprep.subr.mxu0 0.0
  %1160 = vmatpush1.msra.mxu0 %v413
  %1161 = vmatprep.subr.mxu0 0.0
  %1162 = vmatpush1.msra.mxu0 0.0
  %1163 = vmatprep.subr.mxu0 0.0
  %1164 = vmatpush1.msra.mxu0 0.0
  %1165 = vmatprep.subr.mxu0 0.0
  %1166 = vmatpush1.msra.mxu0 0.0
  %1167 = vmatprep.subr.mxu0 0.0
  %1168 = vmatpush1.msra.mxu0 0.0
  %1169 = vmatprep.subr.mxu0 0.0
  %1170 = vmatpush1.msra.mxu0 0.0
  %1171 = vmatprep.subr.mxu0 0.0
  %1172 = vmatpush1.msra.mxu0 0.0
  %1173 = vmatprep.subr.mxu0 0.0
  %1174 = vmatpush1.msra.mxu0 0.0
  %1175 = vmatprep.subr.mxu0 0.0
  %1176 = vmatpush1.msra.mxu0 0.0
  %1177 = vmatprep.subr.mxu0 0.0
  %1178 = vmatpush1.msra.mxu0 0.0
  %1179 = vmatprep.subr.mxu0 0.0
  %1180 = vmatpush1.msra.mxu0 0.0
  %1181 = vmatprep.subr.mxu0 0.0
  %1182 = vmatpush1.msra.mxu0 0.0
  %1183 = vmatprep.subr.mxu0 0.0
  %1184 = vmatpush1.msra.mxu0 0.0
  %1185 = vmatprep.subr.mxu0 0.0
  %1186 = vmatpush1.msra.mxu0 0.0
  %1187 = vmatprep.subr.mxu0 0.0
  %1188 = vmatpush1.msra.mxu0 0.0
  %1189 = vmatprep.subr.mxu0 0.0
  %1190 = vmatpush1.msra.mxu0 0.0
  %1191 = vmatprep.subr.mxu0 0.0
  %1192 = vmatpush1.msra.mxu0 0.0
  %1193 = vmatprep.subr.mxu0 0.0
  %1194 = vmatpush1.msra.mxu0 0.0
  %1195 = vmatprep.subr.mxu0 0.0
  %1196 = vmatpush1.msra.mxu0 0.0
  %1197 = vmatprep.subr.mxu0 0.0
  %1198 = vmatpush1.msra.mxu0 0.0
  %1199 = vmatprep.subr.mxu0 0.0
  %1200 = vmatpush1.msra.mxu0 0.0
  %1201 = vmatprep.subr.mxu0 0.0
  %1202 = vmatpush1.msra.mxu0 0.0
  %1203 = vmatprep.subr.mxu0 0.0
  %1204 = vmatpush1.msra.mxu0 0.0
  %1205 = vmatprep.subr.mxu0 0.0
  %1206 = vmatpush1.msra.mxu0 0.0
  %1207 = vmatprep.subr.mxu0 0.0
  %1208 = vmatpush1.msra.mxu0 0.0
  %1209 = vmatprep.subr.mxu0 0.0
  %1210 = vmatpush1.msra.mxu0 0.0
  %1211 = vmatprep.subr.mxu0 0.0
  %1212 = vmatpush1.msra.mxu0 0.0
  %1213 = vmatprep.subr.mxu0 0.0
  %1214 = vmatpush1.msra.mxu0 0.0
  %1215 = vmatprep.subr.mxu0 0.0
  %1216 = vmatpush1.msra.mxu0 0.0
  %1217 = vmatprep.subr.mxu0 0.0
  %1218 = vmatpush1.msra.mxu0 0.0
  %1219 = vmatprep.subr.mxu0 0.0
  %1220 = vmatpush1.msra.mxu0 0.0
  %1221 = vmatprep.subr.mxu0 0.0
  %1222 = vmatpush1.msra.mxu0 0.0
  %1223 = vmatprep.mubr.f32.mxu0 0.0
  %1224 = vmatmul.mubr.f32.gmra.mrb[0].mxu0 %v1157
  %v1225 = vpop.f32.mrb[0].mxu0
  %v1226 = vadd.f32 0.0, %v1225
  %v1227 = vpop.f32.mrb[0].mxu0
  %1228 = vdwg.mxu0
  %v1229 = vadd.f32 %v1037, %v1226
  %v1230 = vld [vmem:[%s11] sm:$0x1]
  %v1232 = vlaneseq
  %v1233 = vshrl.u32 %v1232, 7
  %v1234 = vsub.s32 0, %v1233
  %v1235 = vrot.slane %v1230, %v1234
  %v1237 = vadd.f32 %v1229, %v1235
  %v1238 = vadd.f32 %v320, %v1237
  %v1239 = vmul.f32 %v1238, 0.999995
  %v1240 = vld [vmem:[%s14] sm:$0xff]
  %v1241 = vld [vmem:[%s14 + $0x8] sm:$0xff]
  %v1242 = vld [vmem:[%s14 + $0x10] sm:$0xff]
  %v1243 = vld [vmem:[%s14 + $0x18] sm:$0xff]
  %v1244 = vld [vmem:[%s15] sm:$0x1]
  %v1246 = vlaneseq
  %v1247 = vshrl.u32 %v1246, 7
  %v1248 = vsub.s32 0, %v1247
  %v1249 = vrot.slane %v1244, %v1248
  %v1252 = vsel %vm76, %v1239, 0
  %1254 = vmatprep.subr.mxu0 0.0
  %1255 = vmatpush1.msra.mxu0 %v1240
  %1256 = vmatprep.subr.mxu0 0.0
  %1257 = vmatpush1.msra.mxu0 %v1241
  %1258 = vmatprep.subr.mxu0 0.0
  %1259 = vmatpush1.msra.mxu0 %v1242
  %1260 = vmatprep.subr.mxu0 0.0
  %1261 = vmatpush1.msra.mxu0 %v1243
  %1262 = vmatprep.subr.mxu0 0.0
  %1263 = vmatpush1.msra.mxu0 0.0
  %1264 = vmatprep.subr.mxu0 0.0
  %1265 = vmatpush1.msra.mxu0 0.0
  %1266 = vmatprep.subr.mxu0 0.0
  %1267 = vmatpush1.msra.mxu0 0.0
  %1268 = vmatprep.subr.mxu0 0.0
  %1269 = vmatpush1.msra.mxu0 0.0
  %1270 = vmatprep.subr.mxu0 0.0
  %1271 = vmatpush1.msra.mxu0 0.0
  %1272 = vmatprep.subr.mxu0 0.0
  %1273 = vmatpush1.msra.mxu0 0.0
  %1274 = vmatprep.subr.mxu0 0.0
  %1275 = vmatpush1.msra.mxu0 0.0
  %1276 = vmatprep.subr.mxu0 0.0
  %1277 = vmatpush1.msra.mxu0 0.0
  %1278 = vmatprep.subr.mxu0 0.0
  %1279 = vmatpush1.msra.mxu0 0.0
  %1280 = vmatprep.subr.mxu0 0.0
  %1281 = vmatpush1.msra.mxu0 0.0
  %1282 = vmatprep.subr.mxu0 0.0
  %1283 = vmatpush1.msra.mxu0 0.0
  %1284 = vmatprep.subr.mxu0 0.0
  %1285 = vmatpush1.msra.mxu0 0.0
  %1286 = vmatprep.subr.mxu0 0.0
  %1287 = vmatpush1.msra.mxu0 0.0
  %1288 = vmatprep.subr.mxu0 0.0
  %1289 = vmatpush1.msra.mxu0 0.0
  %1290 = vmatprep.subr.mxu0 0.0
  %1291 = vmatpush1.msra.mxu0 0.0
  %1292 = vmatprep.subr.mxu0 0.0
  %1293 = vmatpush1.msra.mxu0 0.0
  %1294 = vmatprep.subr.mxu0 0.0
  %1295 = vmatpush1.msra.mxu0 0.0
  %1296 = vmatprep.subr.mxu0 0.0
  %1297 = vmatpush1.msra.mxu0 0.0
  %1298 = vmatprep.subr.mxu0 0.0
  %1299 = vmatpush1.msra.mxu0 0.0
  %1300 = vmatprep.subr.mxu0 0.0
  %1301 = vmatpush1.msra.mxu0 0.0
  %1302 = vmatprep.subr.mxu0 0.0
  %1303 = vmatpush1.msra.mxu0 0.0
  %1304 = vmatprep.subr.mxu0 0.0
  %1305 = vmatpush1.msra.mxu0 0.0
  %1306 = vmatprep.subr.mxu0 0.0
  %1307 = vmatpush1.msra.mxu0 0.0
  %1308 = vmatprep.subr.mxu0 0.0
  %1309 = vmatpush1.msra.mxu0 0.0
  %1310 = vmatprep.subr.mxu0 0.0
  %1311 = vmatpush1.msra.mxu0 0.0
  %1312 = vmatprep.subr.mxu0 0.0
  %1313 = vmatpush1.msra.mxu0 0.0
  %1314 = vmatprep.subr.mxu0 0.0
  %1315 = vmatpush1.msra.mxu0 0.0
  %1316 = vmatprep.subr.mxu0 0.0
  %1317 = vmatpush1.msra.mxu0 0.0
  %1318 = vmatprep.mubr.f32.mxu0 0.0
  %1319 = vmatmul.mubr.f32.gmra.mrb[0].mxu0 %v1252
  %v1320 = vpop.f32.mrb[0].mxu0
  %v1321 = vadd.f32 %v1249, %v1320
  %v1322 = vpop.f32.mrb[0].mxu0
  %1323 = vdwg.mxu0
  %v1324 = vmax.f32 %v1321, 0.0
  %v1325 = vld [vmem:[%s16] sm:$0xff]
  %v1326 = vld [vmem:[%s16 + $0x8] sm:$0xff]
  %v1327 = vld [vmem:[%s16 + $0x10] sm:$0xff]
  %v1328 = vld [vmem:[%s16 + $0x18] sm:$0xff]
  %v1329 = vld [vmem:[%s16 + $0x20] sm:$0xff]
  %v1330 = vld [vmem:[%s16 + $0x28] sm:$0xff]
  %v1331 = vld [vmem:[%s16 + $0x30] sm:$0xff]
  %v1332 = vld [vmem:[%s16 + $0x38] sm:$0xff]
  %v1333 = vld [vmem:[%s17] sm:$0x1]
  %v1335 = vlaneseq
  %v1336 = vshrl.u32 %v1335, 7
  %v1337 = vsub.s32 0, %v1336
  %v1338 = vrot.slane %v1333, %v1337
  %vm1340 = vcmask 523264
  %v1342 = vsel %vm1340, %v1324, 0
  %1344 = vmatprep.subr.mxu0 0.0
  %1345 = vmatpush1.msra.mxu0 %v1325
  %1346 = vmatprep.subr.mxu0 0.0
  %1347 = vmatpush1.msra.mxu0 %v1326
  %1348 = vmatprep.subr.mxu0 0.0
  %1349 = vmatpush1.msra.mxu0 %v1327
  %1350 = vmatprep.subr.mxu0 0.0
  %1351 = vmatpush1.msra.mxu0 %v1328
  %1352 = vmatprep.subr.mxu0 0.0
  %1353 = vmatpush1.msra.mxu0 %v1329
  %1354 = vmatprep.subr.mxu0 0.0
  %1355 = vmatpush1.msra.mxu0 %v1330
  %1356 = vmatprep.subr.mxu0 0.0
  %1357 = vmatpush1.msra.mxu0 %v1331
  %1358 = vmatprep.subr.mxu0 0.0
  %1359 = vmatpush1.msra.mxu0 %v1332
  %1360 = vmatprep.subr.mxu0 0.0
  %1361 = vmatpush1.msra.mxu0 0.0
  %1362 = vmatprep.subr.mxu0 0.0
  %1363 = vmatpush1.msra.mxu0 0.0
  %1364 = vmatprep.subr.mxu0 0.0
  %1365 = vmatpush1.msra.mxu0 0.0
  %1366 = vmatprep.subr.mxu0 0.0
  %1367 = vmatpush1.msra.mxu0 0.0
  %1368 = vmatprep.subr.mxu0 0.0
  %1369 = vmatpush1.msra.mxu0 0.0
  %1370 = vmatprep.subr.mxu0 0.0
  %1371 = vmatpush1.msra.mxu0 0.0
  %1372 = vmatprep.subr.mxu0 0.0
  %1373 = vmatpush1.msra.mxu0 0.0
  %1374 = vmatprep.subr.mxu0 0.0
  %1375 = vmatpush1.msra.mxu0 0.0
  %1376 = vmatprep.subr.mxu0 0.0
  %1377 = vmatpush1.msra.mxu0 0.0
  %1378 = vmatprep.subr.mxu0 0.0
  %1379 = vmatpush1.msra.mxu0 0.0
  %1380 = vmatprep.subr.mxu0 0.0
  %1381 = vmatpush1.msra.mxu0 0.0
  %1382 = vmatprep.subr.mxu0 0.0
  %1383 = vmatpush1.msra.mxu0 0.0
  %1384 = vmatprep.subr.mxu0 0.0
  %1385 = vmatpush1.msra.mxu0 0.0
  %1386 = vmatprep.subr.mxu0 0.0
  %1387 = vmatpush1.msra.mxu0 0.0
  %1388 = vmatprep.subr.mxu0 0.0
  %1389 = vmatpush1.msra.mxu0 0.0
  %1390 = vmatprep.subr.mxu0 0.0
  %1391 = vmatpush1.msra.mxu0 0.0
  %1392 = vmatprep.subr.mxu0 0.0
  %1393 = vmatpush1.msra.mxu0 0.0
  %1394 = vmatprep.subr.mxu0 0.0
  %1395 = vmatpush1.msra.mxu0 0.0
  %1396 = vmatprep.subr.mxu0 0.0
  %1397 = vmatpush1.msra.mxu0 0.0
  %1398 = vmatprep.subr.mxu0 0.0
  %1399 = vmatpush1.msra.mxu0 0.0
  %1400 = vmatprep.subr.mxu0 0.0
  %1401 = vmatpush1.msra.mxu0 0.0
  %1402 = vmatprep.subr.mxu0 0.0
  %1403 = vmatpush1.msra.mxu0 0.0
  %1404 = vmatprep.subr.mxu0 0.0
  %1405 = vmatpush1.msra.mxu0 0.0
  %1406 = vmatprep.subr.mxu0 0.0
  %1407 = vmatpush1.msra.mxu0 0.0
  %1408 = vmatprep.mubr.f32.mxu0 0.0
  %1409 = vmatmul.mubr.f32.gmra.mrb[0].mxu0 %v1342
  %v1410 = vpop.f32.mrb[0].mxu0
  %v1411 = vadd.f32 %v1338, %v1410
  %v1412 = vpop.f32.mrb[0].mxu0
  %1413 = vdwg.mxu0
  %v1414 = vadd.f32 %v1239, %v1411
  %v1415 = vmul.f32 %v1414, 0.999995
  %v1416 = vld [vmem:[%s18] sm:$0xff]
  %v1417 = vld [vmem:[%s18 + $0x8] sm:$0xff]
  %v1418 = vld [vmem:[%s18 + $0x10] sm:$0xff]
  %v1419 = vld [vmem:[%s18 + $0x18] sm:$0xff]
  %v1420 = vld [vmem:[%s19] sm:$0x1]
  %v1422 = vlaneseq
  %v1423 = vshrl.u32 %v1422, 7
  %v1424 = vsub.s32 0, %v1423
  %v1425 = vrot.slane %v1420, %v1424
  %v1428 = vsel %vm76, %v1415, 0
  %1430 = vmatprep.subr.mxu0 0.0
  %1431 = vmatpush1.msra.mxu0 %v1416
  %1432 = vmatprep.subr.mxu0 0.0
  %1433 = vmatpush1.msra.mxu0 %v1417
  %1434 = vmatprep.subr.mxu0 0.0
  %1435 = vmatpush1.msra.mxu0 %v1418
  %1436 = vmatprep.subr.mxu0 0.0
  %1437 = vmatpush1.msra.mxu0 %v1419
  %1438 = vmatprep.subr.mxu0 0.0
  %1439 = vmatpush1.msra.mxu0 0.0
  %1440 = vmatprep.subr.mxu0 0.0
  %1441 = vmatpush1.msra.mxu0 0.0
  %1442 = vmatprep.subr.mxu0 0.0
  %1443 = vmatpush1.msra.mxu0 0.0
  %1444 = vmatprep.subr.mxu0 0.0
  %1445 = vmatpush1.msra.mxu0 0.0
  %1446 = vmatprep.subr.mxu0 0.0
  %1447 = vmatpush1.msra.mxu0 0.0
  %1448 = vmatprep.subr.mxu0 0.0
  %1449 = vmatpush1.msra.mxu0 0.0
  %1450 = vmatprep.subr.mxu0 0.0
  %1451 = vmatpush1.msra.mxu0 0.0
  %1452 = vmatprep.subr.mxu0 0.0
  %1453 = vmatpush1.msra.mxu0 0.0
  %1454 = vmatprep.subr.mxu0 0.0
  %1455 = vmatpush1.msra.mxu0 0.0
  %1456 = vmatprep.subr.mxu0 0.0
  %1457 = vmatpush1.msra.mxu0 0.0
  %1458 = vmatprep.subr.mxu0 0.0
  %1459 = vmatpush1.msra.mxu0 0.0
  %1460 = vmatprep.subr.mxu0 0.0
  %1461 = vmatpush1.msra.mxu0 0.0
  %1462 = vmatprep.subr.mxu0 0.0
  %1463 = vmatpush1.msra.mxu0 0.0
  %1464 = vmatprep.subr.mxu0 0.0
  %1465 = vmatpush1.msra.mxu0 0.0
  %1466 = vmatprep.subr.mxu0 0.0
  %1467 = vmatpush1.msra.mxu0 0.0
  %1468 = vmatprep.subr.mxu0 0.0
  %1469 = vmatpush1.msra.mxu0 0.0
  %1470 = vmatprep.subr.mxu0 0.0
  %1471 = vmatpush1.msra.mxu0 0.0
  %1472 = vmatprep.subr.mxu0 0.0
  %1473 = vmatpush1.msra.mxu0 0.0
  %1474 = vmatprep.subr.mxu0 0.0
  %1475 = vmatpush1.msra.mxu0 0.0
  %1476 = vmatprep.subr.mxu0 0.0
  %1477 = vmatpush1.msra.mxu0 0.0
  %1478 = vmatprep.subr.mxu0 0.0
  %1479 = vmatpush1.msra.mxu0 0.0
  %1480 = vmatprep.subr.mxu0 0.0
  %1481 = vmatpush1.msra.mxu0 0.0
  %1482 = vmatprep.subr.mxu0 0.0
  %1483 = vmatpush1.msra.mxu0 0.0
  %1484 = vmatprep.subr.mxu0 0.0
  %1485 = vmatpush1.msra.mxu0 0.0
  %1486 = vmatprep.subr.mxu0 0.0
  %1487 = vmatpush1.msra.mxu0 0.0
  %1488 = vmatprep.subr.mxu0 0.0
  %1489 = vmatpush1.msra.mxu0 0.0
  %1490 = vmatprep.subr.mxu0 0.0
  %1491 = vmatpush1.msra.mxu0 0.0
  %1492 = vmatprep.subr.mxu0 0.0
  %1493 = vmatpush1.msra.mxu0 0.0
  %1494 = vmatprep.mubr.f32.mxu0 0.0
  %1495 = vmatmul.mubr.f32.gmra.mrb[0].mxu0 %v1428
  %v1496 = vpop.f32.mrb[0].mxu0
  %v1497 = vadd.f32 %v1425, %v1496
  %v1498 = vpop.f32.mrb[0].mxu0
  %1499 = vdwg.mxu0
  %v1500 = vmul.f32 %v1497, 0.35355338
  %v1501 = vld [vmem:[%s20] sm:$0xff]
  %v1502 = vld [vmem:[%s20 + $0x8] sm:$0xff]
  %v1505 = vunpack.c.l.s4 1966171168
  %v1506 = vunpack.c.0.s8 %v1505
  %v1507 = vlaneseq
  %v1508 = vshrl.u32 %v1507, 7
  %v1509 = vsub.s32 %v1506, %v1508
  %v1510 = vrot.slane %v1500, %v1509
  %v1511 = vcombine.high %v1510, %v1510
  %v1513 = vunpack.c.l.s4 1966171168
  %v1514 = vunpack.c.0.s8 %v1513
  %v1515 = vlaneseq
  %v1516 = vshrl.u32 %v1515, 7
  %v1517 = vsub.s32 %v1514, %v1516
  %v1518 = vrot.slane %v1510, %v1517
  %v1520 = vunpack.c.l.s4 1966171168
  %v1521 = vunpack.c.0.s8 %v1520
  %v1522 = vlaneseq
  %v1523 = vshrl.u32 %v1522, 7
  %v1524 = vsub.s32 %v1521, %v1523
  %v1525 = vrot.slane %v1511, %v1524
  %v1526 = vlaneseq
  %v1527 = vshrl.u32 %v1526, 7
  %v1528 = vsub.s32 0, %v1527
  %v1529 = vrot.slane %v1518, %v1528
  %v1530 = vlaneseq
  %v1531 = vshrl.u32 %v1530, 7
  %v1532 = vsub.s32 0, %v1531
  %v1533 = vrot.slane %v1525, %v1532
  %v1536 = vmul.f32 %v1529, %v1501
  %v1537 = vmul.f32 %v1533, %v1502
  %v1538 = vsel %vm449, %v1536, 0.0
  %1539 = vadd.xlane.f32.xlu0 %v1538
  %v1540 = vpop.xlane.xlu0 %1539
  %v1541 = vsel %vm449, %v1537, 0.0
  %1542 = vadd.xlane.f32.xlu0 %v1541
  %v1543 = vpop.xlane.xlu0 %1542
  %v1544 = vadd.f32 %v1540, %v463
  %v1545 = vadd.f32 %v1543, %v470
  %1548 = vset.pattern.permute.xlu0 0
  %1549 = vperm.xlu0 %1548, %v1544
  %v1550 = vpop.permute.xlu0 %1549
  %1551 = vset.pattern.permute.xlu0 0
  %1552 = vperm.xlu0 %1551, %v1545
  %v1553 = vpop.permute.xlu0 %1552
  %v1554 = vlaneseq
  %v1555 = vshrl.u32 %v1554, 7
  %v1556 = vsub.s32 %v484, %v1555
  %v1557 = vrot.slane %v1550, %v1556
  %v1558 = vlaneseq
  %v1559 = vshrl.u32 %v1558, 7
  %v1560 = vsub.s32 %v484, %v1559
  %v1561 = vrot.slane %v1553, %v1560
  %v1562 = vsel %vm493, %v1561, %v1557
  %v1564 = vsel %vm496, %v1562, -inf
  %1565 = vmax.xlane.f32.xlu0 %v1564
  %v1566 = vpop.xlane.xlu0 %1565
  %v1568 = vlaneseq
  %v1569 = vshrl.u32 %v1568, 7
  %v1570 = vsub.s32 0, %v1569
  %v1571 = vrot.slane %v1566, %v1570
  %v1572 = vlaneseq
  %v1573 = vshrl.u32 %v1572, 7
  %v1574 = vsub.s32 1, %v1573
  %v1575 = vrot.slane %v1566, %v1574
  %v1578 = vsub.f32 %v1544, %v1571
  %v1579 = vsub.f32 %v1545, %v1575
  %v1580 = vmul.f32 %v1578, 1.442695
  %v1581 = vpow.pop %v1580
  %v1582 = vmul.f32 %v1579, 1.442695
  %v1583 = vpow.pop %v1582
  %1586 = vset.pattern.permute.xlu0 0
  %1587 = vperm.xlu0 %1586, %v1581
  %v1588 = vpop.permute.xlu0 %1587
  %1589 = vset.pattern.permute.xlu0 0
  %1590 = vperm.xlu0 %1589, %v1583
  %v1591 = vpop.permute.xlu0 %1590
  %v1592 = vlaneseq
  %v1593 = vshrl.u32 %v1592, 7
  %v1594 = vsub.s32 %v484, %v1593
  %v1595 = vrot.slane %v1588, %v1594
  %v1596 = vlaneseq
  %v1597 = vshrl.u32 %v1596, 7
  %v1598 = vsub.s32 %v484, %v1597
  %v1599 = vrot.slane %v1591, %v1598
  %v1600 = vsel %vm493, %v1599, %v1595
  %v1602 = vsel %vm496, %v1600, 0.0
  %1603 = vadd.xlane.f32.xlu0 %v1602
  %v1604 = vpop.xlane.xlu0 %1603
  %v1606 = vlaneseq
  %v1607 = vshrl.u32 %v1606, 7
  %v1608 = vsub.s32 0, %v1607
  %v1609 = vrot.slane %v1604, %v1608
  %v1610 = vlaneseq
  %v1611 = vshrl.u32 %v1610, 7
  %v1612 = vsub.s32 1, %v1611
  %v1613 = vrot.slane %v1604, %v1612
  %v1616 = vrcp.pop %v1609
  %v1617 = vmul.f32 %v1581, %v1616
  %v1618 = vrcp.pop %v1613
  %v1619 = vmul.f32 %v1583, %v1618
  %v1620 = vadd.f32 %v1617, 0.0
  %v1621 = vadd.f32 %v1619, 0.0
  %1624 = vrot.lane.b32.xlu0 %v1536, 120
  %v1625 = vpop.permute.xlu0 %1624
  %1626 = vrot.lane.b32.xlu0 %v1537, 120
  %v1627 = vpop.permute.xlu0 %1626
  %v1630 = vsel %vm449, %v1625, 0.0
  %1631 = vadd.xlane.f32.xlu0 %v1630
  %v1632 = vpop.xlane.xlu0 %1631
  %v1633 = vsel %vm449, %v1627, 0.0
  %1634 = vadd.xlane.f32.xlu0 %v1633
  %v1635 = vpop.xlane.xlu0 %1634
  %v1636 = vadd.f32 %v1632, %v463
  %v1637 = vadd.f32 %v1635, %v470
  %1640 = vset.pattern.permute.xlu0 0
  %1641 = vperm.xlu0 %1640, %v1636
  %v1642 = vpop.permute.xlu0 %1641
  %1643 = vset.pattern.permute.xlu0 0
  %1644 = vperm.xlu0 %1643, %v1637
  %v1645 = vpop.permute.xlu0 %1644
  %v1646 = vlaneseq
  %v1647 = vshrl.u32 %v1646, 7
  %v1648 = vsub.s32 %v484, %v1647
  %v1649 = vrot.slane %v1642, %v1648
  %v1650 = vlaneseq
  %v1651 = vshrl.u32 %v1650, 7
  %v1652 = vsub.s32 %v484, %v1651
  %v1653 = vrot.slane %v1645, %v1652
  %v1654 = vsel %vm493, %v1653, %v1649
  %v1656 = vsel %vm496, %v1654, -inf
  %1657 = vmax.xlane.f32.xlu0 %v1656
  %v1658 = vpop.xlane.xlu0 %1657
  %v1660 = vlaneseq
  %v1661 = vshrl.u32 %v1660, 7
  %v1662 = vsub.s32 0, %v1661
  %v1663 = vrot.slane %v1658, %v1662
  %v1664 = vlaneseq
  %v1665 = vshrl.u32 %v1664, 7
  %v1666 = vsub.s32 1, %v1665
  %v1667 = vrot.slane %v1658, %v1666
  %v1670 = vsub.f32 %v1636, %v1663
  %v1671 = vsub.f32 %v1637, %v1667
  %v1672 = vmul.f32 %v1670, 1.442695
  %v1673 = vpow.pop %v1672
  %v1674 = vmul.f32 %v1671, 1.442695
  %v1675 = vpow.pop %v1674
  %1678 = vset.pattern.permute.xlu0 0
  %1679 = vperm.xlu0 %1678, %v1673
  %v1680 = vpop.permute.xlu0 %1679
  %1681 = vset.pattern.permute.xlu0 0
  %1682 = vperm.xlu0 %1681, %v1675
  %v1683 = vpop.permute.xlu0 %1682
  %v1684 = vlaneseq
  %v1685 = vshrl.u32 %v1684, 7
  %v1686 = vsub.s32 %v484, %v1685
  %v1687 = vrot.slane %v1680, %v1686
  %v1688 = vlaneseq
  %v1689 = vshrl.u32 %v1688, 7
  %v1690 = vsub.s32 %v484, %v1689
  %v1691 = vrot.slane %v1683, %v1690
  %v1692 = vsel %vm493, %v1691, %v1687
  %v1694 = vsel %vm496, %v1692, 0.0
  %1695 = vadd.xlane.f32.xlu0 %v1694
  %v1696 = vpop.xlane.xlu0 %1695
  %v1698 = vlaneseq
  %v1699 = vshrl.u32 %v1698, 7
  %v1700 = vsub.s32 0, %v1699
  %v1701 = vrot.slane %v1696, %v1700
  %v1702 = vlaneseq
  %v1703 = vshrl.u32 %v1702, 7
  %v1704 = vsub.s32 1, %v1703
  %v1705 = vrot.slane %v1696, %v1704
  %v1708 = vrcp.pop %v1701
  %v1709 = vmul.f32 %v1673, %v1708
  %v1710 = vrcp.pop %v1705
  %v1711 = vmul.f32 %v1675, %v1710
  %v1712 = vadd.f32 %v1620, %v1709
  %v1713 = vadd.f32 %v1621, %v1711
  %1714 = vrot.lane.b32.xlu0 %v1536, 112
  %v1715 = vpop.permute.xlu0 %1714
  %1716 = vrot.lane.b32.xlu0 %v1537, 112
  %v1717 = vpop.permute.xlu0 %1716
  %v1720 = vsel %vm449, %v1715, 0.0
  %1721 = vadd.xlane.f32.xlu0 %v1720
  %v1722 = vpop.xlane.xlu0 %1721
  %v1723 = vsel %vm449, %v1717, 0.0
  %1724 = vadd.xlane.f32.xlu0 %v1723
  %v1725 = vpop.xlane.xlu0 %1724
  %v1726 = vadd.f32 %v1722, %v463
  %v1727 = vadd.f32 %v1725, %v470
  %1730 = vset.pattern.permute.xlu0 0
  %1731 = vperm.xlu0 %1730, %v1726
  %v1732 = vpop.permute.xlu0 %1731
  %1733 = vset.pattern.permute.xlu0 0
  %1734 = vperm.xlu0 %1733, %v1727
  %v1735 = vpop.permute.xlu0 %1734
  %v1736 = vlaneseq
  %v1737 = vshrl.u32 %v1736, 7
  %v1738 = vsub.s32 %v484, %v1737
  %v1739 = vrot.slane %v1732, %v1738
  %v1740 = vlaneseq
  %v1741 = vshrl.u32 %v1740, 7
  %v1742 = vsub.s32 %v484, %v1741
  %v1743 = vrot.slane %v1735, %v1742
  %v1744 = vsel %vm493, %v1743, %v1739
  %v1746 = vsel %vm496, %v1744, -inf
  %1747 = vmax.xlane.f32.xlu0 %v1746
  %v1748 = vpop.xlane.xlu0 %1747
  %v1750 = vlaneseq
  %v1751 = vshrl.u32 %v1750, 7
  %v1752 = vsub.s32 0, %v1751
  %v1753 = vrot.slane %v1748, %v1752
  %v1754 = vlaneseq
  %v1755 = vshrl.u32 %v1754, 7
  %v1756 = vsub.s32 1, %v1755
  %v1757 = vrot.slane %v1748, %v1756
  %v1760 = vsub.f32 %v1726, %v1753
  %v1761 = vsub.f32 %v1727, %v1757
  %v1762 = vmul.f32 %v1760, 1.442695
  %v1763 = vpow.pop %v1762
  %v1764 = vmul.f32 %v1761, 1.442695
  %v1765 = vpow.pop %v1764
  %1768 = vset.pattern.permute.xlu0 0
  %1769 = vperm.xlu0 %1768, %v1763
  %v1770 = vpop.permute.xlu0 %1769
  %1771 = vset.pattern.permute.xlu0 0
  %1772 = vperm.xlu0 %1771, %v1765
  %v1773 = vpop.permute.xlu0 %1772
  %v1774 = vlaneseq
  %v1775 = vshrl.u32 %v1774, 7
  %v1776 = vsub.s32 %v484, %v1775
  %v1777 = vrot.slane %v1770, %v1776
  %v1778 = vlaneseq
  %v1779 = vshrl.u32 %v1778, 7
  %v1780 = vsub.s32 %v484, %v1779
  %v1781 = vrot.slane %v1773, %v1780
  %v1782 = vsel %vm493, %v1781, %v1777
  %v1784 = vsel %vm496, %v1782, 0.0
  %1785 = vadd.xlane.f32.xlu0 %v1784
  %v1786 = vpop.xlane.xlu0 %1785
  %v1788 = vlaneseq
  %v1789 = vshrl.u32 %v1788, 7
  %v1790 = vsub.s32 0, %v1789
  %v1791 = vrot.slane %v1786, %v1790
  %v1792 = vlaneseq
  %v1793 = vshrl.u32 %v1792, 7
  %v1794 = vsub.s32 1, %v1793
  %v1795 = vrot.slane %v1786, %v1794
  %v1798 = vrcp.pop %v1791
  %v1799 = vmul.f32 %v1763, %v1798
  %v1800 = vrcp.pop %v1795
  %v1801 = vmul.f32 %v1765, %v1800
  %v1802 = vadd.f32 %v1712, %v1799
  %v1803 = vadd.f32 %v1713, %v1801
  %1804 = vrot.lane.b32.xlu0 %v1536, 104
  %v1805 = vpop.permute.xlu0 %1804
  %1806 = vrot.lane.b32.xlu0 %v1537, 104
  %v1807 = vpop.permute.xlu0 %1806
  %v1810 = vsel %vm449, %v1805, 0.0
  %1811 = vadd.xlane.f32.xlu0 %v1810
  %v1812 = vpop.xlane.xlu0 %1811
  %v1813 = vsel %vm449, %v1807, 0.0
  %1814 = vadd.xlane.f32.xlu0 %v1813
  %v1815 = vpop.xlane.xlu0 %1814
  %v1816 = vadd.f32 %v1812, %v463
  %v1817 = vadd.f32 %v1815, %v470
  %1820 = vset.pattern.permute.xlu0 0
  %1821 = vperm.xlu0 %1820, %v1816
  %v1822 = vpop.permute.xlu0 %1821
  %1823 = vset.pattern.permute.xlu0 0
  %1824 = vperm.xlu0 %1823, %v1817
  %v1825 = vpop.permute.xlu0 %1824
  %v1826 = vlaneseq
  %v1827 = vshrl.u32 %v1826, 7
  %v1828 = vsub.s32 %v484, %v1827
  %v1829 = vrot.slane %v1822, %v1828
  %v1830 = vlaneseq
  %v1831 = vshrl.u32 %v1830, 7
  %v1832 = vsub.s32 %v484, %v1831
  %v1833 = vrot.slane %v1825, %v1832
  %v1834 = vsel %vm493, %v1833, %v1829
  %v1836 = vsel %vm496, %v1834, -inf
  %1837 = vmax.xlane.f32.xlu0 %v1836
  %v1838 = vpop.xlane.xlu0 %1837
  %v1840 = vlaneseq
  %v1841 = vshrl.u32 %v1840, 7
  %v1842 = vsub.s32 0, %v1841
  %v1843 = vrot.slane %v1838, %v1842
  %v1844 = vlaneseq
  %v1845 = vshrl.u32 %v1844, 7
  %v1846 = vsub.s32 1, %v1845
  %v1847 = vrot.slane %v1838, %v1846
  %v1850 = vsub.f32 %v1816, %v1843
  %v1851 = vsub.f32 %v1817, %v1847
  %v1852 = vmul.f32 %v1850, 1.442695
  %v1853 = vpow.pop %v1852
  %v1854 = vmul.f32 %v1851, 1.442695
  %v1855 = vpow.pop %v1854
  %1858 = vset.pattern.permute.xlu0 0
  %1859 = vperm.xlu0 %1858, %v1853
  %v1860 = vpop.permute.xlu0 %1859
  %1861 = vset.pattern.permute.xlu0 0
  %1862 = vperm.xlu0 %1861, %v1855
  %v1863 = vpop.permute.xlu0 %1862
  %v1864 = vlaneseq
  %v1865 = vshrl.u32 %v1864, 7
  %v1866 = vsub.s32 %v484, %v1865
  %v1867 = vrot.slane %v1860, %v1866
  %v1868 = vlaneseq
  %v1869 = vshrl.u32 %v1868, 7
  %v1870 = vsub.s32 %v484, %v1869
  %v1871 = vrot.slane %v1863, %v1870
  %v1872 = vsel %vm493, %v1871, %v1867
  %v1874 = vsel %vm496, %v1872, 0.0
  %1875 = vadd.xlane.f32.xlu0 %v1874
  %v1876 = vpop.xlane.xlu0 %1875
  %v1878 = vlaneseq
  %v1879 = vshrl.u32 %v1878, 7
  %v1880 = vsub.s32 0, %v1879
  %v1881 = vrot.slane %v1876, %v1880
  %v1882 = vlaneseq
  %v1883 = vshrl.u32 %v1882, 7
  %v1884 = vsub.s32 1, %v1883
  %v1885 = vrot.slane %v1876, %v1884
  %v1888 = vrcp.pop %v1881
  %v1889 = vmul.f32 %v1853, %v1888
  %v1890 = vrcp.pop %v1885
  %v1891 = vmul.f32 %v1855, %v1890
  %v1892 = vadd.f32 %v1802, %v1889
  %v1893 = vadd.f32 %v1803, %v1891
  %v1894 = vmul.f32 %v1892, 0.25
  %v1895 = vmul.f32 %v1893, 0.25
  %1898 = vset.pattern.permute.xlu0 0
  %1899 = vperm.xlu0 %1898, %v1894
  %v1900 = vpop.permute.xlu0 %1899
  %1901 = vset.pattern.permute.xlu0 0
  %1902 = vperm.xlu0 %1901, %v1895
  %v1903 = vpop.permute.xlu0 %1902
  %v1904 = vlaneseq
  %v1905 = vshrl.u32 %v1904, 7
  %v1906 = vsub.s32 %v484, %v1905
  %v1907 = vrot.slane %v1900, %v1906
  %v1908 = vlaneseq
  %v1909 = vshrl.u32 %v1908, 7
  %v1910 = vsub.s32 %v484, %v1909
  %v1911 = vrot.slane %v1903, %v1910
  %v1912 = vsel %vm493, %v1911, %v1907
  %1914 = vst.msk [vmem:[%s21] sm:$0x3] %vm496, %v1912
  // Predicated region
  $region86: #{closed_call.12} parent=0 // pred_check
    _
  $region87: #{closed_call.12} parent=0 // pred_check_branch
    %1916 = sbr.rel (0) target = $region89
  $region88: #{closed_call.12} parent=0 // pred_region
    _
  $region89: #{closed_call.12} parent=0 // pred_fallthru
    _
  // Predicated region
  $region90: #{closed_call.12} parent=0 // pred_check
    _
  $region91: #{closed_call.12} parent=0 // pred_check_branch
    %1918 = sbr.rel (0) target = $region93
  $region92: #{closed_call.12} parent=0 // pred_region
    _
  $region93: #{closed_call.12} parent=0 // pred_fallthru
    _

</llo_original>
